<compile_context>
chip_gen: v7x
topology: tpu7x:2x2x1
jax: 0.10.0
libtpu: 0.0.40
codegen_flags: <defaults>
</compile_context>

<pallas_src>
import functools

import jax
import jax.numpy as jnp
from jax.experimental import pallas as pl
from jax.experimental.pallas import tpu as pltpu

_LANES = 128


def _sum_all(x):
    """[S, L] -> [1, 1] full sum (sublane reduce, then lane reduce)."""
    return jnp.sum(jnp.sum(x, axis=0, keepdims=True), axis=1, keepdims=True)


def _max_all(x):
    return jnp.max(jnp.max(x, axis=0, keepdims=True), axis=1, keepdims=True)


def _min_all(x):
    return jnp.min(jnp.min(x, axis=0, keepdims=True), axis=1, keepdims=True)


def _multibox_kernel(cls_ref, reg_ref, anc_ref, ann_ref, out_ref, *,
                     neg_pos_ratio):
    f32 = jnp.float32
    i32 = jnp.int32

    b = pl.program_id(0)
    _, C, SA, L = cls_ref.shape
    A = SA * L
    n_gt = ann_ref.shape[1] // 5

    # ---- batch-invariant anchor features (precomputed once in the wrapper) --
    acx, acy = anc_ref[0], anc_ref[1]
    ax1, ay1 = anc_ref[2], anc_ref[3]
    ax2, ay2 = anc_ref[4], anc_ref[5]
    area_a = anc_ref[6]
    inv_aw, inv_ah = anc_ref[7], anc_ref[8]

    sub_i = jax.lax.broadcasted_iota(i32, (SA, L), 0)
    lane_i = jax.lax.broadcasted_iota(i32, (SA, L), 1)
    flat_idx = sub_i * L + lane_i                       # anchor id, [SA, L]

    # ---- matching: per-gt IoU + force-match + online per-anchor argmax ------
    iou_max = jnp.full((SA, L), -1.0, f32)
    m_gcx = jnp.zeros((SA, L), f32)
    m_gcy = jnp.zeros((SA, L), f32)
    m_gw = jnp.ones((SA, L), f32)
    m_gh = jnp.ones((SA, L), f32)
    m_lab = jnp.zeros((SA, L), f32)

    for n in range(n_gt):
        base = n * 5
        gx1 = ann_ref[b, base + 0]
        gy1 = ann_ref[b, base + 1]
        gx2 = ann_ref[b, base + 2]
        gy2 = ann_ref[b, base + 3]
        glab = ann_ref[b, base + 4]

        ix1 = jnp.maximum(ax1, gx1)
        iy1 = jnp.maximum(ay1, gy1)
        ix2 = jnp.minimum(ax2, gx2)
        iy2 = jnp.minimum(ay2, gy2)
        iw = jnp.maximum(ix2 - ix1, 0.0)
        ih = jnp.maximum(iy2 - iy1, 0.0)
        inter = iw * ih
        area_g = (gx2 - gx1) * (gy2 - gy1)
        # Exact divide: the 0.5 positivity threshold and the cross-gt argmax
        # are sensitive to IoU rounding, so no approx reciprocal here.
        iou_n = inter / jnp.maximum(area_a + area_g - inter, 1e-8)

        # force-match: this gt's best anchor (min index among ties) -> iou = 2
        row_max = _max_all(iou_n)
        forced = _min_all(jnp.where(iou_n == row_max, flat_idx, A))
        iou_n = jnp.where(flat_idx == forced, 2.0, iou_n)

        # online argmax over gts; strict '>' keeps the lowest gt index on ties
        better = iou_n > iou_max
        iou_max = jnp.where(better, iou_n, iou_max)
        m_gcx = jnp.where(better, (gx1 + gx2) * 0.5, m_gcx)
        m_gcy = jnp.where(better, (gy1 + gy2) * 0.5, m_gcy)
        m_gw = jnp.where(better, gx2 - gx1, m_gw)
        m_gh = jnp.where(better, gy2 - gy1, m_gh)
        m_lab = jnp.where(better, glab, m_lab)

    positive = iou_max >= 0.5                                     # [SA, L]
    num_pos = jnp.maximum(_sum_all(positive.astype(f32)), 1.0)    # [1, 1]
    gt_label = jnp.where(positive, m_lab, 0.0)

    # ---- log-softmax / cross-entropy (classes unrolled) ---------------------
    cls_pages = [cls_ref[0, c] for c in range(C)]
    mx = cls_pages[0]
    for c in range(1, C):
        mx = jnp.maximum(mx, cls_pages[c])
    # TODO(synk): on v6e/v7x the exp below could run in bf16 for large C; kept
    # f32 so the mining threshold matches the f32 reference bit-for-bit.
    sum_exp = jnp.exp(cls_pages[0] - mx)
    for c in range(1, C):
        sum_exp = sum_exp + jnp.exp(cls_pages[c] - mx)
    lse = mx + jnp.log(sum_exp)
    bg_loss = jnp.maximum(lse - cls_pages[0], 0.0)                # [SA, L]

    gt_lab_i = gt_label.astype(i32)
    picked = jnp.where(gt_lab_i == 0, cls_pages[0], 0.0)
    for c in range(1, C):
        picked = picked + jnp.where(gt_lab_i == c, cls_pages[c], 0.0)
    ce = lse - picked

    # ---- hard-negative mining: top-(ratio*num_pos) bg_loss negatives --------
    # bg_loss >= 0, so its int32 bit pattern orders identically to its value;
    # positives get key -1 so they rank below every negative.
    pos_mask = gt_label > 0.0
    num_neg = _sum_all(pos_mask.astype(f32)) * float(neg_pos_ratio)
    keys = jnp.where(pos_mask, jnp.int32(-1), pltpu.bitcast(bg_loss, i32))

    def count_gt(t):                                  # t: [1,1] i32
        return _sum_all((keys > t).astype(f32))       # [1,1] f32 (exact < 2^24)

    lo = jnp.full((1, 1), -2, i32)
    hi = jnp.full((1, 1), 0x7F800000, i32)            # > any finite bit pattern
    # 16 fully-unrolled iterations; each resolves TWO binary-search steps by
    # counting three mutually independent candidate thresholds (they pipeline).
    for _ in range(16):
        mid = lo + ((hi - lo + 1) >> 1)               # midpoint of (lo, hi]
        midl = lo + ((mid - lo) >> 1)                 # midpoint of (lo, mid-1]
        midh = mid + ((hi - mid + 1) >> 1)            # midpoint of (mid, hi]
        c_m = count_gt(mid) >= num_neg
        c_l = count_gt(midl) >= num_neg
        c_h = count_gt(midh) >= num_neg
        lo = jnp.where(c_m, jnp.where(c_h, midh, mid),
                       jnp.where(c_l, midl, lo))
        hi = jnp.where(c_m, jnp.where(c_h, hi, midh - 1),
                       jnp.where(c_l, mid - 1, midl - 1))
    sel = pos_mask | (keys > lo)

    cls_loss = _sum_all(jnp.where(sel, ce, 0.0)) / num_pos        # [1, 1]

    # ---- regression targets + smooth-L1 over positives ----------------------
    dx = (m_gcx - acx) * inv_aw * 10.0
    dy = (m_gcy - acy) * inv_ah * 10.0
    dw = jnp.log(m_gw * inv_aw) * 5.0
    dh = jnp.log(m_gh * inv_ah) * 5.0

    def smooth_l1(p, t):
        d = p - t
        ad = jnp.abs(d)
        return jnp.where(ad < 1.0, 0.5 * d * d, ad - 0.5)

    sl1 = (smooth_l1(reg_ref[0, 0], dx) + smooth_l1(reg_ref[0, 1], dy)
           + smooth_l1(reg_ref[0, 2], dw) + smooth_l1(reg_ref[0, 3], dh))
    reg_loss = _sum_all(jnp.where(positive, sl1, 0.0)) / num_pos  # [1, 1]

    # ---- accumulate both losses into the single resident [8, 128] output ----
    @pl.when(b == 0)
    def _():
        out_ref[...] = jnp.zeros_like(out_ref)

    row_ids = jax.lax.broadcasted_iota(i32, (8, _LANES), 0)
    out_ref[...] += (jnp.where(row_ids == 0, cls_loss, 0.0)
                     + jnp.where(row_ids == 1, reg_loss, 0.0))


def multibox_loss(classifications, regressions, anchors, annotations,
                  neg_pos_ratio=3):
    # TODO(synk): variable-length / padded annotation lists (label == -1 rows,
    # per-image empty-annotation early exit) are not handled; a fixed N >= 1
    # valid annotations per image is assumed.
    B, A, C = classifications.shape
    N = annotations.shape[1]
    L = _LANES
    if A % L != 0:
        # TODO(synk): pad the anchor axis (with never-matching anchors whose
        # logits force bg_loss ~ 0) to lift this restriction.
        raise ValueError(f"num_anchors ({A}) must be a multiple of {L}")
    SA = A // L
    f32 = jnp.float32

    # Lane-dense layout: anchors folded onto (sublane, lane).
    cls_t = jnp.transpose(classifications.astype(f32), (0, 2, 1)
                          ).reshape(B, C, SA, L)
    reg_t = jnp.transpose(regressions.astype(f32), (0, 2, 1)
                          ).reshape(B, 4, SA, L)

    # Batch-invariant anchor features, computed exactly once (hoisted).
    anc = anchors[0].astype(f32)                      # [A, 4] (cx, cy, w, h)
    acx, acy, aw, ah = anc[:, 0], anc[:, 1], anc[:, 2], anc[:, 3]
    ax1 = acx - 0.5 * aw
    ay1 = acy - 0.5 * ah
    ax2 = acx + 0.5 * aw
    ay2 = acy + 0.5 * ah
    anc_feat = jnp.stack(
        [acx, acy, ax1, ay1, ax2, ay2,
         (ax2 - ax1) * (ay2 - ay1), 1.0 / aw, 1.0 / ah],
        axis=0).reshape(9, SA, L)

    ann_flat = annotations.astype(f32).reshape(B, N * 5)

    kernel = functools.partial(_multibox_kernel,
                               neg_pos_ratio=int(neg_pos_ratio))
    out = pl.pallas_call(
        kernel,
        out_shape=jax.ShapeDtypeStruct((8, L), jnp.float32),
        grid=(B,),
        in_specs=[
            pl.BlockSpec((1, C, SA, L), lambda b: (b, 0, 0, 0)),
            pl.BlockSpec((1, 4, SA, L), lambda b: (b, 0, 0, 0)),
            pl.BlockSpec((9, SA, L), lambda b: (0, 0, 0)),      # DMA'd once
            pl.BlockSpec(memory_space=pltpu.MemorySpace.SMEM),  # scalars
        ],
        out_specs=pl.BlockSpec((8, L), lambda b: (0, 0)),
        compiler_params=pltpu.CompilerParams(
            # Losses are accumulated across the batch in the resident output
            # block, so the batch axis must stay sequential.
            dimension_semantics=("arbitrary",)),
    )(cls_t, reg_t, anc_feat, ann_flat)

    inv_b = 1.0 / float(B)
    return {"cls_loss": out[0, 0] * inv_b, "reg_loss": out[1, 0] * inv_b}


# ---------------------------------------------------------------------------
# Pure-JAX reference (original [A, N] / [A, C] formulation with sort-equivalent
# pairwise-rank hard-negative mining) used only for the correctness check.
# ---------------------------------------------------------------------------
def _per_image_loss_ref(classification, regression, anchor, annotation,
                        neg_pos_ratio):
    A, C = classification.shape
    N = annotation.shape[0]
    f32 = jnp.float32

    acx = anchor[:, 0:1]; acy = anchor[:, 1:2]
    aw = anchor[:, 2:3]; ah = anchor[:, 3:4]
    ax1 = acx - aw * 0.5; ay1 = acy - ah * 0.5
    ax2 = acx + aw * 0.5; ay2 = acy + ah * 0.5

    gx1 = annotation[:, 0][None, :]; gy1 = annotation[:, 1][None, :]
    gx2 = annotation[:, 2][None, :]; gy2 = annotation[:, 3][None, :]

    ix1 = jnp.maximum(ax1, gx1); iy1 = jnp.maximum(ay1, gy1)
    ix2 = jnp.minimum(ax2, gx2); iy2 = jnp.minimum(ay2, gy2)
    iw = jnp.maximum(ix2 - ix1, 0.0); ih = jnp.maximum(iy2 - iy1, 0.0)
    inter = iw * ih
    area_a = (ax2 - ax1) * (ay2 - ay1)
    area_g = (gx2 - gx1) * (gy2 - gy1)
    iou = inter / jnp.maximum(area_a + area_g - inter, 1e-8)

    row_ids = jax.lax.broadcasted_iota(jnp.int32, (A, N), 0)
    col_ids = jax.lax.broadcasted_iota(jnp.int32, (A, N), 1)
    col_max = jnp.max(iou, axis=0, keepdims=True)
    best_anchor = jnp.min(jnp.where(iou == col_max, row_ids, A),
                          axis=0, keepdims=True)
    iou = jnp.where(row_ids == best_anchor, 2.0, iou)

    iou_max = jnp.max(iou, axis=1, keepdims=True)
    best_gt = jnp.min(jnp.where(iou == iou_max, col_ids, N),
                      axis=1, keepdims=True)
    positive = iou_max >= 0.5
    num_pos = jnp.maximum(jnp.sum(positive.astype(f32), keepdims=True), 1.0)

    onehot = (col_ids == best_gt).astype(f32)
    matched = jnp.dot(onehot, annotation, preferred_element_type=f32)
    gt_label = jnp.where(positive, matched[:, 4:5], 0.0)

    mx = jnp.max(classification, axis=1, keepdims=True)
    lse = mx + jnp.log(jnp.sum(jnp.exp(classification - mx), axis=1,
                               keepdims=True))
    bg_loss = lse - classification[:, 0:1]

    pos_mask = gt_label > 0.0
    num_neg = jnp.sum(pos_mask.astype(f32), keepdims=True) * neg_pos_ratio
    l_col = jnp.where(pos_mask, -jnp.inf, bg_loss)
    l_row = l_col.T
    ii = jax.lax.broadcasted_iota(jnp.int32, (A, A), 0)
    jj = jax.lax.broadcasted_iota(jnp.int32, (A, A), 1)
    cmp = (l_row > l_col) | ((l_row == l_col) & (jj < ii))
    rank = jnp.sum(cmp.astype(f32), axis=1, keepdims=True)
    neg_mask = rank < num_neg
    mask = pos_mask | neg_mask

    class_ids = jax.lax.broadcasted_iota(jnp.int32, (A, C), 1)
    lab_onehot = class_ids == gt_label.astype(jnp.int32)
    picked = jnp.sum(jnp.where(lab_onehot, classification, 0.0),
                     axis=1, keepdims=True)
    ce = lse - picked
    cls_loss = jnp.sum(jnp.where(mask, ce, 0.0), keepdims=True) / num_pos

    gcx = (matched[:, 0:1] + matched[:, 2:3]) * 0.5
    gcy = (matched[:, 1:2] + matched[:, 3:4]) * 0.5
    gw = matched[:, 2:3] - matched[:, 0:1]
    gh = matched[:, 3:4] - matched[:, 1:2]
    dx = ((gcx - acx) / aw) / 0.1
    dy = ((gcy - acy) / ah) / 0.1
    dw = jnp.log(gw / aw) / 0.2
    dh = jnp.log(gh / ah) / 0.2

    def _s(p, t):
        d = p - t; ad = jnp.abs(d)
        return jnp.where(ad < 1.0, 0.5 * d * d, ad - 0.5)

    sl1 = (_s(regression[:, 0:1], dx) + _s(regression[:, 1:2], dy)
           + _s(regression[:, 2:3], dw) + _s(regression[:, 3:4], dh))
    reg_loss = jnp.sum(jnp.where(positive, sl1, 0.0), keepdims=True) / num_pos
    return cls_loss, reg_loss


if __name__ == "__main__":
    key = jax.random.PRNGKey(0)
    B, A, C, N = 2, 256, 4, 8
    k1, k2, k3, k4, k5 = jax.random.split(key, 5)

    classifications = jax.random.normal(k1, (B, A, C), dtype=jnp.float32)
    regressions = 0.1 * jax.random.normal(k2, (B, A, 4), dtype=jnp.float32)

    # anchors: 16x16 grid of (cx, cy, w, h), central form, deterministic
    g = (jnp.arange(16, dtype=jnp.float32) + 0.5) / 16.0
    cy, cx = jnp.meshgrid(g, g, indexing="ij")
    anchors = jnp.stack([cx.reshape(-1), cy.reshape(-1),
                         jnp.full((A,), 0.2, jnp.float32),
                         jnp.full((A,), 0.2, jnp.float32)],
                        axis=-1)[None]                                   # [1, A, 4]

    # annotations: random valid boxes (corner form) with labels in {1..C-1}
    centers = jax.random.uniform(k3, (B, N, 2), minval=0.25, maxval=0.75)
    sizes = jax.random.uniform(k4, (B, N, 2), minval=0.10, maxval=0.30)
    labels = jax.random.randint(k5, (B, N, 1), 1, C).astype(jnp.float32)
    annotations = jnp.concatenate(
        [centers - sizes * 0.5, centers + sizes * 0.5, labels], axis=-1)  # [B, N, 5]

    out = jax.jit(multibox_loss)(classifications, regressions, anchors,
                                 annotations)
    cls_loss = jax.block_until_ready(out["cls_loss"])
    reg_loss = jax.block_until_ready(out["reg_loss"])

    ref_cls, ref_reg = jax.vmap(
        lambda c, r, ann: _per_image_loss_ref(c, r, anchors[0], ann, 3.0)
    )(classifications, regressions, annotations)
    ref_cls_loss = jnp.mean(ref_cls)
    ref_reg_loss = jnp.mean(ref_reg)

    assert bool(jnp.isfinite(cls_loss)) and bool(jnp.isfinite(reg_loss))
    assert jnp.allclose(cls_loss, ref_cls_loss, rtol=1e-3, atol=1e-3), \
        (cls_loss, ref_cls_loss)
    assert jnp.allclose(reg_loss, ref_reg_loss, rtol=1e-3, atol=1e-3), \
        (reg_loss, ref_reg_loss)

    print("KERNEL_OK")
</pallas_src>

<mosaic_0001>
module attributes {stable_mosaic.version = 11 : i64} {
  func.func @_multibox_kernel(%arg0: i32, %arg1: memref<1x4x2x128xf32, #tpu.memory_space<vmem>>, %arg2: memref<1x4x2x128xf32, #tpu.memory_space<vmem>>, %arg3: memref<9x2x128xf32, #tpu.memory_space<vmem>>, %arg4: memref<2x40xf32, #tpu.memory_space<smem>>, %arg5: memref<8x128xf32, #tpu.memory_space<vmem>>) attributes {dimension_semantics = [#tpu.dimension_semantics<arbitrary>], iteration_bounds = array<i64: 2>, scalar_prefetch = 0 : i64, scratch_operands = 0 : i64, tpu.core_type = #tpu.core_type<tc>, window_params = [{transform_indices = @transform_0, window_bounds = array<i64: 1, 4, 2, 128>}, {transform_indices = @transform_1, window_bounds = array<i64: 1, 4, 2, 128>}, {pipeline_mode = #tpu.pipeline_mode<synchronous>, transform_indices = @transform_2, window_bounds = array<i64: 9, 2, 128>}, {transform_indices = @transform_3, window_bounds = array<i64: 2, 40>}, {pipeline_mode = #tpu.pipeline_mode<synchronous>, transform_indices = @transform_4, window_bounds = array<i64: 8, 128>}]} {
    %c0 = arith.constant 0 : index
    %c0_0 = arith.constant 0 : index
    %c0_1 = arith.constant 0 : index
    %0 = vector.load %arg3[%c0, %c0_0, %c0_1] : memref<9x2x128xf32, #tpu.memory_space<vmem>>, vector<1x2x128xf32>
    %1 = vector.shape_cast %0 : vector<1x2x128xf32> to vector<2x128xf32>
    %c1 = arith.constant 1 : index
    %c0_2 = arith.constant 0 : index
    %c0_3 = arith.constant 0 : index
    %2 = vector.load %arg3[%c1, %c0_2, %c0_3] : memref<9x2x128xf32, #tpu.memory_space<vmem>>, vector<1x2x128xf32>
    %3 = vector.shape_cast %2 : vector<1x2x128xf32> to vector<2x128xf32>
    %c2 = arith.constant 2 : index
    %c0_4 = arith.constant 0 : index
    %c0_5 = arith.constant 0 : index
    %4 = vector.load %arg3[%c2, %c0_4, %c0_5] : memref<9x2x128xf32, #tpu.memory_space<vmem>>, vector<1x2x128xf32>
    %5 = vector.shape_cast %4 : vector<1x2x128xf32> to vector<2x128xf32>
    %c3 = arith.constant 3 : index
    %c0_6 = arith.constant 0 : index
    %c0_7 = arith.constant 0 : index
    %6 = vector.load %arg3[%c3, %c0_6, %c0_7] : memref<9x2x128xf32, #tpu.memory_space<vmem>>, vector<1x2x128xf32>
    %7 = vector.shape_cast %6 : vector<1x2x128xf32> to vector<2x128xf32>
    %c4 = arith.constant 4 : index
    %c0_8 = arith.constant 0 : index
    %c0_9 = arith.constant 0 : index
    %8 = vector.load %arg3[%c4, %c0_8, %c0_9] : memref<9x2x128xf32, #tpu.memory_space<vmem>>, vector<1x2x128xf32>
    %9 = vector.shape_cast %8 : vector<1x2x128xf32> to vector<2x128xf32>
    %c5 = arith.constant 5 : index
    %c0_10 = arith.constant 0 : index
    %c0_11 = arith.constant 0 : index
    %10 = vector.load %arg3[%c5, %c0_10, %c0_11] : memref<9x2x128xf32, #tpu.memory_space<vmem>>, vector<1x2x128xf32>
    %11 = vector.shape_cast %10 : vector<1x2x128xf32> to vector<2x128xf32>
    %c6 = arith.constant 6 : index
    %c0_12 = arith.constant 0 : index
    %c0_13 = arith.constant 0 : index
    %12 = vector.load %arg3[%c6, %c0_12, %c0_13] : memref<9x2x128xf32, #tpu.memory_space<vmem>>, vector<1x2x128xf32>
    %13 = vector.shape_cast %12 : vector<1x2x128xf32> to vector<2x128xf32>
    %c7 = arith.constant 7 : index
    %c0_14 = arith.constant 0 : index
    %c0_15 = arith.constant 0 : index
    %14 = vector.load %arg3[%c7, %c0_14, %c0_15] : memref<9x2x128xf32, #tpu.memory_space<vmem>>, vector<1x2x128xf32>
    %15 = vector.shape_cast %14 : vector<1x2x128xf32> to vector<2x128xf32>
    %c8 = arith.constant 8 : index
    %c0_16 = arith.constant 0 : index
    %c0_17 = arith.constant 0 : index
    %16 = vector.load %arg3[%c8, %c0_16, %c0_17] : memref<9x2x128xf32, #tpu.memory_space<vmem>>, vector<1x2x128xf32>
    %17 = vector.shape_cast %16 : vector<1x2x128xf32> to vector<2x128xf32>
    %18 = tpu.iota {dimensions = array<i32: 0>} : vector<2x128xi32>
    %19 = tpu.iota {dimensions = array<i32: 1>} : vector<2x128xi32>
    %c128_i32 = arith.constant 128 : i32
    %20 = vector.broadcast %c128_i32 : i32 to vector<2x128xi32>
    %21 = arith.muli %18, %20 : vector<2x128xi32>
    %22 = arith.addi %21, %19 : vector<2x128xi32>
    %cst = arith.constant -1.000000e+00 : f32
    %23 = vector.broadcast %cst : f32 to vector<2x128xf32>
    %cst_18 = arith.constant 0.000000e+00 : f32
    %24 = vector.broadcast %cst_18 : f32 to vector<2x128xf32>
    %cst_19 = arith.constant 0.000000e+00 : f32
    %25 = vector.broadcast %cst_19 : f32 to vector<2x128xf32>
    %cst_20 = arith.constant 1.000000e+00 : f32
    %26 = vector.broadcast %cst_20 : f32 to vector<2x128xf32>
    %cst_21 = arith.constant 1.000000e+00 : f32
    %27 = vector.broadcast %cst_21 : f32 to vector<2x128xf32>
    %cst_22 = arith.constant 0.000000e+00 : f32
    %28 = vector.broadcast %cst_22 : f32 to vector<2x128xf32>
    %29 = arith.index_cast %arg0 : i32 to index
    %c0_23 = arith.constant 0 : index
    %30 = memref.load %arg4[%29, %c0_23] : memref<2x40xf32, #tpu.memory_space<smem>>
    %31 = arith.index_cast %arg0 : i32 to index
    %c1_24 = arith.constant 1 : index
    %32 = memref.load %arg4[%31, %c1_24] : memref<2x40xf32, #tpu.memory_space<smem>>
    %33 = arith.index_cast %arg0 : i32 to index
    %c2_25 = arith.constant 2 : index
    %34 = memref.load %arg4[%33, %c2_25] : memref<2x40xf32, #tpu.memory_space<smem>>
    %35 = arith.index_cast %arg0 : i32 to index
    %c3_26 = arith.constant 3 : index
    %36 = memref.load %arg4[%35, %c3_26] : memref<2x40xf32, #tpu.memory_space<smem>>
    %37 = arith.index_cast %arg0 : i32 to index
    %c4_27 = arith.constant 4 : index
    %38 = memref.load %arg4[%37, %c4_27] : memref<2x40xf32, #tpu.memory_space<smem>>
    %39 = vector.broadcast %30 : f32 to vector<2x128xf32>
    %40 = arith.maximumf %5, %39 : vector<2x128xf32>
    %41 = vector.broadcast %32 : f32 to vector<2x128xf32>
    %42 = arith.maximumf %7, %41 : vector<2x128xf32>
    %43 = vector.broadcast %34 : f32 to vector<2x128xf32>
    %44 = arith.minimumf %9, %43 : vector<2x128xf32>
    %45 = vector.broadcast %36 : f32 to vector<2x128xf32>
    %46 = arith.minimumf %11, %45 : vector<2x128xf32>
    %47 = arith.subf %44, %40 : vector<2x128xf32>
    %cst_28 = arith.constant 0.000000e+00 : f32
    %48 = vector.broadcast %cst_28 : f32 to vector<2x128xf32>
    %49 = arith.maximumf %47, %48 : vector<2x128xf32>
    %50 = arith.subf %46, %42 : vector<2x128xf32>
    %cst_29 = arith.constant 0.000000e+00 : f32
    %51 = vector.broadcast %cst_29 : f32 to vector<2x128xf32>
    %52 = arith.maximumf %50, %51 : vector<2x128xf32>
    %53 = arith.mulf %49, %52 : vector<2x128xf32>
    %54 = arith.subf %34, %30 : f32
    %55 = arith.subf %36, %32 : f32
    %56 = arith.mulf %54, %55 : f32
    %57 = vector.broadcast %56 : f32 to vector<2x128xf32>
    %58 = arith.addf %13, %57 : vector<2x128xf32>
    %59 = arith.subf %58, %53 : vector<2x128xf32>
    %cst_30 = arith.constant 9.99999993E-9 : f32
    %60 = vector.broadcast %cst_30 : f32 to vector<2x128xf32>
    %61 = arith.maximumf %59, %60 : vector<2x128xf32>
    %62 = arith.divf %53, %61 : vector<2x128xf32>
    %cst_31 = arith.constant dense<0xFF800000> : vector<128xf32>
    %63 = vector.multi_reduction <maximumf>, %62, %cst_31 [0] : vector<2x128xf32> to vector<128xf32>
    %64 = vector.shape_cast %63 : vector<128xf32> to vector<1x128xf32>
    %cst_32 = arith.constant dense<0xFF800000> : vector<1xf32>
    %65 = vector.multi_reduction <maximumf>, %64, %cst_32 [1] : vector<1x128xf32> to vector<1xf32>
    %66 = vector.shape_cast %65 : vector<1xf32> to vector<1x1xf32>
    %67 = vector.broadcast %66 : vector<1x1xf32> to vector<2x128xf32>
    %68 = arith.cmpf oeq, %62, %67 : vector<2x128xf32>
    %c256_i32 = arith.constant 256 : i32
    %69 = vector.broadcast %c256_i32 : i32 to vector<2x128xi32>
    %70 = arith.select %68, %22, %69 : vector<2x128xi1>, vector<2x128xi32>
    %cst_33 = arith.constant dense<2147483647> : vector<128xi32>
    %71 = vector.multi_reduction <minsi>, %70, %cst_33 [0] : vector<2x128xi32> to vector<128xi32>
    %72 = vector.shape_cast %71 : vector<128xi32> to vector<1x128xi32>
    %cst_34 = arith.constant dense<2147483647> : vector<1xi32>
    %73 = vector.multi_reduction <minsi>, %72, %cst_34 [1] : vector<1x128xi32> to vector<1xi32>
    %74 = vector.shape_cast %73 : vector<1xi32> to vector<1x1xi32>
    %75 = vector.broadcast %74 : vector<1x1xi32> to vector<2x128xi32>
    %76 = arith.cmpi eq, %22, %75 : vector<2x128xi32>
    %cst_35 = arith.constant 2.000000e+00 : f32
    %77 = vector.broadcast %cst_35 : f32 to vector<2x128xf32>
    %78 = arith.select %76, %77, %62 : vector<2x128xi1>, vector<2x128xf32>
    %79 = arith.cmpf ogt, %78, %23 : vector<2x128xf32>
    %80 = arith.select %79, %78, %23 : vector<2x128xi1>, vector<2x128xf32>
    %81 = arith.addf %30, %34 : f32
    %cst_36 = arith.constant 5.000000e-01 : f32
    %82 = arith.mulf %81, %cst_36 : f32
    %83 = vector.broadcast %82 : f32 to vector<2x128xf32>
    %84 = arith.select %79, %83, %24 : vector<2x128xi1>, vector<2x128xf32>
    %85 = arith.addf %32, %36 : f32
    %cst_37 = arith.constant 5.000000e-01 : f32
    %86 = arith.mulf %85, %cst_37 : f32
    %87 = vector.broadcast %86 : f32 to vector<2x128xf32>
    %88 = arith.select %79, %87, %25 : vector<2x128xi1>, vector<2x128xf32>
    %89 = arith.subf %34, %30 : f32
    %90 = vector.broadcast %89 : f32 to vector<2x128xf32>
    %91 = arith.select %79, %90, %26 : vector<2x128xi1>, vector<2x128xf32>
    %92 = arith.subf %36, %32 : f32
    %93 = vector.broadcast %92 : f32 to vector<2x128xf32>
    %94 = arith.select %79, %93, %27 : vector<2x128xi1>, vector<2x128xf32>
    %95 = vector.broadcast %38 : f32 to vector<2x128xf32>
    %96 = arith.select %79, %95, %28 : vector<2x128xi1>, vector<2x128xf32>
    %97 = arith.index_cast %arg0 : i32 to index
    %c5_38 = arith.constant 5 : index
    %98 = memref.load %arg4[%97, %c5_38] : memref<2x40xf32, #tpu.memory_space<smem>>
    %99 = arith.index_cast %arg0 : i32 to index
    %c6_39 = arith.constant 6 : index
    %100 = memref.load %arg4[%99, %c6_39] : memref<2x40xf32, #tpu.memory_space<smem>>
    %101 = arith.index_cast %arg0 : i32 to index
    %c7_40 = arith.constant 7 : index
    %102 = memref.load %arg4[%101, %c7_40] : memref<2x40xf32, #tpu.memory_space<smem>>
    %103 = arith.index_cast %arg0 : i32 to index
    %c8_41 = arith.constant 8 : index
    %104 = memref.load %arg4[%103, %c8_41] : memref<2x40xf32, #tpu.memory_space<smem>>
    %105 = arith.index_cast %arg0 : i32 to index
    %c9 = arith.constant 9 : index
    %106 = memref.load %arg4[%105, %c9] : memref<2x40xf32, #tpu.memory_space<smem>>
    %107 = vector.broadcast %98 : f32 to vector<2x128xf32>
    %108 = arith.maximumf %5, %107 : vector<2x128xf32>
    %109 = vector.broadcast %100 : f32 to vector<2x128xf32>
    %110 = arith.maximumf %7, %109 : vector<2x128xf32>
    %111 = vector.broadcast %102 : f32 to vector<2x128xf32>
    %112 = arith.minimumf %9, %111 : vector<2x128xf32>
    %113 = vector.broadcast %104 : f32 to vector<2x128xf32>
    %114 = arith.minimumf %11, %113 : vector<2x128xf32>
    %115 = arith.subf %112, %108 : vector<2x128xf32>
    %cst_42 = arith.constant 0.000000e+00 : f32
    %116 = vector.broadcast %cst_42 : f32 to vector<2x128xf32>
    %117 = arith.maximumf %115, %116 : vector<2x128xf32>
    %118 = arith.subf %114, %110 : vector<2x128xf32>
    %cst_43 = arith.constant 0.000000e+00 : f32
    %119 = vector.broadcast %cst_43 : f32 to vector<2x128xf32>
    %120 = arith.maximumf %118, %119 : vector<2x128xf32>
    %121 = arith.mulf %117, %120 : vector<2x128xf32>
    %122 = arith.subf %102, %98 : f32
    %123 = arith.subf %104, %100 : f32
    %124 = arith.mulf %122, %123 : f32
    %125 = vector.broadcast %124 : f32 to vector<2x128xf32>
    %126 = arith.addf %13, %125 : vector<2x128xf32>
    %127 = arith.subf %126, %121 : vector<2x128xf32>
    %cst_44 = arith.constant 9.99999993E-9 : f32
    %128 = vector.broadcast %cst_44 : f32 to vector<2x128xf32>
    %129 = arith.maximumf %127, %128 : vector<2x128xf32>
    %130 = arith.divf %121, %129 : vector<2x128xf32>
    %cst_45 = arith.constant dense<0xFF800000> : vector<128xf32>
    %131 = vector.multi_reduction <maximumf>, %130, %cst_45 [0] : vector<2x128xf32> to vector<128xf32>
    %132 = vector.shape_cast %131 : vector<128xf32> to vector<1x128xf32>
    %cst_46 = arith.constant dense<0xFF800000> : vector<1xf32>
    %133 = vector.multi_reduction <maximumf>, %132, %cst_46 [1] : vector<1x128xf32> to vector<1xf32>
    %134 = vector.shape_cast %133 : vector<1xf32> to vector<1x1xf32>
    %135 = vector.broadcast %134 : vector<1x1xf32> to vector<2x128xf32>
    %136 = arith.cmpf oeq, %130, %135 : vector<2x128xf32>
    %c256_i32_47 = arith.constant 256 : i32
    %137 = vector.broadcast %c256_i32_47 : i32 to vector<2x128xi32>
    %138 = arith.select %136, %22, %137 : vector<2x128xi1>, vector<2x128xi32>
    %cst_48 = arith.constant dense<2147483647> : vector<128xi32>
    %139 = vector.multi_reduction <minsi>, %138, %cst_48 [0] : vector<2x128xi32> to vector<128xi32>
    %140 = vector.shape_cast %139 : vector<128xi32> to vector<1x128xi32>
    %cst_49 = arith.constant dense<2147483647> : vector<1xi32>
    %141 = vector.multi_reduction <minsi>, %140, %cst_49 [1] : vector<1x128xi32> to vector<1xi32>
    %142 = vector.shape_cast %141 : vector<1xi32> to vector<1x1xi32>
    %143 = vector.broadcast %142 : vector<1x1xi32> to vector<2x128xi32>
    %144 = arith.cmpi eq, %22, %143 : vector<2x128xi32>
    %cst_50 = arith.constant 2.000000e+00 : f32
    %145 = vector.broadcast %cst_50 : f32 to vector<2x128xf32>
    %146 = arith.select %144, %145, %130 : vector<2x128xi1>, vector<2x128xf32>
    %147 = arith.cmpf ogt, %146, %80 : vector<2x128xf32>
    %148 = arith.select %147, %146, %80 : vector<2x128xi1>, vector<2x128xf32>
    %149 = arith.addf %98, %102 : f32
    %cst_51 = arith.constant 5.000000e-01 : f32
    %150 = arith.mulf %149, %cst_51 : f32
    %151 = vector.broadcast %150 : f32 to vector<2x128xf32>
    %152 = arith.select %147, %151, %84 : vector<2x128xi1>, vector<2x128xf32>
    %153 = arith.addf %100, %104 : f32
    %cst_52 = arith.constant 5.000000e-01 : f32
    %154 = arith.mulf %153, %cst_52 : f32
    %155 = vector.broadcast %154 : f32 to vector<2x128xf32>
    %156 = arith.select %147, %155, %88 : vector<2x128xi1>, vector<2x128xf32>
    %157 = arith.subf %102, %98 : f32
    %158 = vector.broadcast %157 : f32 to vector<2x128xf32>
    %159 = arith.select %147, %158, %91 : vector<2x128xi1>, vector<2x128xf32>
    %160 = arith.subf %104, %100 : f32
    %161 = vector.broadcast %160 : f32 to vector<2x128xf32>
    %162 = arith.select %147, %161, %94 : vector<2x128xi1>, vector<2x128xf32>
    %163 = vector.broadcast %106 : f32 to vector<2x128xf32>
    %164 = arith.select %147, %163, %96 : vector<2x128xi1>, vector<2x128xf32>
    %165 = arith.index_cast %arg0 : i32 to index
    %c10 = arith.constant 10 : index
    %166 = memref.load %arg4[%165, %c10] : memref<2x40xf32, #tpu.memory_space<smem>>
    %167 = arith.index_cast %arg0 : i32 to index
    %c11 = arith.constant 11 : index
    %168 = memref.load %arg4[%167, %c11] : memref<2x40xf32, #tpu.memory_space<smem>>
    %169 = arith.index_cast %arg0 : i32 to index
    %c12 = arith.constant 12 : index
    %170 = memref.load %arg4[%169, %c12] : memref<2x40xf32, #tpu.memory_space<smem>>
    %171 = arith.index_cast %arg0 : i32 to index
    %c13 = arith.constant 13 : index
    %172 = memref.load %arg4[%171, %c13] : memref<2x40xf32, #tpu.memory_space<smem>>
    %173 = arith.index_cast %arg0 : i32 to index
    %c14 = arith.constant 14 : index
    %174 = memref.load %arg4[%173, %c14] : memref<2x40xf32, #tpu.memory_space<smem>>
    %175 = vector.broadcast %166 : f32 to vector<2x128xf32>
    %176 = arith.maximumf %5, %175 : vector<2x128xf32>
    %177 = vector.broadcast %168 : f32 to vector<2x128xf32>
    %178 = arith.maximumf %7, %177 : vector<2x128xf32>
    %179 = vector.broadcast %170 : f32 to vector<2x128xf32>
    %180 = arith.minimumf %9, %179 : vector<2x128xf32>
    %181 = vector.broadcast %172 : f32 to vector<2x128xf32>
    %182 = arith.minimumf %11, %181 : vector<2x128xf32>
    %183 = arith.subf %180, %176 : vector<2x128xf32>
    %cst_53 = arith.constant 0.000000e+00 : f32
    %184 = vector.broadcast %cst_53 : f32 to vector<2x128xf32>
    %185 = arith.maximumf %183, %184 : vector<2x128xf32>
    %186 = arith.subf %182, %178 : vector<2x128xf32>
    %cst_54 = arith.constant 0.000000e+00 : f32
    %187 = vector.broadcast %cst_54 : f32 to vector<2x128xf32>
    %188 = arith.maximumf %186, %187 : vector<2x128xf32>
    %189 = arith.mulf %185, %188 : vector<2x128xf32>
    %190 = arith.subf %170, %166 : f32
    %191 = arith.subf %172, %168 : f32
    %192 = arith.mulf %190, %191 : f32
    %193 = vector.broadcast %192 : f32 to vector<2x128xf32>
    %194 = arith.addf %13, %193 : vector<2x128xf32>
    %195 = arith.subf %194, %189 : vector<2x128xf32>
    %cst_55 = arith.constant 9.99999993E-9 : f32
    %196 = vector.broadcast %cst_55 : f32 to vector<2x128xf32>
    %197 = arith.maximumf %195, %196 : vector<2x128xf32>
    %198 = arith.divf %189, %197 : vector<2x128xf32>
    %cst_56 = arith.constant dense<0xFF800000> : vector<128xf32>
    %199 = vector.multi_reduction <maximumf>, %198, %cst_56 [0] : vector<2x128xf32> to vector<128xf32>
    %200 = vector.shape_cast %199 : vector<128xf32> to vector<1x128xf32>
    %cst_57 = arith.constant dense<0xFF800000> : vector<1xf32>
    %201 = vector.multi_reduction <maximumf>, %200, %cst_57 [1] : vector<1x128xf32> to vector<1xf32>
    %202 = vector.shape_cast %201 : vector<1xf32> to vector<1x1xf32>
    %203 = vector.broadcast %202 : vector<1x1xf32> to vector<2x128xf32>
    %204 = arith.cmpf oeq, %198, %203 : vector<2x128xf32>
    %c256_i32_58 = arith.constant 256 : i32
    %205 = vector.broadcast %c256_i32_58 : i32 to vector<2x128xi32>
    %206 = arith.select %204, %22, %205 : vector<2x128xi1>, vector<2x128xi32>
    %cst_59 = arith.constant dense<2147483647> : vector<128xi32>
    %207 = vector.multi_reduction <minsi>, %206, %cst_59 [0] : vector<2x128xi32> to vector<128xi32>
    %208 = vector.shape_cast %207 : vector<128xi32> to vector<1x128xi32>
    %cst_60 = arith.constant dense<2147483647> : vector<1xi32>
    %209 = vector.multi_reduction <minsi>, %208, %cst_60 [1] : vector<1x128xi32> to vector<1xi32>
    %210 = vector.shape_cast %209 : vector<1xi32> to vector<1x1xi32>
    %211 = vector.broadcast %210 : vector<1x1xi32> to vector<2x128xi32>
    %212 = arith.cmpi eq, %22, %211 : vector<2x128xi32>
    %cst_61 = arith.constant 2.000000e+00 : f32
    %213 = vector.broadcast %cst_61 : f32 to vector<2x128xf32>
    %214 = arith.select %212, %213, %198 : vector<2x128xi1>, vector<2x128xf32>
    %215 = arith.cmpf ogt, %214, %148 : vector<2x128xf32>
    %216 = arith.select %215, %214, %148 : vector<2x128xi1>, vector<2x128xf32>
    %217 = arith.addf %166, %170 : f32
    %cst_62 = arith.constant 5.000000e-01 : f32
    %218 = arith.mulf %217, %cst_62 : f32
    %219 = vector.broadcast %218 : f32 to vector<2x128xf32>
    %220 = arith.select %215, %219, %152 : vector<2x128xi1>, vector<2x128xf32>
    %221 = arith.addf %168, %172 : f32
    %cst_63 = arith.constant 5.000000e-01 : f32
    %222 = arith.mulf %221, %cst_63 : f32
    %223 = vector.broadcast %222 : f32 to vector<2x128xf32>
    %224 = arith.select %215, %223, %156 : vector<2x128xi1>, vector<2x128xf32>
    %225 = arith.subf %170, %166 : f32
    %226 = vector.broadcast %225 : f32 to vector<2x128xf32>
    %227 = arith.select %215, %226, %159 : vector<2x128xi1>, vector<2x128xf32>
    %228 = arith.subf %172, %168 : f32
    %229 = vector.broadcast %228 : f32 to vector<2x128xf32>
    %230 = arith.select %215, %229, %162 : vector<2x128xi1>, vector<2x128xf32>
    %231 = vector.broadcast %174 : f32 to vector<2x128xf32>
    %232 = arith.select %215, %231, %164 : vector<2x128xi1>, vector<2x128xf32>
    %233 = arith.index_cast %arg0 : i32 to index
    %c15 = arith.constant 15 : index
    %234 = memref.load %arg4[%233, %c15] : memref<2x40xf32, #tpu.memory_space<smem>>
    %235 = arith.index_cast %arg0 : i32 to index
    %c16 = arith.constant 16 : index
    %236 = memref.load %arg4[%235, %c16] : memref<2x40xf32, #tpu.memory_space<smem>>
    %237 = arith.index_cast %arg0 : i32 to index
    %c17 = arith.constant 17 : index
    %238 = memref.load %arg4[%237, %c17] : memref<2x40xf32, #tpu.memory_space<smem>>
    %239 = arith.index_cast %arg0 : i32 to index
    %c18 = arith.constant 18 : index
    %240 = memref.load %arg4[%239, %c18] : memref<2x40xf32, #tpu.memory_space<smem>>
    %241 = arith.index_cast %arg0 : i32 to index
    %c19 = arith.constant 19 : index
    %242 = memref.load %arg4[%241, %c19] : memref<2x40xf32, #tpu.memory_space<smem>>
    %243 = vector.broadcast %234 : f32 to vector<2x128xf32>
    %244 = arith.maximumf %5, %243 : vector<2x128xf32>
    %245 = vector.broadcast %236 : f32 to vector<2x128xf32>
    %246 = arith.maximumf %7, %245 : vector<2x128xf32>
    %247 = vector.broadcast %238 : f32 to vector<2x128xf32>
    %248 = arith.minimumf %9, %247 : vector<2x128xf32>
    %249 = vector.broadcast %240 : f32 to vector<2x128xf32>
    %250 = arith.minimumf %11, %249 : vector<2x128xf32>
    %251 = arith.subf %248, %244 : vector<2x128xf32>
    %cst_64 = arith.constant 0.000000e+00 : f32
    %252 = vector.broadcast %cst_64 : f32 to vector<2x128xf32>
    %253 = arith.maximumf %251, %252 : vector<2x128xf32>
    %254 = arith.subf %250, %246 : vector<2x128xf32>
    %cst_65 = arith.constant 0.000000e+00 : f32
    %255 = vector.broadcast %cst_65 : f32 to vector<2x128xf32>
    %256 = arith.maximumf %254, %255 : vector<2x128xf32>
    %257 = arith.mulf %253, %256 : vector<2x128xf32>
    %258 = arith.subf %238, %234 : f32
    %259 = arith.subf %240, %236 : f32
    %260 = arith.mulf %258, %259 : f32
    %261 = vector.broadcast %260 : f32 to vector<2x128xf32>
    %262 = arith.addf %13, %261 : vector<2x128xf32>
    %263 = arith.subf %262, %257 : vector<2x128xf32>
    %cst_66 = arith.constant 9.99999993E-9 : f32
    %264 = vector.broadcast %cst_66 : f32 to vector<2x128xf32>
    %265 = arith.maximumf %263, %264 : vector<2x128xf32>
    %266 = arith.divf %257, %265 : vector<2x128xf32>
    %cst_67 = arith.constant dense<0xFF800000> : vector<128xf32>
    %267 = vector.multi_reduction <maximumf>, %266, %cst_67 [0] : vector<2x128xf32> to vector<128xf32>
    %268 = vector.shape_cast %267 : vector<128xf32> to vector<1x128xf32>
    %cst_68 = arith.constant dense<0xFF800000> : vector<1xf32>
    %269 = vector.multi_reduction <maximumf>, %268, %cst_68 [1] : vector<1x128xf32> to vector<1xf32>
    %270 = vector.shape_cast %269 : vector<1xf32> to vector<1x1xf32>
    %271 = vector.broadcast %270 : vector<1x1xf32> to vector<2x128xf32>
    %272 = arith.cmpf oeq, %266, %271 : vector<2x128xf32>
    %c256_i32_69 = arith.constant 256 : i32
    %273 = vector.broadcast %c256_i32_69 : i32 to vector<2x128xi32>
    %274 = arith.select %272, %22, %273 : vector<2x128xi1>, vector<2x128xi32>
    %cst_70 = arith.constant dense<2147483647> : vector<128xi32>
    %275 = vector.multi_reduction <minsi>, %274, %cst_70 [0] : vector<2x128xi32> to vector<128xi32>
    %276 = vector.shape_cast %275 : vector<128xi32> to vector<1x128xi32>
    %cst_71 = arith.constant dense<2147483647> : vector<1xi32>
    %277 = vector.multi_reduction <minsi>, %276, %cst_71 [1] : vector<1x128xi32> to vector<1xi32>
    %278 = vector.shape_cast %277 : vector<1xi32> to vector<1x1xi32>
    %279 = vector.broadcast %278 : vector<1x1xi32> to vector<2x128xi32>
    %280 = arith.cmpi eq, %22, %279 : vector<2x128xi32>
    %cst_72 = arith.constant 2.000000e+00 : f32
    %281 = vector.broadcast %cst_72 : f32 to vector<2x128xf32>
    %282 = arith.select %280, %281, %266 : vector<2x128xi1>, vector<2x128xf32>
    %283 = arith.cmpf ogt, %282, %216 : vector<2x128xf32>
    %284 = arith.select %283, %282, %216 : vector<2x128xi1>, vector<2x128xf32>
    %285 = arith.addf %234, %238 : f32
    %cst_73 = arith.constant 5.000000e-01 : f32
    %286 = arith.mulf %285, %cst_73 : f32
    %287 = vector.broadcast %286 : f32 to vector<2x128xf32>
    %288 = arith.select %283, %287, %220 : vector<2x128xi1>, vector<2x128xf32>
    %289 = arith.addf %236, %240 : f32
    %cst_74 = arith.constant 5.000000e-01 : f32
    %290 = arith.mulf %289, %cst_74 : f32
    %291 = vector.broadcast %290 : f32 to vector<2x128xf32>
    %292 = arith.select %283, %291, %224 : vector<2x128xi1>, vector<2x128xf32>
    %293 = arith.subf %238, %234 : f32
    %294 = vector.broadcast %293 : f32 to vector<2x128xf32>
    %295 = arith.select %283, %294, %227 : vector<2x128xi1>, vector<2x128xf32>
    %296 = arith.subf %240, %236 : f32
    %297 = vector.broadcast %296 : f32 to vector<2x128xf32>
    %298 = arith.select %283, %297, %230 : vector<2x128xi1>, vector<2x128xf32>
    %299 = vector.broadcast %242 : f32 to vector<2x128xf32>
    %300 = arith.select %283, %299, %232 : vector<2x128xi1>, vector<2x128xf32>
    %301 = arith.index_cast %arg0 : i32 to index
    %c20 = arith.constant 20 : index
    %302 = memref.load %arg4[%301, %c20] : memref<2x40xf32, #tpu.memory_space<smem>>
    %303 = arith.index_cast %arg0 : i32 to index
    %c21 = arith.constant 21 : index
    %304 = memref.load %arg4[%303, %c21] : memref<2x40xf32, #tpu.memory_space<smem>>
    %305 = arith.index_cast %arg0 : i32 to index
    %c22 = arith.constant 22 : index
    %306 = memref.load %arg4[%305, %c22] : memref<2x40xf32, #tpu.memory_space<smem>>
    %307 = arith.index_cast %arg0 : i32 to index
    %c23 = arith.constant 23 : index
    %308 = memref.load %arg4[%307, %c23] : memref<2x40xf32, #tpu.memory_space<smem>>
    %309 = arith.index_cast %arg0 : i32 to index
    %c24 = arith.constant 24 : index
    %310 = memref.load %arg4[%309, %c24] : memref<2x40xf32, #tpu.memory_space<smem>>
    %311 = vector.broadcast %302 : f32 to vector<2x128xf32>
    %312 = arith.maximumf %5, %311 : vector<2x128xf32>
    %313 = vector.broadcast %304 : f32 to vector<2x128xf32>
    %314 = arith.maximumf %7, %313 : vector<2x128xf32>
    %315 = vector.broadcast %306 : f32 to vector<2x128xf32>
    %316 = arith.minimumf %9, %315 : vector<2x128xf32>
    %317 = vector.broadcast %308 : f32 to vector<2x128xf32>
    %318 = arith.minimumf %11, %317 : vector<2x128xf32>
    %319 = arith.subf %316, %312 : vector<2x128xf32>
    %cst_75 = arith.constant 0.000000e+00 : f32
    %320 = vector.broadcast %cst_75 : f32 to vector<2x128xf32>
    %321 = arith.maximumf %319, %320 : vector<2x128xf32>
    %322 = arith.subf %318, %314 : vector<2x128xf32>
    %cst_76 = arith.constant 0.000000e+00 : f32
    %323 = vector.broadcast %cst_76 : f32 to vector<2x128xf32>
    %324 = arith.maximumf %322, %323 : vector<2x128xf32>
    %325 = arith.mulf %321, %324 : vector<2x128xf32>
    %326 = arith.subf %306, %302 : f32
    %327 = arith.subf %308, %304 : f32
    %328 = arith.mulf %326, %327 : f32
    %329 = vector.broadcast %328 : f32 to vector<2x128xf32>
    %330 = arith.addf %13, %329 : vector<2x128xf32>
    %331 = arith.subf %330, %325 : vector<2x128xf32>
    %cst_77 = arith.constant 9.99999993E-9 : f32
    %332 = vector.broadcast %cst_77 : f32 to vector<2x128xf32>
    %333 = arith.maximumf %331, %332 : vector<2x128xf32>
    %334 = arith.divf %325, %333 : vector<2x128xf32>
    %cst_78 = arith.constant dense<0xFF800000> : vector<128xf32>
    %335 = vector.multi_reduction <maximumf>, %334, %cst_78 [0] : vector<2x128xf32> to vector<128xf32>
    %336 = vector.shape_cast %335 : vector<128xf32> to vector<1x128xf32>
    %cst_79 = arith.constant dense<0xFF800000> : vector<1xf32>
    %337 = vector.multi_reduction <maximumf>, %336, %cst_79 [1] : vector<1x128xf32> to vector<1xf32>
    %338 = vector.shape_cast %337 : vector<1xf32> to vector<1x1xf32>
    %339 = vector.broadcast %338 : vector<1x1xf32> to vector<2x128xf32>
    %340 = arith.cmpf oeq, %334, %339 : vector<2x128xf32>
    %c256_i32_80 = arith.constant 256 : i32
    %341 = vector.broadcast %c256_i32_80 : i32 to vector<2x128xi32>
    %342 = arith.select %340, %22, %341 : vector<2x128xi1>, vector<2x128xi32>
    %cst_81 = arith.constant dense<2147483647> : vector<128xi32>
    %343 = vector.multi_reduction <minsi>, %342, %cst_81 [0] : vector<2x128xi32> to vector<128xi32>
    %344 = vector.shape_cast %343 : vector<128xi32> to vector<1x128xi32>
    %cst_82 = arith.constant dense<2147483647> : vector<1xi32>
    %345 = vector.multi_reduction <minsi>, %344, %cst_82 [1] : vector<1x128xi32> to vector<1xi32>
    %346 = vector.shape_cast %345 : vector<1xi32> to vector<1x1xi32>
    %347 = vector.broadcast %346 : vector<1x1xi32> to vector<2x128xi32>
    %348 = arith.cmpi eq, %22, %347 : vector<2x128xi32>
    %cst_83 = arith.constant 2.000000e+00 : f32
    %349 = vector.broadcast %cst_83 : f32 to vector<2x128xf32>
    %350 = arith.select %348, %349, %334 : vector<2x128xi1>, vector<2x128xf32>
    %351 = arith.cmpf ogt, %350, %284 : vector<2x128xf32>
    %352 = arith.select %351, %350, %284 : vector<2x128xi1>, vector<2x128xf32>
    %353 = arith.addf %302, %306 : f32
    %cst_84 = arith.constant 5.000000e-01 : f32
    %354 = arith.mulf %353, %cst_84 : f32
    %355 = vector.broadcast %354 : f32 to vector<2x128xf32>
    %356 = arith.select %351, %355, %288 : vector<2x128xi1>, vector<2x128xf32>
    %357 = arith.addf %304, %308 : f32
    %cst_85 = arith.constant 5.000000e-01 : f32
    %358 = arith.mulf %357, %cst_85 : f32
    %359 = vector.broadcast %358 : f32 to vector<2x128xf32>
    %360 = arith.select %351, %359, %292 : vector<2x128xi1>, vector<2x128xf32>
    %361 = arith.subf %306, %302 : f32
    %362 = vector.broadcast %361 : f32 to vector<2x128xf32>
    %363 = arith.select %351, %362, %295 : vector<2x128xi1>, vector<2x128xf32>
    %364 = arith.subf %308, %304 : f32
    %365 = vector.broadcast %364 : f32 to vector<2x128xf32>
    %366 = arith.select %351, %365, %298 : vector<2x128xi1>, vector<2x128xf32>
    %367 = vector.broadcast %310 : f32 to vector<2x128xf32>
    %368 = arith.select %351, %367, %300 : vector<2x128xi1>, vector<2x128xf32>
    %369 = arith.index_cast %arg0 : i32 to index
    %c25 = arith.constant 25 : index
    %370 = memref.load %arg4[%369, %c25] : memref<2x40xf32, #tpu.memory_space<smem>>
    %371 = arith.index_cast %arg0 : i32 to index
    %c26 = arith.constant 26 : index
    %372 = memref.load %arg4[%371, %c26] : memref<2x40xf32, #tpu.memory_space<smem>>
    %373 = arith.index_cast %arg0 : i32 to index
    %c27 = arith.constant 27 : index
    %374 = memref.load %arg4[%373, %c27] : memref<2x40xf32, #tpu.memory_space<smem>>
    %375 = arith.index_cast %arg0 : i32 to index
    %c28 = arith.constant 28 : index
    %376 = memref.load %arg4[%375, %c28] : memref<2x40xf32, #tpu.memory_space<smem>>
    %377 = arith.index_cast %arg0 : i32 to index
    %c29 = arith.constant 29 : index
    %378 = memref.load %arg4[%377, %c29] : memref<2x40xf32, #tpu.memory_space<smem>>
    %379 = vector.broadcast %370 : f32 to vector<2x128xf32>
    %380 = arith.maximumf %5, %379 : vector<2x128xf32>
    %381 = vector.broadcast %372 : f32 to vector<2x128xf32>
    %382 = arith.maximumf %7, %381 : vector<2x128xf32>
    %383 = vector.broadcast %374 : f32 to vector<2x128xf32>
    %384 = arith.minimumf %9, %383 : vector<2x128xf32>
    %385 = vector.broadcast %376 : f32 to vector<2x128xf32>
    %386 = arith.minimumf %11, %385 : vector<2x128xf32>
    %387 = arith.subf %384, %380 : vector<2x128xf32>
    %cst_86 = arith.constant 0.000000e+00 : f32
    %388 = vector.broadcast %cst_86 : f32 to vector<2x128xf32>
    %389 = arith.maximumf %387, %388 : vector<2x128xf32>
    %390 = arith.subf %386, %382 : vector<2x128xf32>
    %cst_87 = arith.constant 0.000000e+00 : f32
    %391 = vector.broadcast %cst_87 : f32 to vector<2x128xf32>
    %392 = arith.maximumf %390, %391 : vector<2x128xf32>
    %393 = arith.mulf %389, %392 : vector<2x128xf32>
    %394 = arith.subf %374, %370 : f32
    %395 = arith.subf %376, %372 : f32
    %396 = arith.mulf %394, %395 : f32
    %397 = vector.broadcast %396 : f32 to vector<2x128xf32>
    %398 = arith.addf %13, %397 : vector<2x128xf32>
    %399 = arith.subf %398, %393 : vector<2x128xf32>
    %cst_88 = arith.constant 9.99999993E-9 : f32
    %400 = vector.broadcast %cst_88 : f32 to vector<2x128xf32>
    %401 = arith.maximumf %399, %400 : vector<2x128xf32>
    %402 = arith.divf %393, %401 : vector<2x128xf32>
    %cst_89 = arith.constant dense<0xFF800000> : vector<128xf32>
    %403 = vector.multi_reduction <maximumf>, %402, %cst_89 [0] : vector<2x128xf32> to vector<128xf32>
    %404 = vector.shape_cast %403 : vector<128xf32> to vector<1x128xf32>
    %cst_90 = arith.constant dense<0xFF800000> : vector<1xf32>
    %405 = vector.multi_reduction <maximumf>, %404, %cst_90 [1] : vector<1x128xf32> to vector<1xf32>
    %406 = vector.shape_cast %405 : vector<1xf32> to vector<1x1xf32>
    %407 = vector.broadcast %406 : vector<1x1xf32> to vector<2x128xf32>
    %408 = arith.cmpf oeq, %402, %407 : vector<2x128xf32>
    %c256_i32_91 = arith.constant 256 : i32
    %409 = vector.broadcast %c256_i32_91 : i32 to vector<2x128xi32>
    %410 = arith.select %408, %22, %409 : vector<2x128xi1>, vector<2x128xi32>
    %cst_92 = arith.constant dense<2147483647> : vector<128xi32>
    %411 = vector.multi_reduction <minsi>, %410, %cst_92 [0] : vector<2x128xi32> to vector<128xi32>
    %412 = vector.shape_cast %411 : vector<128xi32> to vector<1x128xi32>
    %cst_93 = arith.constant dense<2147483647> : vector<1xi32>
    %413 = vector.multi_reduction <minsi>, %412, %cst_93 [1] : vector<1x128xi32> to vector<1xi32>
    %414 = vector.shape_cast %413 : vector<1xi32> to vector<1x1xi32>
    %415 = vector.broadcast %414 : vector<1x1xi32> to vector<2x128xi32>
    %416 = arith.cmpi eq, %22, %415 : vector<2x128xi32>
    %cst_94 = arith.constant 2.000000e+00 : f32
    %417 = vector.broadcast %cst_94 : f32 to vector<2x128xf32>
    %418 = arith.select %416, %417, %402 : vector<2x128xi1>, vector<2x128xf32>
    %419 = arith.cmpf ogt, %418, %352 : vector<2x128xf32>
    %420 = arith.select %419, %418, %352 : vector<2x128xi1>, vector<2x128xf32>
    %421 = arith.addf %370, %374 : f32
    %cst_95 = arith.constant 5.000000e-01 : f32
    %422 = arith.mulf %421, %cst_95 : f32
    %423 = vector.broadcast %422 : f32 to vector<2x128xf32>
    %424 = arith.select %419, %423, %356 : vector<2x128xi1>, vector<2x128xf32>
    %425 = arith.addf %372, %376 : f32
    %cst_96 = arith.constant 5.000000e-01 : f32
    %426 = arith.mulf %425, %cst_96 : f32
    %427 = vector.broadcast %426 : f32 to vector<2x128xf32>
    %428 = arith.select %419, %427, %360 : vector<2x128xi1>, vector<2x128xf32>
    %429 = arith.subf %374, %370 : f32
    %430 = vector.broadcast %429 : f32 to vector<2x128xf32>
    %431 = arith.select %419, %430, %363 : vector<2x128xi1>, vector<2x128xf32>
    %432 = arith.subf %376, %372 : f32
    %433 = vector.broadcast %432 : f32 to vector<2x128xf32>
    %434 = arith.select %419, %433, %366 : vector<2x128xi1>, vector<2x128xf32>
    %435 = vector.broadcast %378 : f32 to vector<2x128xf32>
    %436 = arith.select %419, %435, %368 : vector<2x128xi1>, vector<2x128xf32>
    %437 = arith.index_cast %arg0 : i32 to index
    %c30 = arith.constant 30 : index
    %438 = memref.load %arg4[%437, %c30] : memref<2x40xf32, #tpu.memory_space<smem>>
    %439 = arith.index_cast %arg0 : i32 to index
    %c31 = arith.constant 31 : index
    %440 = memref.load %arg4[%439, %c31] : memref<2x40xf32, #tpu.memory_space<smem>>
    %441 = arith.index_cast %arg0 : i32 to index
    %c32 = arith.constant 32 : index
    %442 = memref.load %arg4[%441, %c32] : memref<2x40xf32, #tpu.memory_space<smem>>
    %443 = arith.index_cast %arg0 : i32 to index
    %c33 = arith.constant 33 : index
    %444 = memref.load %arg4[%443, %c33] : memref<2x40xf32, #tpu.memory_space<smem>>
    %445 = arith.index_cast %arg0 : i32 to index
    %c34 = arith.constant 34 : index
    %446 = memref.load %arg4[%445, %c34] : memref<2x40xf32, #tpu.memory_space<smem>>
    %447 = vector.broadcast %438 : f32 to vector<2x128xf32>
    %448 = arith.maximumf %5, %447 : vector<2x128xf32>
    %449 = vector.broadcast %440 : f32 to vector<2x128xf32>
    %450 = arith.maximumf %7, %449 : vector<2x128xf32>
    %451 = vector.broadcast %442 : f32 to vector<2x128xf32>
    %452 = arith.minimumf %9, %451 : vector<2x128xf32>
    %453 = vector.broadcast %444 : f32 to vector<2x128xf32>
    %454 = arith.minimumf %11, %453 : vector<2x128xf32>
    %455 = arith.subf %452, %448 : vector<2x128xf32>
    %cst_97 = arith.constant 0.000000e+00 : f32
    %456 = vector.broadcast %cst_97 : f32 to vector<2x128xf32>
    %457 = arith.maximumf %455, %456 : vector<2x128xf32>
    %458 = arith.subf %454, %450 : vector<2x128xf32>
    %cst_98 = arith.constant 0.000000e+00 : f32
    %459 = vector.broadcast %cst_98 : f32 to vector<2x128xf32>
    %460 = arith.maximumf %458, %459 : vector<2x128xf32>
    %461 = arith.mulf %457, %460 : vector<2x128xf32>
    %462 = arith.subf %442, %438 : f32
    %463 = arith.subf %444, %440 : f32
    %464 = arith.mulf %462, %463 : f32
    %465 = vector.broadcast %464 : f32 to vector<2x128xf32>
    %466 = arith.addf %13, %465 : vector<2x128xf32>
    %467 = arith.subf %466, %461 : vector<2x128xf32>
    %cst_99 = arith.constant 9.99999993E-9 : f32
    %468 = vector.broadcast %cst_99 : f32 to vector<2x128xf32>
    %469 = arith.maximumf %467, %468 : vector<2x128xf32>
    %470 = arith.divf %461, %469 : vector<2x128xf32>
    %cst_100 = arith.constant dense<0xFF800000> : vector<128xf32>
    %471 = vector.multi_reduction <maximumf>, %470, %cst_100 [0] : vector<2x128xf32> to vector<128xf32>
    %472 = vector.shape_cast %471 : vector<128xf32> to vector<1x128xf32>
    %cst_101 = arith.constant dense<0xFF800000> : vector<1xf32>
    %473 = vector.multi_reduction <maximumf>, %472, %cst_101 [1] : vector<1x128xf32> to vector<1xf32>
    %474 = vector.shape_cast %473 : vector<1xf32> to vector<1x1xf32>
    %475 = vector.broadcast %474 : vector<1x1xf32> to vector<2x128xf32>
    %476 = arith.cmpf oeq, %470, %475 : vector<2x128xf32>
    %c256_i32_102 = arith.constant 256 : i32
    %477 = vector.broadcast %c256_i32_102 : i32 to vector<2x128xi32>
    %478 = arith.select %476, %22, %477 : vector<2x128xi1>, vector<2x128xi32>
    %cst_103 = arith.constant dense<2147483647> : vector<128xi32>
    %479 = vector.multi_reduction <minsi>, %478, %cst_103 [0] : vector<2x128xi32> to vector<128xi32>
    %480 = vector.shape_cast %479 : vector<128xi32> to vector<1x128xi32>
    %cst_104 = arith.constant dense<2147483647> : vector<1xi32>
    %481 = vector.multi_reduction <minsi>, %480, %cst_104 [1] : vector<1x128xi32> to vector<1xi32>
    %482 = vector.shape_cast %481 : vector<1xi32> to vector<1x1xi32>
    %483 = vector.broadcast %482 : vector<1x1xi32> to vector<2x128xi32>
    %484 = arith.cmpi eq, %22, %483 : vector<2x128xi32>
    %cst_105 = arith.constant 2.000000e+00 : f32
    %485 = vector.broadcast %cst_105 : f32 to vector<2x128xf32>
    %486 = arith.select %484, %485, %470 : vector<2x128xi1>, vector<2x128xf32>
    %487 = arith.cmpf ogt, %486, %420 : vector<2x128xf32>
    %488 = arith.select %487, %486, %420 : vector<2x128xi1>, vector<2x128xf32>
    %489 = arith.addf %438, %442 : f32
    %cst_106 = arith.constant 5.000000e-01 : f32
    %490 = arith.mulf %489, %cst_106 : f32
    %491 = vector.broadcast %490 : f32 to vector<2x128xf32>
    %492 = arith.select %487, %491, %424 : vector<2x128xi1>, vector<2x128xf32>
    %493 = arith.addf %440, %444 : f32
    %cst_107 = arith.constant 5.000000e-01 : f32
    %494 = arith.mulf %493, %cst_107 : f32
    %495 = vector.broadcast %494 : f32 to vector<2x128xf32>
    %496 = arith.select %487, %495, %428 : vector<2x128xi1>, vector<2x128xf32>
    %497 = arith.subf %442, %438 : f32
    %498 = vector.broadcast %497 : f32 to vector<2x128xf32>
    %499 = arith.select %487, %498, %431 : vector<2x128xi1>, vector<2x128xf32>
    %500 = arith.subf %444, %440 : f32
    %501 = vector.broadcast %500 : f32 to vector<2x128xf32>
    %502 = arith.select %487, %501, %434 : vector<2x128xi1>, vector<2x128xf32>
    %503 = vector.broadcast %446 : f32 to vector<2x128xf32>
    %504 = arith.select %487, %503, %436 : vector<2x128xi1>, vector<2x128xf32>
    %505 = arith.index_cast %arg0 : i32 to index
    %c35 = arith.constant 35 : index
    %506 = memref.load %arg4[%505, %c35] : memref<2x40xf32, #tpu.memory_space<smem>>
    %507 = arith.index_cast %arg0 : i32 to index
    %c36 = arith.constant 36 : index
    %508 = memref.load %arg4[%507, %c36] : memref<2x40xf32, #tpu.memory_space<smem>>
    %509 = arith.index_cast %arg0 : i32 to index
    %c37 = arith.constant 37 : index
    %510 = memref.load %arg4[%509, %c37] : memref<2x40xf32, #tpu.memory_space<smem>>
    %511 = arith.index_cast %arg0 : i32 to index
    %c38 = arith.constant 38 : index
    %512 = memref.load %arg4[%511, %c38] : memref<2x40xf32, #tpu.memory_space<smem>>
    %513 = arith.index_cast %arg0 : i32 to index
    %c39 = arith.constant 39 : index
    %514 = memref.load %arg4[%513, %c39] : memref<2x40xf32, #tpu.memory_space<smem>>
    %515 = vector.broadcast %506 : f32 to vector<2x128xf32>
    %516 = arith.maximumf %5, %515 : vector<2x128xf32>
    %517 = vector.broadcast %508 : f32 to vector<2x128xf32>
    %518 = arith.maximumf %7, %517 : vector<2x128xf32>
    %519 = vector.broadcast %510 : f32 to vector<2x128xf32>
    %520 = arith.minimumf %9, %519 : vector<2x128xf32>
    %521 = vector.broadcast %512 : f32 to vector<2x128xf32>
    %522 = arith.minimumf %11, %521 : vector<2x128xf32>
    %523 = arith.subf %520, %516 : vector<2x128xf32>
    %cst_108 = arith.constant 0.000000e+00 : f32
    %524 = vector.broadcast %cst_108 : f32 to vector<2x128xf32>
    %525 = arith.maximumf %523, %524 : vector<2x128xf32>
    %526 = arith.subf %522, %518 : vector<2x128xf32>
    %cst_109 = arith.constant 0.000000e+00 : f32
    %527 = vector.broadcast %cst_109 : f32 to vector<2x128xf32>
    %528 = arith.maximumf %526, %527 : vector<2x128xf32>
    %529 = arith.mulf %525, %528 : vector<2x128xf32>
    %530 = arith.subf %510, %506 : f32
    %531 = arith.subf %512, %508 : f32
    %532 = arith.mulf %530, %531 : f32
    %533 = vector.broadcast %532 : f32 to vector<2x128xf32>
    %534 = arith.addf %13, %533 : vector<2x128xf32>
    %535 = arith.subf %534, %529 : vector<2x128xf32>
    %cst_110 = arith.constant 9.99999993E-9 : f32
    %536 = vector.broadcast %cst_110 : f32 to vector<2x128xf32>
    %537 = arith.maximumf %535, %536 : vector<2x128xf32>
    %538 = arith.divf %529, %537 : vector<2x128xf32>
    %cst_111 = arith.constant dense<0xFF800000> : vector<128xf32>
    %539 = vector.multi_reduction <maximumf>, %538, %cst_111 [0] : vector<2x128xf32> to vector<128xf32>
    %540 = vector.shape_cast %539 : vector<128xf32> to vector<1x128xf32>
    %cst_112 = arith.constant dense<0xFF800000> : vector<1xf32>
    %541 = vector.multi_reduction <maximumf>, %540, %cst_112 [1] : vector<1x128xf32> to vector<1xf32>
    %542 = vector.shape_cast %541 : vector<1xf32> to vector<1x1xf32>
    %543 = vector.broadcast %542 : vector<1x1xf32> to vector<2x128xf32>
    %544 = arith.cmpf oeq, %538, %543 : vector<2x128xf32>
    %c256_i32_113 = arith.constant 256 : i32
    %545 = vector.broadcast %c256_i32_113 : i32 to vector<2x128xi32>
    %546 = arith.select %544, %22, %545 : vector<2x128xi1>, vector<2x128xi32>
    %cst_114 = arith.constant dense<2147483647> : vector<128xi32>
    %547 = vector.multi_reduction <minsi>, %546, %cst_114 [0] : vector<2x128xi32> to vector<128xi32>
    %548 = vector.shape_cast %547 : vector<128xi32> to vector<1x128xi32>
    %cst_115 = arith.constant dense<2147483647> : vector<1xi32>
    %549 = vector.multi_reduction <minsi>, %548, %cst_115 [1] : vector<1x128xi32> to vector<1xi32>
    %550 = vector.shape_cast %549 : vector<1xi32> to vector<1x1xi32>
    %551 = vector.broadcast %550 : vector<1x1xi32> to vector<2x128xi32>
    %552 = arith.cmpi eq, %22, %551 : vector<2x128xi32>
    %cst_116 = arith.constant 2.000000e+00 : f32
    %553 = vector.broadcast %cst_116 : f32 to vector<2x128xf32>
    %554 = arith.select %552, %553, %538 : vector<2x128xi1>, vector<2x128xf32>
    %555 = arith.cmpf ogt, %554, %488 : vector<2x128xf32>
    %556 = arith.select %555, %554, %488 : vector<2x128xi1>, vector<2x128xf32>
    %557 = arith.addf %506, %510 : f32
    %cst_117 = arith.constant 5.000000e-01 : f32
    %558 = arith.mulf %557, %cst_117 : f32
    %559 = vector.broadcast %558 : f32 to vector<2x128xf32>
    %560 = arith.select %555, %559, %492 : vector<2x128xi1>, vector<2x128xf32>
    %561 = arith.addf %508, %512 : f32
    %cst_118 = arith.constant 5.000000e-01 : f32
    %562 = arith.mulf %561, %cst_118 : f32
    %563 = vector.broadcast %562 : f32 to vector<2x128xf32>
    %564 = arith.select %555, %563, %496 : vector<2x128xi1>, vector<2x128xf32>
    %565 = arith.subf %510, %506 : f32
    %566 = vector.broadcast %565 : f32 to vector<2x128xf32>
    %567 = arith.select %555, %566, %499 : vector<2x128xi1>, vector<2x128xf32>
    %568 = arith.subf %512, %508 : f32
    %569 = vector.broadcast %568 : f32 to vector<2x128xf32>
    %570 = arith.select %555, %569, %502 : vector<2x128xi1>, vector<2x128xf32>
    %571 = vector.broadcast %514 : f32 to vector<2x128xf32>
    %572 = arith.select %555, %571, %504 : vector<2x128xi1>, vector<2x128xf32>
    %cst_119 = arith.constant 5.000000e-01 : f32
    %573 = vector.broadcast %cst_119 : f32 to vector<2x128xf32>
    %574 = arith.cmpf oge, %556, %573 : vector<2x128xf32>
    %575 = arith.extui %574 : vector<2x128xi1> to vector<2x128xi32>
    %576 = arith.sitofp %575 : vector<2x128xi32> to vector<2x128xf32>
    %cst_120 = arith.constant dense<0.000000e+00> : vector<128xf32>
    %577 = vector.multi_reduction <add>, %576, %cst_120 [0] : vector<2x128xf32> to vector<128xf32>
    %578 = vector.shape_cast %577 : vector<128xf32> to vector<1x128xf32>
    %cst_121 = arith.constant dense<0.000000e+00> : vector<1xf32>
    %579 = vector.multi_reduction <add>, %578, %cst_121 [1] : vector<1x128xf32> to vector<1xf32>
    %580 = vector.shape_cast %579 : vector<1xf32> to vector<1x1xf32>
    %cst_122 = arith.constant 1.000000e+00 : f32
    %581 = vector.broadcast %cst_122 : f32 to vector<1x1xf32>
    %582 = arith.maximumf %580, %581 : vector<1x1xf32>
    %cst_123 = arith.constant 0.000000e+00 : f32
    %583 = vector.broadcast %cst_123 : f32 to vector<2x128xf32>
    %584 = arith.select %574, %572, %583 : vector<2x128xi1>, vector<2x128xf32>
    %c0_124 = arith.constant 0 : index
    %c0_125 = arith.constant 0 : index
    %c0_126 = arith.constant 0 : index
    %c0_127 = arith.constant 0 : index
    %585 = vector.load %arg1[%c0_124, %c0_125, %c0_126, %c0_127] : memref<1x4x2x128xf32, #tpu.memory_space<vmem>>, vector<1x1x2x128xf32>
    %586 = vector.shape_cast %585 : vector<1x1x2x128xf32> to vector<2x128xf32>
    %c0_128 = arith.constant 0 : index
    %c1_129 = arith.constant 1 : index
    %c0_130 = arith.constant 0 : index
    %c0_131 = arith.constant 0 : index
    %587 = vector.load %arg1[%c0_128, %c1_129, %c0_130, %c0_131] : memref<1x4x2x128xf32, #tpu.memory_space<vmem>>, vector<1x1x2x128xf32>
    %588 = vector.shape_cast %587 : vector<1x1x2x128xf32> to vector<2x128xf32>
    %c0_132 = arith.constant 0 : index
    %c2_133 = arith.constant 2 : index
    %c0_134 = arith.constant 0 : index
    %c0_135 = arith.constant 0 : index
    %589 = vector.load %arg1[%c0_132, %c2_133, %c0_134, %c0_135] : memref<1x4x2x128xf32, #tpu.memory_space<vmem>>, vector<1x1x2x128xf32>
    %590 = vector.shape_cast %589 : vector<1x1x2x128xf32> to vector<2x128xf32>
    %c0_136 = arith.constant 0 : index
    %c3_137 = arith.constant 3 : index
    %c0_138 = arith.constant 0 : index
    %c0_139 = arith.constant 0 : index
    %591 = vector.load %arg1[%c0_136, %c3_137, %c0_138, %c0_139] : memref<1x4x2x128xf32, #tpu.memory_space<vmem>>, vector<1x1x2x128xf32>
    %592 = vector.shape_cast %591 : vector<1x1x2x128xf32> to vector<2x128xf32>
    %593 = arith.maximumf %586, %588 : vector<2x128xf32>
    %594 = arith.maximumf %593, %590 : vector<2x128xf32>
    %595 = arith.maximumf %594, %592 : vector<2x128xf32>
    %596 = arith.subf %586, %595 : vector<2x128xf32>
    %597 = math.exp %596 : vector<2x128xf32>
    %598 = arith.subf %588, %595 : vector<2x128xf32>
    %599 = math.exp %598 : vector<2x128xf32>
    %600 = arith.addf %597, %599 : vector<2x128xf32>
    %601 = arith.subf %590, %595 : vector<2x128xf32>
    %602 = math.exp %601 : vector<2x128xf32>
    %603 = arith.addf %600, %602 : vector<2x128xf32>
    %604 = arith.subf %592, %595 : vector<2x128xf32>
    %605 = math.exp %604 : vector<2x128xf32>
    %606 = arith.addf %603, %605 : vector<2x128xf32>
    %607 = math.log %606 : vector<2x128xf32>
    %608 = arith.addf %595, %607 : vector<2x128xf32>
    %609 = arith.subf %608, %586 : vector<2x128xf32>
    %cst_140 = arith.constant 0.000000e+00 : f32
    %610 = vector.broadcast %cst_140 : f32 to vector<2x128xf32>
    %611 = arith.maximumf %609, %610 : vector<2x128xf32>
    %612 = arith.fptosi %584 : vector<2x128xf32> to vector<2x128xi32>
    %c0_i32 = arith.constant 0 : i32
    %613 = vector.broadcast %c0_i32 : i32 to vector<2x128xi32>
    %614 = arith.cmpi eq, %612, %613 : vector<2x128xi32>
    %cst_141 = arith.constant 0.000000e+00 : f32
    %615 = vector.broadcast %cst_141 : f32 to vector<2x128xf32>
    %616 = arith.select %614, %586, %615 : vector<2x128xi1>, vector<2x128xf32>
    %c1_i32 = arith.constant 1 : i32
    %617 = vector.broadcast %c1_i32 : i32 to vector<2x128xi32>
    %618 = arith.cmpi eq, %612, %617 : vector<2x128xi32>
    %cst_142 = arith.constant 0.000000e+00 : f32
    %619 = vector.broadcast %cst_142 : f32 to vector<2x128xf32>
    %620 = arith.select %618, %588, %619 : vector<2x128xi1>, vector<2x128xf32>
    %621 = arith.addf %616, %620 : vector<2x128xf32>
    %c2_i32 = arith.constant 2 : i32
    %622 = vector.broadcast %c2_i32 : i32 to vector<2x128xi32>
    %623 = arith.cmpi eq, %612, %622 : vector<2x128xi32>
    %cst_143 = arith.constant 0.000000e+00 : f32
    %624 = vector.broadcast %cst_143 : f32 to vector<2x128xf32>
    %625 = arith.select %623, %590, %624 : vector<2x128xi1>, vector<2x128xf32>
    %626 = arith.addf %621, %625 : vector<2x128xf32>
    %c3_i32 = arith.constant 3 : i32
    %627 = vector.broadcast %c3_i32 : i32 to vector<2x128xi32>
    %628 = arith.cmpi eq, %612, %627 : vector<2x128xi32>
    %cst_144 = arith.constant 0.000000e+00 : f32
    %629 = vector.broadcast %cst_144 : f32 to vector<2x128xf32>
    %630 = arith.select %628, %592, %629 : vector<2x128xi1>, vector<2x128xf32>
    %631 = arith.addf %626, %630 : vector<2x128xf32>
    %632 = arith.subf %608, %631 : vector<2x128xf32>
    %cst_145 = arith.constant 0.000000e+00 : f32
    %633 = vector.broadcast %cst_145 : f32 to vector<2x128xf32>
    %634 = arith.cmpf ogt, %584, %633 : vector<2x128xf32>
    %635 = arith.extui %634 : vector<2x128xi1> to vector<2x128xi32>
    %636 = arith.sitofp %635 : vector<2x128xi32> to vector<2x128xf32>
    %cst_146 = arith.constant dense<0.000000e+00> : vector<128xf32>
    %637 = vector.multi_reduction <add>, %636, %cst_146 [0] : vector<2x128xf32> to vector<128xf32>
    %638 = vector.shape_cast %637 : vector<128xf32> to vector<1x128xf32>
    %cst_147 = arith.constant dense<0.000000e+00> : vector<1xf32>
    %639 = vector.multi_reduction <add>, %638, %cst_147 [1] : vector<1x128xf32> to vector<1xf32>
    %640 = vector.shape_cast %639 : vector<1xf32> to vector<1x1xf32>
    %cst_148 = arith.constant 3.000000e+00 : f32
    %641 = vector.broadcast %cst_148 : f32 to vector<1x1xf32>
    %642 = arith.mulf %640, %641 : vector<1x1xf32>
    %643 = tpu.bitcast %611 : vector<2x128xf32> -> vector<2x128xi32>
    %c-1_i32 = arith.constant -1 : i32
    %644 = vector.broadcast %c-1_i32 : i32 to vector<2x128xi32>
    %645 = arith.select %634, %644, %643 : vector<2x128xi1>, vector<2x128xi32>
    %c-2_i32 = arith.constant -2 : i32
    %646 = vector.broadcast %c-2_i32 : i32 to vector<1x1xi32>
    %c2139095040_i32 = arith.constant 2139095040 : i32
    %647 = vector.broadcast %c2139095040_i32 : i32 to vector<1x1xi32>
    %648 = arith.subi %647, %646 : vector<1x1xi32>
    %c1_i32_149 = arith.constant 1 : i32
    %649 = vector.broadcast %c1_i32_149 : i32 to vector<1x1xi32>
    %650 = arith.addi %648, %649 : vector<1x1xi32>
    %c1_i32_150 = arith.constant 1 : i32
    %651 = vector.broadcast %c1_i32_150 : i32 to vector<1x1xi32>
    %652 = arith.shrsi %650, %651 : vector<1x1xi32>
    %653 = arith.addi %646, %652 : vector<1x1xi32>
    %654 = arith.subi %653, %646 : vector<1x1xi32>
    %c1_i32_151 = arith.constant 1 : i32
    %655 = vector.broadcast %c1_i32_151 : i32 to vector<1x1xi32>
    %656 = arith.shrsi %654, %655 : vector<1x1xi32>
    %657 = arith.addi %646, %656 : vector<1x1xi32>
    %658 = arith.subi %647, %653 : vector<1x1xi32>
    %c1_i32_152 = arith.constant 1 : i32
    %659 = vector.broadcast %c1_i32_152 : i32 to vector<1x1xi32>
    %660 = arith.addi %658, %659 : vector<1x1xi32>
    %c1_i32_153 = arith.constant 1 : i32
    %661 = vector.broadcast %c1_i32_153 : i32 to vector<1x1xi32>
    %662 = arith.shrsi %660, %661 : vector<1x1xi32>
    %663 = arith.addi %653, %662 : vector<1x1xi32>
    %664 = vector.broadcast %653 : vector<1x1xi32> to vector<2x128xi32>
    %665 = arith.cmpi sgt, %645, %664 : vector<2x128xi32>
    %666 = arith.extui %665 : vector<2x128xi1> to vector<2x128xi32>
    %667 = arith.sitofp %666 : vector<2x128xi32> to vector<2x128xf32>
    %cst_154 = arith.constant dense<0.000000e+00> : vector<128xf32>
    %668 = vector.multi_reduction <add>, %667, %cst_154 [0] : vector<2x128xf32> to vector<128xf32>
    %669 = vector.shape_cast %668 : vector<128xf32> to vector<1x128xf32>
    %cst_155 = arith.constant dense<0.000000e+00> : vector<1xf32>
    %670 = vector.multi_reduction <add>, %669, %cst_155 [1] : vector<1x128xf32> to vector<1xf32>
    %671 = vector.shape_cast %670 : vector<1xf32> to vector<1x1xf32>
    %672 = arith.cmpf oge, %671, %642 : vector<1x1xf32>
    %673 = vector.broadcast %657 : vector<1x1xi32> to vector<2x128xi32>
    %674 = arith.cmpi sgt, %645, %673 : vector<2x128xi32>
    %675 = arith.extui %674 : vector<2x128xi1> to vector<2x128xi32>
    %676 = arith.sitofp %675 : vector<2x128xi32> to vector<2x128xf32>
    %cst_156 = arith.constant dense<0.000000e+00> : vector<128xf32>
    %677 = vector.multi_reduction <add>, %676, %cst_156 [0] : vector<2x128xf32> to vector<128xf32>
    %678 = vector.shape_cast %677 : vector<128xf32> to vector<1x128xf32>
    %cst_157 = arith.constant dense<0.000000e+00> : vector<1xf32>
    %679 = vector.multi_reduction <add>, %678, %cst_157 [1] : vector<1x128xf32> to vector<1xf32>
    %680 = vector.shape_cast %679 : vector<1xf32> to vector<1x1xf32>
    %681 = arith.cmpf oge, %680, %642 : vector<1x1xf32>
    %682 = vector.broadcast %663 : vector<1x1xi32> to vector<2x128xi32>
    %683 = arith.cmpi sgt, %645, %682 : vector<2x128xi32>
    %684 = arith.extui %683 : vector<2x128xi1> to vector<2x128xi32>
    %685 = arith.sitofp %684 : vector<2x128xi32> to vector<2x128xf32>
    %cst_158 = arith.constant dense<0.000000e+00> : vector<128xf32>
    %686 = vector.multi_reduction <add>, %685, %cst_158 [0] : vector<2x128xf32> to vector<128xf32>
    %687 = vector.shape_cast %686 : vector<128xf32> to vector<1x128xf32>
    %cst_159 = arith.constant dense<0.000000e+00> : vector<1xf32>
    %688 = vector.multi_reduction <add>, %687, %cst_159 [1] : vector<1x128xf32> to vector<1xf32>
    %689 = vector.shape_cast %688 : vector<1xf32> to vector<1x1xf32>
    %690 = arith.cmpf oge, %689, %642 : vector<1x1xf32>
    %691 = arith.select %690, %663, %653 : vector<1x1xi1>, vector<1x1xi32>
    %692 = arith.select %681, %657, %646 : vector<1x1xi1>, vector<1x1xi32>
    %693 = arith.select %672, %691, %692 : vector<1x1xi1>, vector<1x1xi32>
    %c1_i32_160 = arith.constant 1 : i32
    %694 = vector.broadcast %c1_i32_160 : i32 to vector<1x1xi32>
    %695 = arith.subi %663, %694 : vector<1x1xi32>
    %696 = arith.select %690, %647, %695 : vector<1x1xi1>, vector<1x1xi32>
    %c1_i32_161 = arith.constant 1 : i32
    %697 = vector.broadcast %c1_i32_161 : i32 to vector<1x1xi32>
    %698 = arith.subi %653, %697 : vector<1x1xi32>
    %c1_i32_162 = arith.constant 1 : i32
    %699 = vector.broadcast %c1_i32_162 : i32 to vector<1x1xi32>
    %700 = arith.subi %657, %699 : vector<1x1xi32>
    %701 = arith.select %681, %698, %700 : vector<1x1xi1>, vector<1x1xi32>
    %702 = arith.select %672, %696, %701 : vector<1x1xi1>, vector<1x1xi32>
    %703 = arith.subi %702, %693 : vector<1x1xi32>
    %c1_i32_163 = arith.constant 1 : i32
    %704 = vector.broadcast %c1_i32_163 : i32 to vector<1x1xi32>
    %705 = arith.addi %703, %704 : vector<1x1xi32>
    %c1_i32_164 = arith.constant 1 : i32
    %706 = vector.broadcast %c1_i32_164 : i32 to vector<1x1xi32>
    %707 = arith.shrsi %705, %706 : vector<1x1xi32>
    %708 = arith.addi %693, %707 : vector<1x1xi32>
    %709 = arith.subi %708, %693 : vector<1x1xi32>
    %c1_i32_165 = arith.constant 1 : i32
    %710 = vector.broadcast %c1_i32_165 : i32 to vector<1x1xi32>
    %711 = arith.shrsi %709, %710 : vector<1x1xi32>
    %712 = arith.addi %693, %711 : vector<1x1xi32>
    %713 = arith.subi %702, %708 : vector<1x1xi32>
    %c1_i32_166 = arith.constant 1 : i32
    %714 = vector.broadcast %c1_i32_166 : i32 to vector<1x1xi32>
    %715 = arith.addi %713, %714 : vector<1x1xi32>
    %c1_i32_167 = arith.constant 1 : i32
    %716 = vector.broadcast %c1_i32_167 : i32 to vector<1x1xi32>
    %717 = arith.shrsi %715, %716 : vector<1x1xi32>
    %718 = arith.addi %708, %717 : vector<1x1xi32>
    %719 = vector.broadcast %708 : vector<1x1xi32> to vector<2x128xi32>
    %720 = arith.cmpi sgt, %645, %719 : vector<2x128xi32>
    %721 = arith.extui %720 : vector<2x128xi1> to vector<2x128xi32>
    %722 = arith.sitofp %721 : vector<2x128xi32> to vector<2x128xf32>
    %cst_168 = arith.constant dense<0.000000e+00> : vector<128xf32>
    %723 = vector.multi_reduction <add>, %722, %cst_168 [0] : vector<2x128xf32> to vector<128xf32>
    %724 = vector.shape_cast %723 : vector<128xf32> to vector<1x128xf32>
    %cst_169 = arith.constant dense<0.000000e+00> : vector<1xf32>
    %725 = vector.multi_reduction <add>, %724, %cst_169 [1] : vector<1x128xf32> to vector<1xf32>
    %726 = vector.shape_cast %725 : vector<1xf32> to vector<1x1xf32>
    %727 = arith.cmpf oge, %726, %642 : vector<1x1xf32>
    %728 = vector.broadcast %712 : vector<1x1xi32> to vector<2x128xi32>
    %729 = arith.cmpi sgt, %645, %728 : vector<2x128xi32>
    %730 = arith.extui %729 : vector<2x128xi1> to vector<2x128xi32>
    %731 = arith.sitofp %730 : vector<2x128xi32> to vector<2x128xf32>
    %cst_170 = arith.constant dense<0.000000e+00> : vector<128xf32>
    %732 = vector.multi_reduction <add>, %731, %cst_170 [0] : vector<2x128xf32> to vector<128xf32>
    %733 = vector.shape_cast %732 : vector<128xf32> to vector<1x128xf32>
    %cst_171 = arith.constant dense<0.000000e+00> : vector<1xf32>
    %734 = vector.multi_reduction <add>, %733, %cst_171 [1] : vector<1x128xf32> to vector<1xf32>
    %735 = vector.shape_cast %734 : vector<1xf32> to vector<1x1xf32>
    %736 = arith.cmpf oge, %735, %642 : vector<1x1xf32>
    %737 = vector.broadcast %718 : vector<1x1xi32> to vector<2x128xi32>
    %738 = arith.cmpi sgt, %645, %737 : vector<2x128xi32>
    %739 = arith.extui %738 : vector<2x128xi1> to vector<2x128xi32>
    %740 = arith.sitofp %739 : vector<2x128xi32> to vector<2x128xf32>
    %cst_172 = arith.constant dense<0.000000e+00> : vector<128xf32>
    %741 = vector.multi_reduction <add>, %740, %cst_172 [0] : vector<2x128xf32> to vector<128xf32>
    %742 = vector.shape_cast %741 : vector<128xf32> to vector<1x128xf32>
    %cst_173 = arith.constant dense<0.000000e+00> : vector<1xf32>
    %743 = vector.multi_reduction <add>, %742, %cst_173 [1] : vector<1x128xf32> to vector<1xf32>
    %744 = vector.shape_cast %743 : vector<1xf32> to vector<1x1xf32>
    %745 = arith.cmpf oge, %744, %642 : vector<1x1xf32>
    %746 = arith.select %745, %718, %708 : vector<1x1xi1>, vector<1x1xi32>
    %747 = arith.select %736, %712, %693 : vector<1x1xi1>, vector<1x1xi32>
    %748 = arith.select %727, %746, %747 : vector<1x1xi1>, vector<1x1xi32>
    %c1_i32_174 = arith.constant 1 : i32
    %749 = vector.broadcast %c1_i32_174 : i32 to vector<1x1xi32>
    %750 = arith.subi %718, %749 : vector<1x1xi32>
    %751 = arith.select %745, %702, %750 : vector<1x1xi1>, vector<1x1xi32>
    %c1_i32_175 = arith.constant 1 : i32
    %752 = vector.broadcast %c1_i32_175 : i32 to vector<1x1xi32>
    %753 = arith.subi %708, %752 : vector<1x1xi32>
    %c1_i32_176 = arith.constant 1 : i32
    %754 = vector.broadcast %c1_i32_176 : i32 to vector<1x1xi32>
    %755 = arith.subi %712, %754 : vector<1x1xi32>
    %756 = arith.select %736, %753, %755 : vector<1x1xi1>, vector<1x1xi32>
    %757 = arith.select %727, %751, %756 : vector<1x1xi1>, vector<1x1xi32>
    %758 = arith.subi %757, %748 : vector<1x1xi32>
    %c1_i32_177 = arith.constant 1 : i32
    %759 = vector.broadcast %c1_i32_177 : i32 to vector<1x1xi32>
    %760 = arith.addi %758, %759 : vector<1x1xi32>
    %c1_i32_178 = arith.constant 1 : i32
    %761 = vector.broadcast %c1_i32_178 : i32 to vector<1x1xi32>
    %762 = arith.shrsi %760, %761 : vector<1x1xi32>
    %763 = arith.addi %748, %762 : vector<1x1xi32>
    %764 = arith.subi %763, %748 : vector<1x1xi32>
    %c1_i32_179 = arith.constant 1 : i32
    %765 = vector.broadcast %c1_i32_179 : i32 to vector<1x1xi32>
    %766 = arith.shrsi %764, %765 : vector<1x1xi32>
    %767 = arith.addi %748, %766 : vector<1x1xi32>
    %768 = arith.subi %757, %763 : vector<1x1xi32>
    %c1_i32_180 = arith.constant 1 : i32
    %769 = vector.broadcast %c1_i32_180 : i32 to vector<1x1xi32>
    %770 = arith.addi %768, %769 : vector<1x1xi32>
    %c1_i32_181 = arith.constant 1 : i32
    %771 = vector.broadcast %c1_i32_181 : i32 to vector<1x1xi32>
    %772 = arith.shrsi %770, %771 : vector<1x1xi32>
    %773 = arith.addi %763, %772 : vector<1x1xi32>
    %774 = vector.broadcast %763 : vector<1x1xi32> to vector<2x128xi32>
    %775 = arith.cmpi sgt, %645, %774 : vector<2x128xi32>
    %776 = arith.extui %775 : vector<2x128xi1> to vector<2x128xi32>
    %777 = arith.sitofp %776 : vector<2x128xi32> to vector<2x128xf32>
    %cst_182 = arith.constant dense<0.000000e+00> : vector<128xf32>
    %778 = vector.multi_reduction <add>, %777, %cst_182 [0] : vector<2x128xf32> to vector<128xf32>
    %779 = vector.shape_cast %778 : vector<128xf32> to vector<1x128xf32>
    %cst_183 = arith.constant dense<0.000000e+00> : vector<1xf32>
    %780 = vector.multi_reduction <add>, %779, %cst_183 [1] : vector<1x128xf32> to vector<1xf32>
    %781 = vector.shape_cast %780 : vector<1xf32> to vector<1x1xf32>
    %782 = arith.cmpf oge, %781, %642 : vector<1x1xf32>
    %783 = vector.broadcast %767 : vector<1x1xi32> to vector<2x128xi32>
    %784 = arith.cmpi sgt, %645, %783 : vector<2x128xi32>
    %785 = arith.extui %784 : vector<2x128xi1> to vector<2x128xi32>
    %786 = arith.sitofp %785 : vector<2x128xi32> to vector<2x128xf32>
    %cst_184 = arith.constant dense<0.000000e+00> : vector<128xf32>
    %787 = vector.multi_reduction <add>, %786, %cst_184 [0] : vector<2x128xf32> to vector<128xf32>
    %788 = vector.shape_cast %787 : vector<128xf32> to vector<1x128xf32>
    %cst_185 = arith.constant dense<0.000000e+00> : vector<1xf32>
    %789 = vector.multi_reduction <add>, %788, %cst_185 [1] : vector<1x128xf32> to vector<1xf32>
    %790 = vector.shape_cast %789 : vector<1xf32> to vector<1x1xf32>
    %791 = arith.cmpf oge, %790, %642 : vector<1x1xf32>
    %792 = vector.broadcast %773 : vector<1x1xi32> to vector<2x128xi32>
    %793 = arith.cmpi sgt, %645, %792 : vector<2x128xi32>
    %794 = arith.extui %793 : vector<2x128xi1> to vector<2x128xi32>
    %795 = arith.sitofp %794 : vector<2x128xi32> to vector<2x128xf32>
    %cst_186 = arith.constant dense<0.000000e+00> : vector<128xf32>
    %796 = vector.multi_reduction <add>, %795, %cst_186 [0] : vector<2x128xf32> to vector<128xf32>
    %797 = vector.shape_cast %796 : vector<128xf32> to vector<1x128xf32>
    %cst_187 = arith.constant dense<0.000000e+00> : vector<1xf32>
    %798 = vector.multi_reduction <add>, %797, %cst_187 [1] : vector<1x128xf32> to vector<1xf32>
    %799 = vector.shape_cast %798 : vector<1xf32> to vector<1x1xf32>
    %800 = arith.cmpf oge, %799, %642 : vector<1x1xf32>
    %801 = arith.select %800, %773, %763 : vector<1x1xi1>, vector<1x1xi32>
    %802 = arith.select %791, %767, %748 : vector<1x1xi1>, vector<1x1xi32>
    %803 = arith.select %782, %801, %802 : vector<1x1xi1>, vector<1x1xi32>
    %c1_i32_188 = arith.constant 1 : i32
    %804 = vector.broadcast %c1_i32_188 : i32 to vector<1x1xi32>
    %805 = arith.subi %773, %804 : vector<1x1xi32>
    %806 = arith.select %800, %757, %805 : vector<1x1xi1>, vector<1x1xi32>
    %c1_i32_189 = arith.constant 1 : i32
    %807 = vector.broadcast %c1_i32_189 : i32 to vector<1x1xi32>
    %808 = arith.subi %763, %807 : vector<1x1xi32>
    %c1_i32_190 = arith.constant 1 : i32
    %809 = vector.broadcast %c1_i32_190 : i32 to vector<1x1xi32>
    %810 = arith.subi %767, %809 : vector<1x1xi32>
    %811 = arith.select %791, %808, %810 : vector<1x1xi1>, vector<1x1xi32>
    %812 = arith.select %782, %806, %811 : vector<1x1xi1>, vector<1x1xi32>
    %813 = arith.subi %812, %803 : vector<1x1xi32>
    %c1_i32_191 = arith.constant 1 : i32
    %814 = vector.broadcast %c1_i32_191 : i32 to vector<1x1xi32>
    %815 = arith.addi %813, %814 : vector<1x1xi32>
    %c1_i32_192 = arith.constant 1 : i32
    %816 = vector.broadcast %c1_i32_192 : i32 to vector<1x1xi32>
    %817 = arith.shrsi %815, %816 : vector<1x1xi32>
    %818 = arith.addi %803, %817 : vector<1x1xi32>
    %819 = arith.subi %818, %803 : vector<1x1xi32>
    %c1_i32_193 = arith.constant 1 : i32
    %820 = vector.broadcast %c1_i32_193 : i32 to vector<1x1xi32>
    %821 = arith.shrsi %819, %820 : vector<1x1xi32>
    %822 = arith.addi %803, %821 : vector<1x1xi32>
    %823 = arith.subi %812, %818 : vector<1x1xi32>
    %c1_i32_194 = arith.constant 1 : i32
    %824 = vector.broadcast %c1_i32_194 : i32 to vector<1x1xi32>
    %825 = arith.addi %823, %824 : vector<1x1xi32>
    %c1_i32_195 = arith.constant 1 : i32
    %826 = vector.broadcast %c1_i32_195 : i32 to vector<1x1xi32>
    %827 = arith.shrsi %825, %826 : vector<1x1xi32>
    %828 = arith.addi %818, %827 : vector<1x1xi32>
    %829 = vector.broadcast %818 : vector<1x1xi32> to vector<2x128xi32>
    %830 = arith.cmpi sgt, %645, %829 : vector<2x128xi32>
    %831 = arith.extui %830 : vector<2x128xi1> to vector<2x128xi32>
    %832 = arith.sitofp %831 : vector<2x128xi32> to vector<2x128xf32>
    %cst_196 = arith.constant dense<0.000000e+00> : vector<128xf32>
    %833 = vector.multi_reduction <add>, %832, %cst_196 [0] : vector<2x128xf32> to vector<128xf32>
    %834 = vector.shape_cast %833 : vector<128xf32> to vector<1x128xf32>
    %cst_197 = arith.constant dense<0.000000e+00> : vector<1xf32>
    %835 = vector.multi_reduction <add>, %834, %cst_197 [1] : vector<1x128xf32> to vector<1xf32>
    %836 = vector.shape_cast %835 : vector<1xf32> to vector<1x1xf32>
    %837 = arith.cmpf oge, %836, %642 : vector<1x1xf32>
    %838 = vector.broadcast %822 : vector<1x1xi32> to vector<2x128xi32>
    %839 = arith.cmpi sgt, %645, %838 : vector<2x128xi32>
    %840 = arith.extui %839 : vector<2x128xi1> to vector<2x128xi32>
    %841 = arith.sitofp %840 : vector<2x128xi32> to vector<2x128xf32>
    %cst_198 = arith.constant dense<0.000000e+00> : vector<128xf32>
    %842 = vector.multi_reduction <add>, %841, %cst_198 [0] : vector<2x128xf32> to vector<128xf32>
    %843 = vector.shape_cast %842 : vector<128xf32> to vector<1x128xf32>
    %cst_199 = arith.constant dense<0.000000e+00> : vector<1xf32>
    %844 = vector.multi_reduction <add>, %843, %cst_199 [1] : vector<1x128xf32> to vector<1xf32>
    %845 = vector.shape_cast %844 : vector<1xf32> to vector<1x1xf32>
    %846 = arith.cmpf oge, %845, %642 : vector<1x1xf32>
    %847 = vector.broadcast %828 : vector<1x1xi32> to vector<2x128xi32>
    %848 = arith.cmpi sgt, %645, %847 : vector<2x128xi32>
    %849 = arith.extui %848 : vector<2x128xi1> to vector<2x128xi32>
    %850 = arith.sitofp %849 : vector<2x128xi32> to vector<2x128xf32>
    %cst_200 = arith.constant dense<0.000000e+00> : vector<128xf32>
    %851 = vector.multi_reduction <add>, %850, %cst_200 [0] : vector<2x128xf32> to vector<128xf32>
    %852 = vector.shape_cast %851 : vector<128xf32> to vector<1x128xf32>
    %cst_201 = arith.constant dense<0.000000e+00> : vector<1xf32>
    %853 = vector.multi_reduction <add>, %852, %cst_201 [1] : vector<1x128xf32> to vector<1xf32>
    %854 = vector.shape_cast %853 : vector<1xf32> to vector<1x1xf32>
    %855 = arith.cmpf oge, %854, %642 : vector<1x1xf32>
    %856 = arith.select %855, %828, %818 : vector<1x1xi1>, vector<1x1xi32>
    %857 = arith.select %846, %822, %803 : vector<1x1xi1>, vector<1x1xi32>
    %858 = arith.select %837, %856, %857 : vector<1x1xi1>, vector<1x1xi32>
    %c1_i32_202 = arith.constant 1 : i32
    %859 = vector.broadcast %c1_i32_202 : i32 to vector<1x1xi32>
    %860 = arith.subi %828, %859 : vector<1x1xi32>
    %861 = arith.select %855, %812, %860 : vector<1x1xi1>, vector<1x1xi32>
    %c1_i32_203 = arith.constant 1 : i32
    %862 = vector.broadcast %c1_i32_203 : i32 to vector<1x1xi32>
    %863 = arith.subi %818, %862 : vector<1x1xi32>
    %c1_i32_204 = arith.constant 1 : i32
    %864 = vector.broadcast %c1_i32_204 : i32 to vector<1x1xi32>
    %865 = arith.subi %822, %864 : vector<1x1xi32>
    %866 = arith.select %846, %863, %865 : vector<1x1xi1>, vector<1x1xi32>
    %867 = arith.select %837, %861, %866 : vector<1x1xi1>, vector<1x1xi32>
    %868 = arith.subi %867, %858 : vector<1x1xi32>
    %c1_i32_205 = arith.constant 1 : i32
    %869 = vector.broadcast %c1_i32_205 : i32 to vector<1x1xi32>
    %870 = arith.addi %868, %869 : vector<1x1xi32>
    %c1_i32_206 = arith.constant 1 : i32
    %871 = vector.broadcast %c1_i32_206 : i32 to vector<1x1xi32>
    %872 = arith.shrsi %870, %871 : vector<1x1xi32>
    %873 = arith.addi %858, %872 : vector<1x1xi32>
    %874 = arith.subi %873, %858 : vector<1x1xi32>
    %c1_i32_207 = arith.constant 1 : i32
    %875 = vector.broadcast %c1_i32_207 : i32 to vector<1x1xi32>
    %876 = arith.shrsi %874, %875 : vector<1x1xi32>
    %877 = arith.addi %858, %876 : vector<1x1xi32>
    %878 = arith.subi %867, %873 : vector<1x1xi32>
    %c1_i32_208 = arith.constant 1 : i32
    %879 = vector.broadcast %c1_i32_208 : i32 to vector<1x1xi32>
    %880 = arith.addi %878, %879 : vector<1x1xi32>
    %c1_i32_209 = arith.constant 1 : i32
    %881 = vector.broadcast %c1_i32_209 : i32 to vector<1x1xi32>
    %882 = arith.shrsi %880, %881 : vector<1x1xi32>
    %883 = arith.addi %873, %882 : vector<1x1xi32>
    %884 = vector.broadcast %873 : vector<1x1xi32> to vector<2x128xi32>
    %885 = arith.cmpi sgt, %645, %884 : vector<2x128xi32>
    %886 = arith.extui %885 : vector<2x128xi1> to vector<2x128xi32>
    %887 = arith.sitofp %886 : vector<2x128xi32> to vector<2x128xf32>
    %cst_210 = arith.constant dense<0.000000e+00> : vector<128xf32>
    %888 = vector.multi_reduction <add>, %887, %cst_210 [0] : vector<2x128xf32> to vector<128xf32>
    %889 = vector.shape_cast %888 : vector<128xf32> to vector<1x128xf32>
    %cst_211 = arith.constant dense<0.000000e+00> : vector<1xf32>
    %890 = vector.multi_reduction <add>, %889, %cst_211 [1] : vector<1x128xf32> to vector<1xf32>
    %891 = vector.shape_cast %890 : vector<1xf32> to vector<1x1xf32>
    %892 = arith.cmpf oge, %891, %642 : vector<1x1xf32>
    %893 = vector.broadcast %877 : vector<1x1xi32> to vector<2x128xi32>
    %894 = arith.cmpi sgt, %645, %893 : vector<2x128xi32>
    %895 = arith.extui %894 : vector<2x128xi1> to vector<2x128xi32>
    %896 = arith.sitofp %895 : vector<2x128xi32> to vector<2x128xf32>
    %cst_212 = arith.constant dense<0.000000e+00> : vector<128xf32>
    %897 = vector.multi_reduction <add>, %896, %cst_212 [0] : vector<2x128xf32> to vector<128xf32>
    %898 = vector.shape_cast %897 : vector<128xf32> to vector<1x128xf32>
    %cst_213 = arith.constant dense<0.000000e+00> : vector<1xf32>
    %899 = vector.multi_reduction <add>, %898, %cst_213 [1] : vector<1x128xf32> to vector<1xf32>
    %900 = vector.shape_cast %899 : vector<1xf32> to vector<1x1xf32>
    %901 = arith.cmpf oge, %900, %642 : vector<1x1xf32>
    %902 = vector.broadcast %883 : vector<1x1xi32> to vector<2x128xi32>
    %903 = arith.cmpi sgt, %645, %902 : vector<2x128xi32>
    %904 = arith.extui %903 : vector<2x128xi1> to vector<2x128xi32>
    %905 = arith.sitofp %904 : vector<2x128xi32> to vector<2x128xf32>
    %cst_214 = arith.constant dense<0.000000e+00> : vector<128xf32>
    %906 = vector.multi_reduction <add>, %905, %cst_214 [0] : vector<2x128xf32> to vector<128xf32>
    %907 = vector.shape_cast %906 : vector<128xf32> to vector<1x128xf32>
    %cst_215 = arith.constant dense<0.000000e+00> : vector<1xf32>
    %908 = vector.multi_reduction <add>, %907, %cst_215 [1] : vector<1x128xf32> to vector<1xf32>
    %909 = vector.shape_cast %908 : vector<1xf32> to vector<1x1xf32>
    %910 = arith.cmpf oge, %909, %642 : vector<1x1xf32>
    %911 = arith.select %910, %883, %873 : vector<1x1xi1>, vector<1x1xi32>
    %912 = arith.select %901, %877, %858 : vector<1x1xi1>, vector<1x1xi32>
    %913 = arith.select %892, %911, %912 : vector<1x1xi1>, vector<1x1xi32>
    %c1_i32_216 = arith.constant 1 : i32
    %914 = vector.broadcast %c1_i32_216 : i32 to vector<1x1xi32>
    %915 = arith.subi %883, %914 : vector<1x1xi32>
    %916 = arith.select %910, %867, %915 : vector<1x1xi1>, vector<1x1xi32>
    %c1_i32_217 = arith.constant 1 : i32
    %917 = vector.broadcast %c1_i32_217 : i32 to vector<1x1xi32>
    %918 = arith.subi %873, %917 : vector<1x1xi32>
    %c1_i32_218 = arith.constant 1 : i32
    %919 = vector.broadcast %c1_i32_218 : i32 to vector<1x1xi32>
    %920 = arith.subi %877, %919 : vector<1x1xi32>
    %921 = arith.select %901, %918, %920 : vector<1x1xi1>, vector<1x1xi32>
    %922 = arith.select %892, %916, %921 : vector<1x1xi1>, vector<1x1xi32>
    %923 = arith.subi %922, %913 : vector<1x1xi32>
    %c1_i32_219 = arith.constant 1 : i32
    %924 = vector.broadcast %c1_i32_219 : i32 to vector<1x1xi32>
    %925 = arith.addi %923, %924 : vector<1x1xi32>
    %c1_i32_220 = arith.constant 1 : i32
    %926 = vector.broadcast %c1_i32_220 : i32 to vector<1x1xi32>
    %927 = arith.shrsi %925, %926 : vector<1x1xi32>
    %928 = arith.addi %913, %927 : vector<1x1xi32>
    %929 = arith.subi %928, %913 : vector<1x1xi32>
    %c1_i32_221 = arith.constant 1 : i32
    %930 = vector.broadcast %c1_i32_221 : i32 to vector<1x1xi32>
    %931 = arith.shrsi %929, %930 : vector<1x1xi32>
    %932 = arith.addi %913, %931 : vector<1x1xi32>
    %933 = arith.subi %922, %928 : vector<1x1xi32>
    %c1_i32_222 = arith.constant 1 : i32
    %934 = vector.broadcast %c1_i32_222 : i32 to vector<1x1xi32>
    %935 = arith.addi %933, %934 : vector<1x1xi32>
    %c1_i32_223 = arith.constant 1 : i32
    %936 = vector.broadcast %c1_i32_223 : i32 to vector<1x1xi32>
    %937 = arith.shrsi %935, %936 : vector<1x1xi32>
    %938 = arith.addi %928, %937 : vector<1x1xi32>
    %939 = vector.broadcast %928 : vector<1x1xi32> to vector<2x128xi32>
    %940 = arith.cmpi sgt, %645, %939 : vector<2x128xi32>
    %941 = arith.extui %940 : vector<2x128xi1> to vector<2x128xi32>
    %942 = arith.sitofp %941 : vector<2x128xi32> to vector<2x128xf32>
    %cst_224 = arith.constant dense<0.000000e+00> : vector<128xf32>
    %943 = vector.multi_reduction <add>, %942, %cst_224 [0] : vector<2x128xf32> to vector<128xf32>
    %944 = vector.shape_cast %943 : vector<128xf32> to vector<1x128xf32>
    %cst_225 = arith.constant dense<0.000000e+00> : vector<1xf32>
    %945 = vector.multi_reduction <add>, %944, %cst_225 [1] : vector<1x128xf32> to vector<1xf32>
    %946 = vector.shape_cast %945 : vector<1xf32> to vector<1x1xf32>
    %947 = arith.cmpf oge, %946, %642 : vector<1x1xf32>
    %948 = vector.broadcast %932 : vector<1x1xi32> to vector<2x128xi32>
    %949 = arith.cmpi sgt, %645, %948 : vector<2x128xi32>
    %950 = arith.extui %949 : vector<2x128xi1> to vector<2x128xi32>
    %951 = arith.sitofp %950 : vector<2x128xi32> to vector<2x128xf32>
    %cst_226 = arith.constant dense<0.000000e+00> : vector<128xf32>
    %952 = vector.multi_reduction <add>, %951, %cst_226 [0] : vector<2x128xf32> to vector<128xf32>
    %953 = vector.shape_cast %952 : vector<128xf32> to vector<1x128xf32>
    %cst_227 = arith.constant dense<0.000000e+00> : vector<1xf32>
    %954 = vector.multi_reduction <add>, %953, %cst_227 [1] : vector<1x128xf32> to vector<1xf32>
    %955 = vector.shape_cast %954 : vector<1xf32> to vector<1x1xf32>
    %956 = arith.cmpf oge, %955, %642 : vector<1x1xf32>
    %957 = vector.broadcast %938 : vector<1x1xi32> to vector<2x128xi32>
    %958 = arith.cmpi sgt, %645, %957 : vector<2x128xi32>
    %959 = arith.extui %958 : vector<2x128xi1> to vector<2x128xi32>
    %960 = arith.sitofp %959 : vector<2x128xi32> to vector<2x128xf32>
    %cst_228 = arith.constant dense<0.000000e+00> : vector<128xf32>
    %961 = vector.multi_reduction <add>, %960, %cst_228 [0] : vector<2x128xf32> to vector<128xf32>
    %962 = vector.shape_cast %961 : vector<128xf32> to vector<1x128xf32>
    %cst_229 = arith.constant dense<0.000000e+00> : vector<1xf32>
    %963 = vector.multi_reduction <add>, %962, %cst_229 [1] : vector<1x128xf32> to vector<1xf32>
    %964 = vector.shape_cast %963 : vector<1xf32> to vector<1x1xf32>
    %965 = arith.cmpf oge, %964, %642 : vector<1x1xf32>
    %966 = arith.select %965, %938, %928 : vector<1x1xi1>, vector<1x1xi32>
    %967 = arith.select %956, %932, %913 : vector<1x1xi1>, vector<1x1xi32>
    %968 = arith.select %947, %966, %967 : vector<1x1xi1>, vector<1x1xi32>
    %c1_i32_230 = arith.constant 1 : i32
    %969 = vector.broadcast %c1_i32_230 : i32 to vector<1x1xi32>
    %970 = arith.subi %938, %969 : vector<1x1xi32>
    %971 = arith.select %965, %922, %970 : vector<1x1xi1>, vector<1x1xi32>
    %c1_i32_231 = arith.constant 1 : i32
    %972 = vector.broadcast %c1_i32_231 : i32 to vector<1x1xi32>
    %973 = arith.subi %928, %972 : vector<1x1xi32>
    %c1_i32_232 = arith.constant 1 : i32
    %974 = vector.broadcast %c1_i32_232 : i32 to vector<1x1xi32>
    %975 = arith.subi %932, %974 : vector<1x1xi32>
    %976 = arith.select %956, %973, %975 : vector<1x1xi1>, vector<1x1xi32>
    %977 = arith.select %947, %971, %976 : vector<1x1xi1>, vector<1x1xi32>
    %978 = arith.subi %977, %968 : vector<1x1xi32>
    %c1_i32_233 = arith.constant 1 : i32
    %979 = vector.broadcast %c1_i32_233 : i32 to vector<1x1xi32>
    %980 = arith.addi %978, %979 : vector<1x1xi32>
    %c1_i32_234 = arith.constant 1 : i32
    %981 = vector.broadcast %c1_i32_234 : i32 to vector<1x1xi32>
    %982 = arith.shrsi %980, %981 : vector<1x1xi32>
    %983 = arith.addi %968, %982 : vector<1x1xi32>
    %984 = arith.subi %983, %968 : vector<1x1xi32>
    %c1_i32_235 = arith.constant 1 : i32
    %985 = vector.broadcast %c1_i32_235 : i32 to vector<1x1xi32>
    %986 = arith.shrsi %984, %985 : vector<1x1xi32>
    %987 = arith.addi %968, %986 : vector<1x1xi32>
    %988 = arith.subi %977, %983 : vector<1x1xi32>
    %c1_i32_236 = arith.constant 1 : i32
    %989 = vector.broadcast %c1_i32_236 : i32 to vector<1x1xi32>
    %990 = arith.addi %988, %989 : vector<1x1xi32>
    %c1_i32_237 = arith.constant 1 : i32
    %991 = vector.broadcast %c1_i32_237 : i32 to vector<1x1xi32>
    %992 = arith.shrsi %990, %991 : vector<1x1xi32>
    %993 = arith.addi %983, %992 : vector<1x1xi32>
    %994 = vector.broadcast %983 : vector<1x1xi32> to vector<2x128xi32>
    %995 = arith.cmpi sgt, %645, %994 : vector<2x128xi32>
    %996 = arith.extui %995 : vector<2x128xi1> to vector<2x128xi32>
    %997 = arith.sitofp %996 : vector<2x128xi32> to vector<2x128xf32>
    %cst_238 = arith.constant dense<0.000000e+00> : vector<128xf32>
    %998 = vector.multi_reduction <add>, %997, %cst_238 [0] : vector<2x128xf32> to vector<128xf32>
    %999 = vector.shape_cast %998 : vector<128xf32> to vector<1x128xf32>
    %cst_239 = arith.constant dense<0.000000e+00> : vector<1xf32>
    %1000 = vector.multi_reduction <add>, %999, %cst_239 [1] : vector<1x128xf32> to vector<1xf32>
    %1001 = vector.shape_cast %1000 : vector<1xf32> to vector<1x1xf32>
    %1002 = arith.cmpf oge, %1001, %642 : vector<1x1xf32>
    %1003 = vector.broadcast %987 : vector<1x1xi32> to vector<2x128xi32>
    %1004 = arith.cmpi sgt, %645, %1003 : vector<2x128xi32>
    %1005 = arith.extui %1004 : vector<2x128xi1> to vector<2x128xi32>
    %1006 = arith.sitofp %1005 : vector<2x128xi32> to vector<2x128xf32>
    %cst_240 = arith.constant dense<0.000000e+00> : vector<128xf32>
    %1007 = vector.multi_reduction <add>, %1006, %cst_240 [0] : vector<2x128xf32> to vector<128xf32>
    %1008 = vector.shape_cast %1007 : vector<128xf32> to vector<1x128xf32>
    %cst_241 = arith.constant dense<0.000000e+00> : vector<1xf32>
    %1009 = vector.multi_reduction <add>, %1008, %cst_241 [1] : vector<1x128xf32> to vector<1xf32>
    %1010 = vector.shape_cast %1009 : vector<1xf32> to vector<1x1xf32>
    %1011 = arith.cmpf oge, %1010, %642 : vector<1x1xf32>
    %1012 = vector.broadcast %993 : vector<1x1xi32> to vector<2x128xi32>
    %1013 = arith.cmpi sgt, %645, %1012 : vector<2x128xi32>
    %1014 = arith.extui %1013 : vector<2x128xi1> to vector<2x128xi32>
    %1015 = arith.sitofp %1014 : vector<2x128xi32> to vector<2x128xf32>
    %cst_242 = arith.constant dense<0.000000e+00> : vector<128xf32>
    %1016 = vector.multi_reduction <add>, %1015, %cst_242 [0] : vector<2x128xf32> to vector<128xf32>
    %1017 = vector.shape_cast %1016 : vector<128xf32> to vector<1x128xf32>
    %cst_243 = arith.constant dense<0.000000e+00> : vector<1xf32>
    %1018 = vector.multi_reduction <add>, %1017, %cst_243 [1] : vector<1x128xf32> to vector<1xf32>
    %1019 = vector.shape_cast %1018 : vector<1xf32> to vector<1x1xf32>
    %1020 = arith.cmpf oge, %1019, %642 : vector<1x1xf32>
    %1021 = arith.select %1020, %993, %983 : vector<1x1xi1>, vector<1x1xi32>
    %1022 = arith.select %1011, %987, %968 : vector<1x1xi1>, vector<1x1xi32>
    %1023 = arith.select %1002, %1021, %1022 : vector<1x1xi1>, vector<1x1xi32>
    %c1_i32_244 = arith.constant 1 : i32
    %1024 = vector.broadcast %c1_i32_244 : i32 to vector<1x1xi32>
    %1025 = arith.subi %993, %1024 : vector<1x1xi32>
    %1026 = arith.select %1020, %977, %1025 : vector<1x1xi1>, vector<1x1xi32>
    %c1_i32_245 = arith.constant 1 : i32
    %1027 = vector.broadcast %c1_i32_245 : i32 to vector<1x1xi32>
    %1028 = arith.subi %983, %1027 : vector<1x1xi32>
    %c1_i32_246 = arith.constant 1 : i32
    %1029 = vector.broadcast %c1_i32_246 : i32 to vector<1x1xi32>
    %1030 = arith.subi %987, %1029 : vector<1x1xi32>
    %1031 = arith.select %1011, %1028, %1030 : vector<1x1xi1>, vector<1x1xi32>
    %1032 = arith.select %1002, %1026, %1031 : vector<1x1xi1>, vector<1x1xi32>
    %1033 = arith.subi %1032, %1023 : vector<1x1xi32>
    %c1_i32_247 = arith.constant 1 : i32
    %1034 = vector.broadcast %c1_i32_247 : i32 to vector<1x1xi32>
    %1035 = arith.addi %1033, %1034 : vector<1x1xi32>
    %c1_i32_248 = arith.constant 1 : i32
    %1036 = vector.broadcast %c1_i32_248 : i32 to vector<1x1xi32>
    %1037 = arith.shrsi %1035, %1036 : vector<1x1xi32>
    %1038 = arith.addi %1023, %1037 : vector<1x1xi32>
    %1039 = arith.subi %1038, %1023 : vector<1x1xi32>
    %c1_i32_249 = arith.constant 1 : i32
    %1040 = vector.broadcast %c1_i32_249 : i32 to vector<1x1xi32>
    %1041 = arith.shrsi %1039, %1040 : vector<1x1xi32>
    %1042 = arith.addi %1023, %1041 : vector<1x1xi32>
    %1043 = arith.subi %1032, %1038 : vector<1x1xi32>
    %c1_i32_250 = arith.constant 1 : i32
    %1044 = vector.broadcast %c1_i32_250 : i32 to vector<1x1xi32>
    %1045 = arith.addi %1043, %1044 : vector<1x1xi32>
    %c1_i32_251 = arith.constant 1 : i32
    %1046 = vector.broadcast %c1_i32_251 : i32 to vector<1x1xi32>
    %1047 = arith.shrsi %1045, %1046 : vector<1x1xi32>
    %1048 = arith.addi %1038, %1047 : vector<1x1xi32>
    %1049 = vector.broadcast %1038 : vector<1x1xi32> to vector<2x128xi32>
    %1050 = arith.cmpi sgt, %645, %1049 : vector<2x128xi32>
    %1051 = arith.extui %1050 : vector<2x128xi1> to vector<2x128xi32>
    %1052 = arith.sitofp %1051 : vector<2x128xi32> to vector<2x128xf32>
    %cst_252 = arith.constant dense<0.000000e+00> : vector<128xf32>
    %1053 = vector.multi_reduction <add>, %1052, %cst_252 [0] : vector<2x128xf32> to vector<128xf32>
    %1054 = vector.shape_cast %1053 : vector<128xf32> to vector<1x128xf32>
    %cst_253 = arith.constant dense<0.000000e+00> : vector<1xf32>
    %1055 = vector.multi_reduction <add>, %1054, %cst_253 [1] : vector<1x128xf32> to vector<1xf32>
    %1056 = vector.shape_cast %1055 : vector<1xf32> to vector<1x1xf32>
    %1057 = arith.cmpf oge, %1056, %642 : vector<1x1xf32>
    %1058 = vector.broadcast %1042 : vector<1x1xi32> to vector<2x128xi32>
    %1059 = arith.cmpi sgt, %645, %1058 : vector<2x128xi32>
    %1060 = arith.extui %1059 : vector<2x128xi1> to vector<2x128xi32>
    %1061 = arith.sitofp %1060 : vector<2x128xi32> to vector<2x128xf32>
    %cst_254 = arith.constant dense<0.000000e+00> : vector<128xf32>
    %1062 = vector.multi_reduction <add>, %1061, %cst_254 [0] : vector<2x128xf32> to vector<128xf32>
    %1063 = vector.shape_cast %1062 : vector<128xf32> to vector<1x128xf32>
    %cst_255 = arith.constant dense<0.000000e+00> : vector<1xf32>
    %1064 = vector.multi_reduction <add>, %1063, %cst_255 [1] : vector<1x128xf32> to vector<1xf32>
    %1065 = vector.shape_cast %1064 : vector<1xf32> to vector<1x1xf32>
    %1066 = arith.cmpf oge, %1065, %642 : vector<1x1xf32>
    %1067 = vector.broadcast %1048 : vector<1x1xi32> to vector<2x128xi32>
    %1068 = arith.cmpi sgt, %645, %1067 : vector<2x128xi32>
    %1069 = arith.extui %1068 : vector<2x128xi1> to vector<2x128xi32>
    %1070 = arith.sitofp %1069 : vector<2x128xi32> to vector<2x128xf32>
    %cst_256 = arith.constant dense<0.000000e+00> : vector<128xf32>
    %1071 = vector.multi_reduction <add>, %1070, %cst_256 [0] : vector<2x128xf32> to vector<128xf32>
    %1072 = vector.shape_cast %1071 : vector<128xf32> to vector<1x128xf32>
    %cst_257 = arith.constant dense<0.000000e+00> : vector<1xf32>
    %1073 = vector.multi_reduction <add>, %1072, %cst_257 [1] : vector<1x128xf32> to vector<1xf32>
    %1074 = vector.shape_cast %1073 : vector<1xf32> to vector<1x1xf32>
    %1075 = arith.cmpf oge, %1074, %642 : vector<1x1xf32>
    %1076 = arith.select %1075, %1048, %1038 : vector<1x1xi1>, vector<1x1xi32>
    %1077 = arith.select %1066, %1042, %1023 : vector<1x1xi1>, vector<1x1xi32>
    %1078 = arith.select %1057, %1076, %1077 : vector<1x1xi1>, vector<1x1xi32>
    %c1_i32_258 = arith.constant 1 : i32
    %1079 = vector.broadcast %c1_i32_258 : i32 to vector<1x1xi32>
    %1080 = arith.subi %1048, %1079 : vector<1x1xi32>
    %1081 = arith.select %1075, %1032, %1080 : vector<1x1xi1>, vector<1x1xi32>
    %c1_i32_259 = arith.constant 1 : i32
    %1082 = vector.broadcast %c1_i32_259 : i32 to vector<1x1xi32>
    %1083 = arith.subi %1038, %1082 : vector<1x1xi32>
    %c1_i32_260 = arith.constant 1 : i32
    %1084 = vector.broadcast %c1_i32_260 : i32 to vector<1x1xi32>
    %1085 = arith.subi %1042, %1084 : vector<1x1xi32>
    %1086 = arith.select %1066, %1083, %1085 : vector<1x1xi1>, vector<1x1xi32>
    %1087 = arith.select %1057, %1081, %1086 : vector<1x1xi1>, vector<1x1xi32>
    %1088 = arith.subi %1087, %1078 : vector<1x1xi32>
    %c1_i32_261 = arith.constant 1 : i32
    %1089 = vector.broadcast %c1_i32_261 : i32 to vector<1x1xi32>
    %1090 = arith.addi %1088, %1089 : vector<1x1xi32>
    %c1_i32_262 = arith.constant 1 : i32
    %1091 = vector.broadcast %c1_i32_262 : i32 to vector<1x1xi32>
    %1092 = arith.shrsi %1090, %1091 : vector<1x1xi32>
    %1093 = arith.addi %1078, %1092 : vector<1x1xi32>
    %1094 = arith.subi %1093, %1078 : vector<1x1xi32>
    %c1_i32_263 = arith.constant 1 : i32
    %1095 = vector.broadcast %c1_i32_263 : i32 to vector<1x1xi32>
    %1096 = arith.shrsi %1094, %1095 : vector<1x1xi32>
    %1097 = arith.addi %1078, %1096 : vector<1x1xi32>
    %1098 = arith.subi %1087, %1093 : vector<1x1xi32>
    %c1_i32_264 = arith.constant 1 : i32
    %1099 = vector.broadcast %c1_i32_264 : i32 to vector<1x1xi32>
    %1100 = arith.addi %1098, %1099 : vector<1x1xi32>
    %c1_i32_265 = arith.constant 1 : i32
    %1101 = vector.broadcast %c1_i32_265 : i32 to vector<1x1xi32>
    %1102 = arith.shrsi %1100, %1101 : vector<1x1xi32>
    %1103 = arith.addi %1093, %1102 : vector<1x1xi32>
    %1104 = vector.broadcast %1093 : vector<1x1xi32> to vector<2x128xi32>
    %1105 = arith.cmpi sgt, %645, %1104 : vector<2x128xi32>
    %1106 = arith.extui %1105 : vector<2x128xi1> to vector<2x128xi32>
    %1107 = arith.sitofp %1106 : vector<2x128xi32> to vector<2x128xf32>
    %cst_266 = arith.constant dense<0.000000e+00> : vector<128xf32>
    %1108 = vector.multi_reduction <add>, %1107, %cst_266 [0] : vector<2x128xf32> to vector<128xf32>
    %1109 = vector.shape_cast %1108 : vector<128xf32> to vector<1x128xf32>
    %cst_267 = arith.constant dense<0.000000e+00> : vector<1xf32>
    %1110 = vector.multi_reduction <add>, %1109, %cst_267 [1] : vector<1x128xf32> to vector<1xf32>
    %1111 = vector.shape_cast %1110 : vector<1xf32> to vector<1x1xf32>
    %1112 = arith.cmpf oge, %1111, %642 : vector<1x1xf32>
    %1113 = vector.broadcast %1097 : vector<1x1xi32> to vector<2x128xi32>
    %1114 = arith.cmpi sgt, %645, %1113 : vector<2x128xi32>
    %1115 = arith.extui %1114 : vector<2x128xi1> to vector<2x128xi32>
    %1116 = arith.sitofp %1115 : vector<2x128xi32> to vector<2x128xf32>
    %cst_268 = arith.constant dense<0.000000e+00> : vector<128xf32>
    %1117 = vector.multi_reduction <add>, %1116, %cst_268 [0] : vector<2x128xf32> to vector<128xf32>
    %1118 = vector.shape_cast %1117 : vector<128xf32> to vector<1x128xf32>
    %cst_269 = arith.constant dense<0.000000e+00> : vector<1xf32>
    %1119 = vector.multi_reduction <add>, %1118, %cst_269 [1] : vector<1x128xf32> to vector<1xf32>
    %1120 = vector.shape_cast %1119 : vector<1xf32> to vector<1x1xf32>
    %1121 = arith.cmpf oge, %1120, %642 : vector<1x1xf32>
    %1122 = vector.broadcast %1103 : vector<1x1xi32> to vector<2x128xi32>
    %1123 = arith.cmpi sgt, %645, %1122 : vector<2x128xi32>
    %1124 = arith.extui %1123 : vector<2x128xi1> to vector<2x128xi32>
    %1125 = arith.sitofp %1124 : vector<2x128xi32> to vector<2x128xf32>
    %cst_270 = arith.constant dense<0.000000e+00> : vector<128xf32>
    %1126 = vector.multi_reduction <add>, %1125, %cst_270 [0] : vector<2x128xf32> to vector<128xf32>
    %1127 = vector.shape_cast %1126 : vector<128xf32> to vector<1x128xf32>
    %cst_271 = arith.constant dense<0.000000e+00> : vector<1xf32>
    %1128 = vector.multi_reduction <add>, %1127, %cst_271 [1] : vector<1x128xf32> to vector<1xf32>
    %1129 = vector.shape_cast %1128 : vector<1xf32> to vector<1x1xf32>
    %1130 = arith.cmpf oge, %1129, %642 : vector<1x1xf32>
    %1131 = arith.select %1130, %1103, %1093 : vector<1x1xi1>, vector<1x1xi32>
    %1132 = arith.select %1121, %1097, %1078 : vector<1x1xi1>, vector<1x1xi32>
    %1133 = arith.select %1112, %1131, %1132 : vector<1x1xi1>, vector<1x1xi32>
    %c1_i32_272 = arith.constant 1 : i32
    %1134 = vector.broadcast %c1_i32_272 : i32 to vector<1x1xi32>
    %1135 = arith.subi %1103, %1134 : vector<1x1xi32>
    %1136 = arith.select %1130, %1087, %1135 : vector<1x1xi1>, vector<1x1xi32>
    %c1_i32_273 = arith.constant 1 : i32
    %1137 = vector.broadcast %c1_i32_273 : i32 to vector<1x1xi32>
    %1138 = arith.subi %1093, %1137 : vector<1x1xi32>
    %c1_i32_274 = arith.constant 1 : i32
    %1139 = vector.broadcast %c1_i32_274 : i32 to vector<1x1xi32>
    %1140 = arith.subi %1097, %1139 : vector<1x1xi32>
    %1141 = arith.select %1121, %1138, %1140 : vector<1x1xi1>, vector<1x1xi32>
    %1142 = arith.select %1112, %1136, %1141 : vector<1x1xi1>, vector<1x1xi32>
    %1143 = arith.subi %1142, %1133 : vector<1x1xi32>
    %c1_i32_275 = arith.constant 1 : i32
    %1144 = vector.broadcast %c1_i32_275 : i32 to vector<1x1xi32>
    %1145 = arith.addi %1143, %1144 : vector<1x1xi32>
    %c1_i32_276 = arith.constant 1 : i32
    %1146 = vector.broadcast %c1_i32_276 : i32 to vector<1x1xi32>
    %1147 = arith.shrsi %1145, %1146 : vector<1x1xi32>
    %1148 = arith.addi %1133, %1147 : vector<1x1xi32>
    %1149 = arith.subi %1148, %1133 : vector<1x1xi32>
    %c1_i32_277 = arith.constant 1 : i32
    %1150 = vector.broadcast %c1_i32_277 : i32 to vector<1x1xi32>
    %1151 = arith.shrsi %1149, %1150 : vector<1x1xi32>
    %1152 = arith.addi %1133, %1151 : vector<1x1xi32>
    %1153 = arith.subi %1142, %1148 : vector<1x1xi32>
    %c1_i32_278 = arith.constant 1 : i32
    %1154 = vector.broadcast %c1_i32_278 : i32 to vector<1x1xi32>
    %1155 = arith.addi %1153, %1154 : vector<1x1xi32>
    %c1_i32_279 = arith.constant 1 : i32
    %1156 = vector.broadcast %c1_i32_279 : i32 to vector<1x1xi32>
    %1157 = arith.shrsi %1155, %1156 : vector<1x1xi32>
    %1158 = arith.addi %1148, %1157 : vector<1x1xi32>
    %1159 = vector.broadcast %1148 : vector<1x1xi32> to vector<2x128xi32>
    %1160 = arith.cmpi sgt, %645, %1159 : vector<2x128xi32>
    %1161 = arith.extui %1160 : vector<2x128xi1> to vector<2x128xi32>
    %1162 = arith.sitofp %1161 : vector<2x128xi32> to vector<2x128xf32>
    %cst_280 = arith.constant dense<0.000000e+00> : vector<128xf32>
    %1163 = vector.multi_reduction <add>, %1162, %cst_280 [0] : vector<2x128xf32> to vector<128xf32>
    %1164 = vector.shape_cast %1163 : vector<128xf32> to vector<1x128xf32>
    %cst_281 = arith.constant dense<0.000000e+00> : vector<1xf32>
    %1165 = vector.multi_reduction <add>, %1164, %cst_281 [1] : vector<1x128xf32> to vector<1xf32>
    %1166 = vector.shape_cast %1165 : vector<1xf32> to vector<1x1xf32>
    %1167 = arith.cmpf oge, %1166, %642 : vector<1x1xf32>
    %1168 = vector.broadcast %1152 : vector<1x1xi32> to vector<2x128xi32>
    %1169 = arith.cmpi sgt, %645, %1168 : vector<2x128xi32>
    %1170 = arith.extui %1169 : vector<2x128xi1> to vector<2x128xi32>
    %1171 = arith.sitofp %1170 : vector<2x128xi32> to vector<2x128xf32>
    %cst_282 = arith.constant dense<0.000000e+00> : vector<128xf32>
    %1172 = vector.multi_reduction <add>, %1171, %cst_282 [0] : vector<2x128xf32> to vector<128xf32>
    %1173 = vector.shape_cast %1172 : vector<128xf32> to vector<1x128xf32>
    %cst_283 = arith.constant dense<0.000000e+00> : vector<1xf32>
    %1174 = vector.multi_reduction <add>, %1173, %cst_283 [1] : vector<1x128xf32> to vector<1xf32>
    %1175 = vector.shape_cast %1174 : vector<1xf32> to vector<1x1xf32>
    %1176 = arith.cmpf oge, %1175, %642 : vector<1x1xf32>
    %1177 = vector.broadcast %1158 : vector<1x1xi32> to vector<2x128xi32>
    %1178 = arith.cmpi sgt, %645, %1177 : vector<2x128xi32>
    %1179 = arith.extui %1178 : vector<2x128xi1> to vector<2x128xi32>
    %1180 = arith.sitofp %1179 : vector<2x128xi32> to vector<2x128xf32>
    %cst_284 = arith.constant dense<0.000000e+00> : vector<128xf32>
    %1181 = vector.multi_reduction <add>, %1180, %cst_284 [0] : vector<2x128xf32> to vector<128xf32>
    %1182 = vector.shape_cast %1181 : vector<128xf32> to vector<1x128xf32>
    %cst_285 = arith.constant dense<0.000000e+00> : vector<1xf32>
    %1183 = vector.multi_reduction <add>, %1182, %cst_285 [1] : vector<1x128xf32> to vector<1xf32>
    %1184 = vector.shape_cast %1183 : vector<1xf32> to vector<1x1xf32>
    %1185 = arith.cmpf oge, %1184, %642 : vector<1x1xf32>
    %1186 = arith.select %1185, %1158, %1148 : vector<1x1xi1>, vector<1x1xi32>
    %1187 = arith.select %1176, %1152, %1133 : vector<1x1xi1>, vector<1x1xi32>
    %1188 = arith.select %1167, %1186, %1187 : vector<1x1xi1>, vector<1x1xi32>
    %c1_i32_286 = arith.constant 1 : i32
    %1189 = vector.broadcast %c1_i32_286 : i32 to vector<1x1xi32>
    %1190 = arith.subi %1158, %1189 : vector<1x1xi32>
    %1191 = arith.select %1185, %1142, %1190 : vector<1x1xi1>, vector<1x1xi32>
    %c1_i32_287 = arith.constant 1 : i32
    %1192 = vector.broadcast %c1_i32_287 : i32 to vector<1x1xi32>
    %1193 = arith.subi %1148, %1192 : vector<1x1xi32>
    %c1_i32_288 = arith.constant 1 : i32
    %1194 = vector.broadcast %c1_i32_288 : i32 to vector<1x1xi32>
    %1195 = arith.subi %1152, %1194 : vector<1x1xi32>
    %1196 = arith.select %1176, %1193, %1195 : vector<1x1xi1>, vector<1x1xi32>
    %1197 = arith.select %1167, %1191, %1196 : vector<1x1xi1>, vector<1x1xi32>
    %1198 = arith.subi %1197, %1188 : vector<1x1xi32>
    %c1_i32_289 = arith.constant 1 : i32
    %1199 = vector.broadcast %c1_i32_289 : i32 to vector<1x1xi32>
    %1200 = arith.addi %1198, %1199 : vector<1x1xi32>
    %c1_i32_290 = arith.constant 1 : i32
    %1201 = vector.broadcast %c1_i32_290 : i32 to vector<1x1xi32>
    %1202 = arith.shrsi %1200, %1201 : vector<1x1xi32>
    %1203 = arith.addi %1188, %1202 : vector<1x1xi32>
    %1204 = arith.subi %1203, %1188 : vector<1x1xi32>
    %c1_i32_291 = arith.constant 1 : i32
    %1205 = vector.broadcast %c1_i32_291 : i32 to vector<1x1xi32>
    %1206 = arith.shrsi %1204, %1205 : vector<1x1xi32>
    %1207 = arith.addi %1188, %1206 : vector<1x1xi32>
    %1208 = arith.subi %1197, %1203 : vector<1x1xi32>
    %c1_i32_292 = arith.constant 1 : i32
    %1209 = vector.broadcast %c1_i32_292 : i32 to vector<1x1xi32>
    %1210 = arith.addi %1208, %1209 : vector<1x1xi32>
    %c1_i32_293 = arith.constant 1 : i32
    %1211 = vector.broadcast %c1_i32_293 : i32 to vector<1x1xi32>
    %1212 = arith.shrsi %1210, %1211 : vector<1x1xi32>
    %1213 = arith.addi %1203, %1212 : vector<1x1xi32>
    %1214 = vector.broadcast %1203 : vector<1x1xi32> to vector<2x128xi32>
    %1215 = arith.cmpi sgt, %645, %1214 : vector<2x128xi32>
    %1216 = arith.extui %1215 : vector<2x128xi1> to vector<2x128xi32>
    %1217 = arith.sitofp %1216 : vector<2x128xi32> to vector<2x128xf32>
    %cst_294 = arith.constant dense<0.000000e+00> : vector<128xf32>
    %1218 = vector.multi_reduction <add>, %1217, %cst_294 [0] : vector<2x128xf32> to vector<128xf32>
    %1219 = vector.shape_cast %1218 : vector<128xf32> to vector<1x128xf32>
    %cst_295 = arith.constant dense<0.000000e+00> : vector<1xf32>
    %1220 = vector.multi_reduction <add>, %1219, %cst_295 [1] : vector<1x128xf32> to vector<1xf32>
    %1221 = vector.shape_cast %1220 : vector<1xf32> to vector<1x1xf32>
    %1222 = arith.cmpf oge, %1221, %642 : vector<1x1xf32>
    %1223 = vector.broadcast %1207 : vector<1x1xi32> to vector<2x128xi32>
    %1224 = arith.cmpi sgt, %645, %1223 : vector<2x128xi32>
    %1225 = arith.extui %1224 : vector<2x128xi1> to vector<2x128xi32>
    %1226 = arith.sitofp %1225 : vector<2x128xi32> to vector<2x128xf32>
    %cst_296 = arith.constant dense<0.000000e+00> : vector<128xf32>
    %1227 = vector.multi_reduction <add>, %1226, %cst_296 [0] : vector<2x128xf32> to vector<128xf32>
    %1228 = vector.shape_cast %1227 : vector<128xf32> to vector<1x128xf32>
    %cst_297 = arith.constant dense<0.000000e+00> : vector<1xf32>
    %1229 = vector.multi_reduction <add>, %1228, %cst_297 [1] : vector<1x128xf32> to vector<1xf32>
    %1230 = vector.shape_cast %1229 : vector<1xf32> to vector<1x1xf32>
    %1231 = arith.cmpf oge, %1230, %642 : vector<1x1xf32>
    %1232 = vector.broadcast %1213 : vector<1x1xi32> to vector<2x128xi32>
    %1233 = arith.cmpi sgt, %645, %1232 : vector<2x128xi32>
    %1234 = arith.extui %1233 : vector<2x128xi1> to vector<2x128xi32>
    %1235 = arith.sitofp %1234 : vector<2x128xi32> to vector<2x128xf32>
    %cst_298 = arith.constant dense<0.000000e+00> : vector<128xf32>
    %1236 = vector.multi_reduction <add>, %1235, %cst_298 [0] : vector<2x128xf32> to vector<128xf32>
    %1237 = vector.shape_cast %1236 : vector<128xf32> to vector<1x128xf32>
    %cst_299 = arith.constant dense<0.000000e+00> : vector<1xf32>
    %1238 = vector.multi_reduction <add>, %1237, %cst_299 [1] : vector<1x128xf32> to vector<1xf32>
    %1239 = vector.shape_cast %1238 : vector<1xf32> to vector<1x1xf32>
    %1240 = arith.cmpf oge, %1239, %642 : vector<1x1xf32>
    %1241 = arith.select %1240, %1213, %1203 : vector<1x1xi1>, vector<1x1xi32>
    %1242 = arith.select %1231, %1207, %1188 : vector<1x1xi1>, vector<1x1xi32>
    %1243 = arith.select %1222, %1241, %1242 : vector<1x1xi1>, vector<1x1xi32>
    %c1_i32_300 = arith.constant 1 : i32
    %1244 = vector.broadcast %c1_i32_300 : i32 to vector<1x1xi32>
    %1245 = arith.subi %1213, %1244 : vector<1x1xi32>
    %1246 = arith.select %1240, %1197, %1245 : vector<1x1xi1>, vector<1x1xi32>
    %c1_i32_301 = arith.constant 1 : i32
    %1247 = vector.broadcast %c1_i32_301 : i32 to vector<1x1xi32>
    %1248 = arith.subi %1203, %1247 : vector<1x1xi32>
    %c1_i32_302 = arith.constant 1 : i32
    %1249 = vector.broadcast %c1_i32_302 : i32 to vector<1x1xi32>
    %1250 = arith.subi %1207, %1249 : vector<1x1xi32>
    %1251 = arith.select %1231, %1248, %1250 : vector<1x1xi1>, vector<1x1xi32>
    %1252 = arith.select %1222, %1246, %1251 : vector<1x1xi1>, vector<1x1xi32>
    %1253 = arith.subi %1252, %1243 : vector<1x1xi32>
    %c1_i32_303 = arith.constant 1 : i32
    %1254 = vector.broadcast %c1_i32_303 : i32 to vector<1x1xi32>
    %1255 = arith.addi %1253, %1254 : vector<1x1xi32>
    %c1_i32_304 = arith.constant 1 : i32
    %1256 = vector.broadcast %c1_i32_304 : i32 to vector<1x1xi32>
    %1257 = arith.shrsi %1255, %1256 : vector<1x1xi32>
    %1258 = arith.addi %1243, %1257 : vector<1x1xi32>
    %1259 = arith.subi %1258, %1243 : vector<1x1xi32>
    %c1_i32_305 = arith.constant 1 : i32
    %1260 = vector.broadcast %c1_i32_305 : i32 to vector<1x1xi32>
    %1261 = arith.shrsi %1259, %1260 : vector<1x1xi32>
    %1262 = arith.addi %1243, %1261 : vector<1x1xi32>
    %1263 = arith.subi %1252, %1258 : vector<1x1xi32>
    %c1_i32_306 = arith.constant 1 : i32
    %1264 = vector.broadcast %c1_i32_306 : i32 to vector<1x1xi32>
    %1265 = arith.addi %1263, %1264 : vector<1x1xi32>
    %c1_i32_307 = arith.constant 1 : i32
    %1266 = vector.broadcast %c1_i32_307 : i32 to vector<1x1xi32>
    %1267 = arith.shrsi %1265, %1266 : vector<1x1xi32>
    %1268 = arith.addi %1258, %1267 : vector<1x1xi32>
    %1269 = vector.broadcast %1258 : vector<1x1xi32> to vector<2x128xi32>
    %1270 = arith.cmpi sgt, %645, %1269 : vector<2x128xi32>
    %1271 = arith.extui %1270 : vector<2x128xi1> to vector<2x128xi32>
    %1272 = arith.sitofp %1271 : vector<2x128xi32> to vector<2x128xf32>
    %cst_308 = arith.constant dense<0.000000e+00> : vector<128xf32>
    %1273 = vector.multi_reduction <add>, %1272, %cst_308 [0] : vector<2x128xf32> to vector<128xf32>
    %1274 = vector.shape_cast %1273 : vector<128xf32> to vector<1x128xf32>
    %cst_309 = arith.constant dense<0.000000e+00> : vector<1xf32>
    %1275 = vector.multi_reduction <add>, %1274, %cst_309 [1] : vector<1x128xf32> to vector<1xf32>
    %1276 = vector.shape_cast %1275 : vector<1xf32> to vector<1x1xf32>
    %1277 = arith.cmpf oge, %1276, %642 : vector<1x1xf32>
    %1278 = vector.broadcast %1262 : vector<1x1xi32> to vector<2x128xi32>
    %1279 = arith.cmpi sgt, %645, %1278 : vector<2x128xi32>
    %1280 = arith.extui %1279 : vector<2x128xi1> to vector<2x128xi32>
    %1281 = arith.sitofp %1280 : vector<2x128xi32> to vector<2x128xf32>
    %cst_310 = arith.constant dense<0.000000e+00> : vector<128xf32>
    %1282 = vector.multi_reduction <add>, %1281, %cst_310 [0] : vector<2x128xf32> to vector<128xf32>
    %1283 = vector.shape_cast %1282 : vector<128xf32> to vector<1x128xf32>
    %cst_311 = arith.constant dense<0.000000e+00> : vector<1xf32>
    %1284 = vector.multi_reduction <add>, %1283, %cst_311 [1] : vector<1x128xf32> to vector<1xf32>
    %1285 = vector.shape_cast %1284 : vector<1xf32> to vector<1x1xf32>
    %1286 = arith.cmpf oge, %1285, %642 : vector<1x1xf32>
    %1287 = vector.broadcast %1268 : vector<1x1xi32> to vector<2x128xi32>
    %1288 = arith.cmpi sgt, %645, %1287 : vector<2x128xi32>
    %1289 = arith.extui %1288 : vector<2x128xi1> to vector<2x128xi32>
    %1290 = arith.sitofp %1289 : vector<2x128xi32> to vector<2x128xf32>
    %cst_312 = arith.constant dense<0.000000e+00> : vector<128xf32>
    %1291 = vector.multi_reduction <add>, %1290, %cst_312 [0] : vector<2x128xf32> to vector<128xf32>
    %1292 = vector.shape_cast %1291 : vector<128xf32> to vector<1x128xf32>
    %cst_313 = arith.constant dense<0.000000e+00> : vector<1xf32>
    %1293 = vector.multi_reduction <add>, %1292, %cst_313 [1] : vector<1x128xf32> to vector<1xf32>
    %1294 = vector.shape_cast %1293 : vector<1xf32> to vector<1x1xf32>
    %1295 = arith.cmpf oge, %1294, %642 : vector<1x1xf32>
    %1296 = arith.select %1295, %1268, %1258 : vector<1x1xi1>, vector<1x1xi32>
    %1297 = arith.select %1286, %1262, %1243 : vector<1x1xi1>, vector<1x1xi32>
    %1298 = arith.select %1277, %1296, %1297 : vector<1x1xi1>, vector<1x1xi32>
    %c1_i32_314 = arith.constant 1 : i32
    %1299 = vector.broadcast %c1_i32_314 : i32 to vector<1x1xi32>
    %1300 = arith.subi %1268, %1299 : vector<1x1xi32>
    %1301 = arith.select %1295, %1252, %1300 : vector<1x1xi1>, vector<1x1xi32>
    %c1_i32_315 = arith.constant 1 : i32
    %1302 = vector.broadcast %c1_i32_315 : i32 to vector<1x1xi32>
    %1303 = arith.subi %1258, %1302 : vector<1x1xi32>
    %c1_i32_316 = arith.constant 1 : i32
    %1304 = vector.broadcast %c1_i32_316 : i32 to vector<1x1xi32>
    %1305 = arith.subi %1262, %1304 : vector<1x1xi32>
    %1306 = arith.select %1286, %1303, %1305 : vector<1x1xi1>, vector<1x1xi32>
    %1307 = arith.select %1277, %1301, %1306 : vector<1x1xi1>, vector<1x1xi32>
    %1308 = arith.subi %1307, %1298 : vector<1x1xi32>
    %c1_i32_317 = arith.constant 1 : i32
    %1309 = vector.broadcast %c1_i32_317 : i32 to vector<1x1xi32>
    %1310 = arith.addi %1308, %1309 : vector<1x1xi32>
    %c1_i32_318 = arith.constant 1 : i32
    %1311 = vector.broadcast %c1_i32_318 : i32 to vector<1x1xi32>
    %1312 = arith.shrsi %1310, %1311 : vector<1x1xi32>
    %1313 = arith.addi %1298, %1312 : vector<1x1xi32>
    %1314 = arith.subi %1313, %1298 : vector<1x1xi32>
    %c1_i32_319 = arith.constant 1 : i32
    %1315 = vector.broadcast %c1_i32_319 : i32 to vector<1x1xi32>
    %1316 = arith.shrsi %1314, %1315 : vector<1x1xi32>
    %1317 = arith.addi %1298, %1316 : vector<1x1xi32>
    %1318 = arith.subi %1307, %1313 : vector<1x1xi32>
    %c1_i32_320 = arith.constant 1 : i32
    %1319 = vector.broadcast %c1_i32_320 : i32 to vector<1x1xi32>
    %1320 = arith.addi %1318, %1319 : vector<1x1xi32>
    %c1_i32_321 = arith.constant 1 : i32
    %1321 = vector.broadcast %c1_i32_321 : i32 to vector<1x1xi32>
    %1322 = arith.shrsi %1320, %1321 : vector<1x1xi32>
    %1323 = arith.addi %1313, %1322 : vector<1x1xi32>
    %1324 = vector.broadcast %1313 : vector<1x1xi32> to vector<2x128xi32>
    %1325 = arith.cmpi sgt, %645, %1324 : vector<2x128xi32>
    %1326 = arith.extui %1325 : vector<2x128xi1> to vector<2x128xi32>
    %1327 = arith.sitofp %1326 : vector<2x128xi32> to vector<2x128xf32>
    %cst_322 = arith.constant dense<0.000000e+00> : vector<128xf32>
    %1328 = vector.multi_reduction <add>, %1327, %cst_322 [0] : vector<2x128xf32> to vector<128xf32>
    %1329 = vector.shape_cast %1328 : vector<128xf32> to vector<1x128xf32>
    %cst_323 = arith.constant dense<0.000000e+00> : vector<1xf32>
    %1330 = vector.multi_reduction <add>, %1329, %cst_323 [1] : vector<1x128xf32> to vector<1xf32>
    %1331 = vector.shape_cast %1330 : vector<1xf32> to vector<1x1xf32>
    %1332 = arith.cmpf oge, %1331, %642 : vector<1x1xf32>
    %1333 = vector.broadcast %1317 : vector<1x1xi32> to vector<2x128xi32>
    %1334 = arith.cmpi sgt, %645, %1333 : vector<2x128xi32>
    %1335 = arith.extui %1334 : vector<2x128xi1> to vector<2x128xi32>
    %1336 = arith.sitofp %1335 : vector<2x128xi32> to vector<2x128xf32>
    %cst_324 = arith.constant dense<0.000000e+00> : vector<128xf32>
    %1337 = vector.multi_reduction <add>, %1336, %cst_324 [0] : vector<2x128xf32> to vector<128xf32>
    %1338 = vector.shape_cast %1337 : vector<128xf32> to vector<1x128xf32>
    %cst_325 = arith.constant dense<0.000000e+00> : vector<1xf32>
    %1339 = vector.multi_reduction <add>, %1338, %cst_325 [1] : vector<1x128xf32> to vector<1xf32>
    %1340 = vector.shape_cast %1339 : vector<1xf32> to vector<1x1xf32>
    %1341 = arith.cmpf oge, %1340, %642 : vector<1x1xf32>
    %1342 = vector.broadcast %1323 : vector<1x1xi32> to vector<2x128xi32>
    %1343 = arith.cmpi sgt, %645, %1342 : vector<2x128xi32>
    %1344 = arith.extui %1343 : vector<2x128xi1> to vector<2x128xi32>
    %1345 = arith.sitofp %1344 : vector<2x128xi32> to vector<2x128xf32>
    %cst_326 = arith.constant dense<0.000000e+00> : vector<128xf32>
    %1346 = vector.multi_reduction <add>, %1345, %cst_326 [0] : vector<2x128xf32> to vector<128xf32>
    %1347 = vector.shape_cast %1346 : vector<128xf32> to vector<1x128xf32>
    %cst_327 = arith.constant dense<0.000000e+00> : vector<1xf32>
    %1348 = vector.multi_reduction <add>, %1347, %cst_327 [1] : vector<1x128xf32> to vector<1xf32>
    %1349 = vector.shape_cast %1348 : vector<1xf32> to vector<1x1xf32>
    %1350 = arith.cmpf oge, %1349, %642 : vector<1x1xf32>
    %1351 = arith.select %1350, %1323, %1313 : vector<1x1xi1>, vector<1x1xi32>
    %1352 = arith.select %1341, %1317, %1298 : vector<1x1xi1>, vector<1x1xi32>
    %1353 = arith.select %1332, %1351, %1352 : vector<1x1xi1>, vector<1x1xi32>
    %c1_i32_328 = arith.constant 1 : i32
    %1354 = vector.broadcast %c1_i32_328 : i32 to vector<1x1xi32>
    %1355 = arith.subi %1323, %1354 : vector<1x1xi32>
    %1356 = arith.select %1350, %1307, %1355 : vector<1x1xi1>, vector<1x1xi32>
    %c1_i32_329 = arith.constant 1 : i32
    %1357 = vector.broadcast %c1_i32_329 : i32 to vector<1x1xi32>
    %1358 = arith.subi %1313, %1357 : vector<1x1xi32>
    %c1_i32_330 = arith.constant 1 : i32
    %1359 = vector.broadcast %c1_i32_330 : i32 to vector<1x1xi32>
    %1360 = arith.subi %1317, %1359 : vector<1x1xi32>
    %1361 = arith.select %1341, %1358, %1360 : vector<1x1xi1>, vector<1x1xi32>
    %1362 = arith.select %1332, %1356, %1361 : vector<1x1xi1>, vector<1x1xi32>
    %1363 = arith.subi %1362, %1353 : vector<1x1xi32>
    %c1_i32_331 = arith.constant 1 : i32
    %1364 = vector.broadcast %c1_i32_331 : i32 to vector<1x1xi32>
    %1365 = arith.addi %1363, %1364 : vector<1x1xi32>
    %c1_i32_332 = arith.constant 1 : i32
    %1366 = vector.broadcast %c1_i32_332 : i32 to vector<1x1xi32>
    %1367 = arith.shrsi %1365, %1366 : vector<1x1xi32>
    %1368 = arith.addi %1353, %1367 : vector<1x1xi32>
    %1369 = arith.subi %1368, %1353 : vector<1x1xi32>
    %c1_i32_333 = arith.constant 1 : i32
    %1370 = vector.broadcast %c1_i32_333 : i32 to vector<1x1xi32>
    %1371 = arith.shrsi %1369, %1370 : vector<1x1xi32>
    %1372 = arith.addi %1353, %1371 : vector<1x1xi32>
    %1373 = arith.subi %1362, %1368 : vector<1x1xi32>
    %c1_i32_334 = arith.constant 1 : i32
    %1374 = vector.broadcast %c1_i32_334 : i32 to vector<1x1xi32>
    %1375 = arith.addi %1373, %1374 : vector<1x1xi32>
    %c1_i32_335 = arith.constant 1 : i32
    %1376 = vector.broadcast %c1_i32_335 : i32 to vector<1x1xi32>
    %1377 = arith.shrsi %1375, %1376 : vector<1x1xi32>
    %1378 = arith.addi %1368, %1377 : vector<1x1xi32>
    %1379 = vector.broadcast %1368 : vector<1x1xi32> to vector<2x128xi32>
    %1380 = arith.cmpi sgt, %645, %1379 : vector<2x128xi32>
    %1381 = arith.extui %1380 : vector<2x128xi1> to vector<2x128xi32>
    %1382 = arith.sitofp %1381 : vector<2x128xi32> to vector<2x128xf32>
    %cst_336 = arith.constant dense<0.000000e+00> : vector<128xf32>
    %1383 = vector.multi_reduction <add>, %1382, %cst_336 [0] : vector<2x128xf32> to vector<128xf32>
    %1384 = vector.shape_cast %1383 : vector<128xf32> to vector<1x128xf32>
    %cst_337 = arith.constant dense<0.000000e+00> : vector<1xf32>
    %1385 = vector.multi_reduction <add>, %1384, %cst_337 [1] : vector<1x128xf32> to vector<1xf32>
    %1386 = vector.shape_cast %1385 : vector<1xf32> to vector<1x1xf32>
    %1387 = arith.cmpf oge, %1386, %642 : vector<1x1xf32>
    %1388 = vector.broadcast %1372 : vector<1x1xi32> to vector<2x128xi32>
    %1389 = arith.cmpi sgt, %645, %1388 : vector<2x128xi32>
    %1390 = arith.extui %1389 : vector<2x128xi1> to vector<2x128xi32>
    %1391 = arith.sitofp %1390 : vector<2x128xi32> to vector<2x128xf32>
    %cst_338 = arith.constant dense<0.000000e+00> : vector<128xf32>
    %1392 = vector.multi_reduction <add>, %1391, %cst_338 [0] : vector<2x128xf32> to vector<128xf32>
    %1393 = vector.shape_cast %1392 : vector<128xf32> to vector<1x128xf32>
    %cst_339 = arith.constant dense<0.000000e+00> : vector<1xf32>
    %1394 = vector.multi_reduction <add>, %1393, %cst_339 [1] : vector<1x128xf32> to vector<1xf32>
    %1395 = vector.shape_cast %1394 : vector<1xf32> to vector<1x1xf32>
    %1396 = arith.cmpf oge, %1395, %642 : vector<1x1xf32>
    %1397 = vector.broadcast %1378 : vector<1x1xi32> to vector<2x128xi32>
    %1398 = arith.cmpi sgt, %645, %1397 : vector<2x128xi32>
    %1399 = arith.extui %1398 : vector<2x128xi1> to vector<2x128xi32>
    %1400 = arith.sitofp %1399 : vector<2x128xi32> to vector<2x128xf32>
    %cst_340 = arith.constant dense<0.000000e+00> : vector<128xf32>
    %1401 = vector.multi_reduction <add>, %1400, %cst_340 [0] : vector<2x128xf32> to vector<128xf32>
    %1402 = vector.shape_cast %1401 : vector<128xf32> to vector<1x128xf32>
    %cst_341 = arith.constant dense<0.000000e+00> : vector<1xf32>
    %1403 = vector.multi_reduction <add>, %1402, %cst_341 [1] : vector<1x128xf32> to vector<1xf32>
    %1404 = vector.shape_cast %1403 : vector<1xf32> to vector<1x1xf32>
    %1405 = arith.cmpf oge, %1404, %642 : vector<1x1xf32>
    %1406 = arith.select %1405, %1378, %1368 : vector<1x1xi1>, vector<1x1xi32>
    %1407 = arith.select %1396, %1372, %1353 : vector<1x1xi1>, vector<1x1xi32>
    %1408 = arith.select %1387, %1406, %1407 : vector<1x1xi1>, vector<1x1xi32>
    %c1_i32_342 = arith.constant 1 : i32
    %1409 = vector.broadcast %c1_i32_342 : i32 to vector<1x1xi32>
    %1410 = arith.subi %1378, %1409 : vector<1x1xi32>
    %1411 = arith.select %1405, %1362, %1410 : vector<1x1xi1>, vector<1x1xi32>
    %c1_i32_343 = arith.constant 1 : i32
    %1412 = vector.broadcast %c1_i32_343 : i32 to vector<1x1xi32>
    %1413 = arith.subi %1368, %1412 : vector<1x1xi32>
    %c1_i32_344 = arith.constant 1 : i32
    %1414 = vector.broadcast %c1_i32_344 : i32 to vector<1x1xi32>
    %1415 = arith.subi %1372, %1414 : vector<1x1xi32>
    %1416 = arith.select %1396, %1413, %1415 : vector<1x1xi1>, vector<1x1xi32>
    %1417 = arith.select %1387, %1411, %1416 : vector<1x1xi1>, vector<1x1xi32>
    %1418 = arith.subi %1417, %1408 : vector<1x1xi32>
    %c1_i32_345 = arith.constant 1 : i32
    %1419 = vector.broadcast %c1_i32_345 : i32 to vector<1x1xi32>
    %1420 = arith.addi %1418, %1419 : vector<1x1xi32>
    %c1_i32_346 = arith.constant 1 : i32
    %1421 = vector.broadcast %c1_i32_346 : i32 to vector<1x1xi32>
    %1422 = arith.shrsi %1420, %1421 : vector<1x1xi32>
    %1423 = arith.addi %1408, %1422 : vector<1x1xi32>
    %1424 = arith.subi %1423, %1408 : vector<1x1xi32>
    %c1_i32_347 = arith.constant 1 : i32
    %1425 = vector.broadcast %c1_i32_347 : i32 to vector<1x1xi32>
    %1426 = arith.shrsi %1424, %1425 : vector<1x1xi32>
    %1427 = arith.addi %1408, %1426 : vector<1x1xi32>
    %1428 = arith.subi %1417, %1423 : vector<1x1xi32>
    %c1_i32_348 = arith.constant 1 : i32
    %1429 = vector.broadcast %c1_i32_348 : i32 to vector<1x1xi32>
    %1430 = arith.addi %1428, %1429 : vector<1x1xi32>
    %c1_i32_349 = arith.constant 1 : i32
    %1431 = vector.broadcast %c1_i32_349 : i32 to vector<1x1xi32>
    %1432 = arith.shrsi %1430, %1431 : vector<1x1xi32>
    %1433 = arith.addi %1423, %1432 : vector<1x1xi32>
    %1434 = vector.broadcast %1423 : vector<1x1xi32> to vector<2x128xi32>
    %1435 = arith.cmpi sgt, %645, %1434 : vector<2x128xi32>
    %1436 = arith.extui %1435 : vector<2x128xi1> to vector<2x128xi32>
    %1437 = arith.sitofp %1436 : vector<2x128xi32> to vector<2x128xf32>
    %cst_350 = arith.constant dense<0.000000e+00> : vector<128xf32>
    %1438 = vector.multi_reduction <add>, %1437, %cst_350 [0] : vector<2x128xf32> to vector<128xf32>
    %1439 = vector.shape_cast %1438 : vector<128xf32> to vector<1x128xf32>
    %cst_351 = arith.constant dense<0.000000e+00> : vector<1xf32>
    %1440 = vector.multi_reduction <add>, %1439, %cst_351 [1] : vector<1x128xf32> to vector<1xf32>
    %1441 = vector.shape_cast %1440 : vector<1xf32> to vector<1x1xf32>
    %1442 = arith.cmpf oge, %1441, %642 : vector<1x1xf32>
    %1443 = vector.broadcast %1427 : vector<1x1xi32> to vector<2x128xi32>
    %1444 = arith.cmpi sgt, %645, %1443 : vector<2x128xi32>
    %1445 = arith.extui %1444 : vector<2x128xi1> to vector<2x128xi32>
    %1446 = arith.sitofp %1445 : vector<2x128xi32> to vector<2x128xf32>
    %cst_352 = arith.constant dense<0.000000e+00> : vector<128xf32>
    %1447 = vector.multi_reduction <add>, %1446, %cst_352 [0] : vector<2x128xf32> to vector<128xf32>
    %1448 = vector.shape_cast %1447 : vector<128xf32> to vector<1x128xf32>
    %cst_353 = arith.constant dense<0.000000e+00> : vector<1xf32>
    %1449 = vector.multi_reduction <add>, %1448, %cst_353 [1] : vector<1x128xf32> to vector<1xf32>
    %1450 = vector.shape_cast %1449 : vector<1xf32> to vector<1x1xf32>
    %1451 = arith.cmpf oge, %1450, %642 : vector<1x1xf32>
    %1452 = vector.broadcast %1433 : vector<1x1xi32> to vector<2x128xi32>
    %1453 = arith.cmpi sgt, %645, %1452 : vector<2x128xi32>
    %1454 = arith.extui %1453 : vector<2x128xi1> to vector<2x128xi32>
    %1455 = arith.sitofp %1454 : vector<2x128xi32> to vector<2x128xf32>
    %cst_354 = arith.constant dense<0.000000e+00> : vector<128xf32>
    %1456 = vector.multi_reduction <add>, %1455, %cst_354 [0] : vector<2x128xf32> to vector<128xf32>
    %1457 = vector.shape_cast %1456 : vector<128xf32> to vector<1x128xf32>
    %cst_355 = arith.constant dense<0.000000e+00> : vector<1xf32>
    %1458 = vector.multi_reduction <add>, %1457, %cst_355 [1] : vector<1x128xf32> to vector<1xf32>
    %1459 = vector.shape_cast %1458 : vector<1xf32> to vector<1x1xf32>
    %1460 = arith.cmpf oge, %1459, %642 : vector<1x1xf32>
    %1461 = arith.select %1460, %1433, %1423 : vector<1x1xi1>, vector<1x1xi32>
    %1462 = arith.select %1451, %1427, %1408 : vector<1x1xi1>, vector<1x1xi32>
    %1463 = arith.select %1442, %1461, %1462 : vector<1x1xi1>, vector<1x1xi32>
    %c1_i32_356 = arith.constant 1 : i32
    %1464 = vector.broadcast %c1_i32_356 : i32 to vector<1x1xi32>
    %1465 = arith.subi %1433, %1464 : vector<1x1xi32>
    %1466 = arith.select %1460, %1417, %1465 : vector<1x1xi1>, vector<1x1xi32>
    %c1_i32_357 = arith.constant 1 : i32
    %1467 = vector.broadcast %c1_i32_357 : i32 to vector<1x1xi32>
    %1468 = arith.subi %1423, %1467 : vector<1x1xi32>
    %c1_i32_358 = arith.constant 1 : i32
    %1469 = vector.broadcast %c1_i32_358 : i32 to vector<1x1xi32>
    %1470 = arith.subi %1427, %1469 : vector<1x1xi32>
    %1471 = arith.select %1451, %1468, %1470 : vector<1x1xi1>, vector<1x1xi32>
    %1472 = arith.select %1442, %1466, %1471 : vector<1x1xi1>, vector<1x1xi32>
    %1473 = arith.subi %1472, %1463 : vector<1x1xi32>
    %c1_i32_359 = arith.constant 1 : i32
    %1474 = vector.broadcast %c1_i32_359 : i32 to vector<1x1xi32>
    %1475 = arith.addi %1473, %1474 : vector<1x1xi32>
    %c1_i32_360 = arith.constant 1 : i32
    %1476 = vector.broadcast %c1_i32_360 : i32 to vector<1x1xi32>
    %1477 = arith.shrsi %1475, %1476 : vector<1x1xi32>
    %1478 = arith.addi %1463, %1477 : vector<1x1xi32>
    %1479 = arith.subi %1478, %1463 : vector<1x1xi32>
    %c1_i32_361 = arith.constant 1 : i32
    %1480 = vector.broadcast %c1_i32_361 : i32 to vector<1x1xi32>
    %1481 = arith.shrsi %1479, %1480 : vector<1x1xi32>
    %1482 = arith.addi %1463, %1481 : vector<1x1xi32>
    %1483 = arith.subi %1472, %1478 : vector<1x1xi32>
    %c1_i32_362 = arith.constant 1 : i32
    %1484 = vector.broadcast %c1_i32_362 : i32 to vector<1x1xi32>
    %1485 = arith.addi %1483, %1484 : vector<1x1xi32>
    %c1_i32_363 = arith.constant 1 : i32
    %1486 = vector.broadcast %c1_i32_363 : i32 to vector<1x1xi32>
    %1487 = arith.shrsi %1485, %1486 : vector<1x1xi32>
    %1488 = arith.addi %1478, %1487 : vector<1x1xi32>
    %1489 = vector.broadcast %1478 : vector<1x1xi32> to vector<2x128xi32>
    %1490 = arith.cmpi sgt, %645, %1489 : vector<2x128xi32>
    %1491 = arith.extui %1490 : vector<2x128xi1> to vector<2x128xi32>
    %1492 = arith.sitofp %1491 : vector<2x128xi32> to vector<2x128xf32>
    %cst_364 = arith.constant dense<0.000000e+00> : vector<128xf32>
    %1493 = vector.multi_reduction <add>, %1492, %cst_364 [0] : vector<2x128xf32> to vector<128xf32>
    %1494 = vector.shape_cast %1493 : vector<128xf32> to vector<1x128xf32>
    %cst_365 = arith.constant dense<0.000000e+00> : vector<1xf32>
    %1495 = vector.multi_reduction <add>, %1494, %cst_365 [1] : vector<1x128xf32> to vector<1xf32>
    %1496 = vector.shape_cast %1495 : vector<1xf32> to vector<1x1xf32>
    %1497 = arith.cmpf oge, %1496, %642 : vector<1x1xf32>
    %1498 = vector.broadcast %1482 : vector<1x1xi32> to vector<2x128xi32>
    %1499 = arith.cmpi sgt, %645, %1498 : vector<2x128xi32>
    %1500 = arith.extui %1499 : vector<2x128xi1> to vector<2x128xi32>
    %1501 = arith.sitofp %1500 : vector<2x128xi32> to vector<2x128xf32>
    %cst_366 = arith.constant dense<0.000000e+00> : vector<128xf32>
    %1502 = vector.multi_reduction <add>, %1501, %cst_366 [0] : vector<2x128xf32> to vector<128xf32>
    %1503 = vector.shape_cast %1502 : vector<128xf32> to vector<1x128xf32>
    %cst_367 = arith.constant dense<0.000000e+00> : vector<1xf32>
    %1504 = vector.multi_reduction <add>, %1503, %cst_367 [1] : vector<1x128xf32> to vector<1xf32>
    %1505 = vector.shape_cast %1504 : vector<1xf32> to vector<1x1xf32>
    %1506 = arith.cmpf oge, %1505, %642 : vector<1x1xf32>
    %1507 = vector.broadcast %1488 : vector<1x1xi32> to vector<2x128xi32>
    %1508 = arith.cmpi sgt, %645, %1507 : vector<2x128xi32>
    %1509 = arith.extui %1508 : vector<2x128xi1> to vector<2x128xi32>
    %1510 = arith.sitofp %1509 : vector<2x128xi32> to vector<2x128xf32>
    %cst_368 = arith.constant dense<0.000000e+00> : vector<128xf32>
    %1511 = vector.multi_reduction <add>, %1510, %cst_368 [0] : vector<2x128xf32> to vector<128xf32>
    %1512 = vector.shape_cast %1511 : vector<128xf32> to vector<1x128xf32>
    %cst_369 = arith.constant dense<0.000000e+00> : vector<1xf32>
    %1513 = vector.multi_reduction <add>, %1512, %cst_369 [1] : vector<1x128xf32> to vector<1xf32>
    %1514 = vector.shape_cast %1513 : vector<1xf32> to vector<1x1xf32>
    %1515 = arith.cmpf oge, %1514, %642 : vector<1x1xf32>
    %1516 = arith.select %1515, %1488, %1478 : vector<1x1xi1>, vector<1x1xi32>
    %1517 = arith.select %1506, %1482, %1463 : vector<1x1xi1>, vector<1x1xi32>
    %1518 = arith.select %1497, %1516, %1517 : vector<1x1xi1>, vector<1x1xi32>
    %1519 = vector.broadcast %1518 : vector<1x1xi32> to vector<2x128xi32>
    %1520 = arith.cmpi sgt, %645, %1519 : vector<2x128xi32>
    %1521 = arith.ori %634, %1520 : vector<2x128xi1>
    %cst_370 = arith.constant 0.000000e+00 : f32
    %1522 = vector.broadcast %cst_370 : f32 to vector<2x128xf32>
    %1523 = arith.select %1521, %632, %1522 : vector<2x128xi1>, vector<2x128xf32>
    %cst_371 = arith.constant dense<0.000000e+00> : vector<128xf32>
    %1524 = vector.multi_reduction <add>, %1523, %cst_371 [0] : vector<2x128xf32> to vector<128xf32>
    %1525 = vector.shape_cast %1524 : vector<128xf32> to vector<1x128xf32>
    %cst_372 = arith.constant dense<0.000000e+00> : vector<1xf32>
    %1526 = vector.multi_reduction <add>, %1525, %cst_372 [1] : vector<1x128xf32> to vector<1xf32>
    %1527 = vector.shape_cast %1526 : vector<1xf32> to vector<1x1xf32>
    %1528 = arith.divf %1527, %582 : vector<1x1xf32>
    %1529 = arith.subf %560, %1 : vector<2x128xf32>
    %1530 = arith.mulf %1529, %15 : vector<2x128xf32>
    %cst_373 = arith.constant 1.000000e+01 : f32
    %1531 = vector.broadcast %cst_373 : f32 to vector<2x128xf32>
    %1532 = arith.mulf %1530, %1531 : vector<2x128xf32>
    %1533 = arith.subf %564, %3 : vector<2x128xf32>
    %1534 = arith.mulf %1533, %17 : vector<2x128xf32>
    %cst_374 = arith.constant 1.000000e+01 : f32
    %1535 = vector.broadcast %cst_374 : f32 to vector<2x128xf32>
    %1536 = arith.mulf %1534, %1535 : vector<2x128xf32>
    %1537 = arith.mulf %567, %15 : vector<2x128xf32>
    %1538 = math.log %1537 : vector<2x128xf32>
    %cst_375 = arith.constant 5.000000e+00 : f32
    %1539 = vector.broadcast %cst_375 : f32 to vector<2x128xf32>
    %1540 = arith.mulf %1538, %1539 : vector<2x128xf32>
    %1541 = arith.mulf %570, %17 : vector<2x128xf32>
    %1542 = math.log %1541 : vector<2x128xf32>
    %cst_376 = arith.constant 5.000000e+00 : f32
    %1543 = vector.broadcast %cst_376 : f32 to vector<2x128xf32>
    %1544 = arith.mulf %1542, %1543 : vector<2x128xf32>
    %c0_377 = arith.constant 0 : index
    %c0_378 = arith.constant 0 : index
    %c0_379 = arith.constant 0 : index
    %c0_380 = arith.constant 0 : index
    %1545 = vector.load %arg2[%c0_377, %c0_378, %c0_379, %c0_380] : memref<1x4x2x128xf32, #tpu.memory_space<vmem>>, vector<1x1x2x128xf32>
    %1546 = vector.shape_cast %1545 : vector<1x1x2x128xf32> to vector<2x128xf32>
    %1547 = arith.subf %1546, %1532 : vector<2x128xf32>
    %1548 = math.absf %1547 : vector<2x128xf32>
    %cst_381 = arith.constant 1.000000e+00 : f32
    %1549 = vector.broadcast %cst_381 : f32 to vector<2x128xf32>
    %1550 = arith.cmpf olt, %1548, %1549 : vector<2x128xf32>
    %cst_382 = arith.constant 5.000000e-01 : f32
    %1551 = vector.broadcast %cst_382 : f32 to vector<2x128xf32>
    %1552 = arith.mulf %1551, %1547 : vector<2x128xf32>
    %1553 = arith.mulf %1552, %1547 : vector<2x128xf32>
    %cst_383 = arith.constant 5.000000e-01 : f32
    %1554 = vector.broadcast %cst_383 : f32 to vector<2x128xf32>
    %1555 = arith.subf %1548, %1554 : vector<2x128xf32>
    %1556 = arith.select %1550, %1553, %1555 : vector<2x128xi1>, vector<2x128xf32>
    %c0_384 = arith.constant 0 : index
    %c1_385 = arith.constant 1 : index
    %c0_386 = arith.constant 0 : index
    %c0_387 = arith.constant 0 : index
    %1557 = vector.load %arg2[%c0_384, %c1_385, %c0_386, %c0_387] : memref<1x4x2x128xf32, #tpu.memory_space<vmem>>, vector<1x1x2x128xf32>
    %1558 = vector.shape_cast %1557 : vector<1x1x2x128xf32> to vector<2x128xf32>
    %1559 = arith.subf %1558, %1536 : vector<2x128xf32>
    %1560 = math.absf %1559 : vector<2x128xf32>
    %cst_388 = arith.constant 1.000000e+00 : f32
    %1561 = vector.broadcast %cst_388 : f32 to vector<2x128xf32>
    %1562 = arith.cmpf olt, %1560, %1561 : vector<2x128xf32>
    %cst_389 = arith.constant 5.000000e-01 : f32
    %1563 = vector.broadcast %cst_389 : f32 to vector<2x128xf32>
    %1564 = arith.mulf %1563, %1559 : vector<2x128xf32>
    %1565 = arith.mulf %1564, %1559 : vector<2x128xf32>
    %cst_390 = arith.constant 5.000000e-01 : f32
    %1566 = vector.broadcast %cst_390 : f32 to vector<2x128xf32>
    %1567 = arith.subf %1560, %1566 : vector<2x128xf32>
    %1568 = arith.select %1562, %1565, %1567 : vector<2x128xi1>, vector<2x128xf32>
    %1569 = arith.addf %1556, %1568 : vector<2x128xf32>
    %c0_391 = arith.constant 0 : index
    %c2_392 = arith.constant 2 : index
    %c0_393 = arith.constant 0 : index
    %c0_394 = arith.constant 0 : index
    %1570 = vector.load %arg2[%c0_391, %c2_392, %c0_393, %c0_394] : memref<1x4x2x128xf32, #tpu.memory_space<vmem>>, vector<1x1x2x128xf32>
    %1571 = vector.shape_cast %1570 : vector<1x1x2x128xf32> to vector<2x128xf32>
    %1572 = arith.subf %1571, %1540 : vector<2x128xf32>
    %1573 = math.absf %1572 : vector<2x128xf32>
    %cst_395 = arith.constant 1.000000e+00 : f32
    %1574 = vector.broadcast %cst_395 : f32 to vector<2x128xf32>
    %1575 = arith.cmpf olt, %1573, %1574 : vector<2x128xf32>
    %cst_396 = arith.constant 5.000000e-01 : f32
    %1576 = vector.broadcast %cst_396 : f32 to vector<2x128xf32>
    %1577 = arith.mulf %1576, %1572 : vector<2x128xf32>
    %1578 = arith.mulf %1577, %1572 : vector<2x128xf32>
    %cst_397 = arith.constant 5.000000e-01 : f32
    %1579 = vector.broadcast %cst_397 : f32 to vector<2x128xf32>
    %1580 = arith.subf %1573, %1579 : vector<2x128xf32>
    %1581 = arith.select %1575, %1578, %1580 : vector<2x128xi1>, vector<2x128xf32>
    %1582 = arith.addf %1569, %1581 : vector<2x128xf32>
    %c0_398 = arith.constant 0 : index
    %c3_399 = arith.constant 3 : index
    %c0_400 = arith.constant 0 : index
    %c0_401 = arith.constant 0 : index
    %1583 = vector.load %arg2[%c0_398, %c3_399, %c0_400, %c0_401] : memref<1x4x2x128xf32, #tpu.memory_space<vmem>>, vector<1x1x2x128xf32>
    %1584 = vector.shape_cast %1583 : vector<1x1x2x128xf32> to vector<2x128xf32>
    %1585 = arith.subf %1584, %1544 : vector<2x128xf32>
    %1586 = math.absf %1585 : vector<2x128xf32>
    %cst_402 = arith.constant 1.000000e+00 : f32
    %1587 = vector.broadcast %cst_402 : f32 to vector<2x128xf32>
    %1588 = arith.cmpf olt, %1586, %1587 : vector<2x128xf32>
    %cst_403 = arith.constant 5.000000e-01 : f32
    %1589 = vector.broadcast %cst_403 : f32 to vector<2x128xf32>
    %1590 = arith.mulf %1589, %1585 : vector<2x128xf32>
    %1591 = arith.mulf %1590, %1585 : vector<2x128xf32>
    %cst_404 = arith.constant 5.000000e-01 : f32
    %1592 = vector.broadcast %cst_404 : f32 to vector<2x128xf32>
    %1593 = arith.subf %1586, %1592 : vector<2x128xf32>
    %1594 = arith.select %1588, %1591, %1593 : vector<2x128xi1>, vector<2x128xf32>
    %1595 = arith.addf %1582, %1594 : vector<2x128xf32>
    %cst_405 = arith.constant 0.000000e+00 : f32
    %1596 = vector.broadcast %cst_405 : f32 to vector<2x128xf32>
    %1597 = arith.select %574, %1595, %1596 : vector<2x128xi1>, vector<2x128xf32>
    %cst_406 = arith.constant dense<0.000000e+00> : vector<128xf32>
    %1598 = vector.multi_reduction <add>, %1597, %cst_406 [0] : vector<2x128xf32> to vector<128xf32>
    %1599 = vector.shape_cast %1598 : vector<128xf32> to vector<1x128xf32>
    %cst_407 = arith.constant dense<0.000000e+00> : vector<1xf32>
    %1600 = vector.multi_reduction <add>, %1599, %cst_407 [1] : vector<1x128xf32> to vector<1xf32>
    %1601 = vector.shape_cast %1600 : vector<1xf32> to vector<1x1xf32>
    %1602 = arith.divf %1601, %582 : vector<1x1xf32>
    %c0_i32_408 = arith.constant 0 : i32
    %1603 = arith.cmpi eq, %arg0, %c0_i32_408 : i32
    %1604 = arith.extui %1603 : i1 to i32
    %c0_i32_409 = arith.constant 0 : i32
    %1605 = arith.cmpi ne, %1604, %c0_i32_409 : i32
    scf.if %1605 {
      %cst_418 = arith.constant 0.000000e+00 : f32
      %1623 = vector.broadcast %cst_418 : f32 to vector<8x128xf32>
      %c0_419 = arith.constant 0 : index
      %c0_420 = arith.constant 0 : index
      %1624 = vector.load %arg5[%c0_419, %c0_420] : memref<8x128xf32, #tpu.memory_space<vmem>>, vector<8x128xf32>
      tpu.vector_store %arg5[%c0_419, %c0_420], %1623 {strides = array<i32>} : memref<8x128xf32, #tpu.memory_space<vmem>>, vector<8x128xf32>,
    } else {
    }
    %1606 = tpu.iota {dimensions = array<i32: 0>} : vector<8x128xi32>
    %c0_410 = arith.constant 0 : index
    %c0_411 = arith.constant 0 : index
    %1607 = vector.load %arg5[%c0_410, %c0_411] : memref<8x128xf32, #tpu.memory_space<vmem>>, vector<8x128xf32>
    %c0_i32_412 = arith.constant 0 : i32
    %1608 = vector.broadcast %c0_i32_412 : i32 to vector<8x128xi32>
    %1609 = arith.cmpi eq, %1606, %1608 : vector<8x128xi32>
    %cst_413 = arith.constant 0.000000e+00 : f32
    %1610 = vector.shape_cast %1528 : vector<1x1xf32> to vector<1x1xf32>
    %1611 = vector.broadcast %1610 : vector<1x1xf32> to vector<8x128xf32>
    %1612 = vector.broadcast %cst_413 : f32 to vector<8x128xf32>
    %1613 = arith.select %1609, %1611, %1612 : vector<8x128xi1>, vector<8x128xf32>
    %c1_i32_414 = arith.constant 1 : i32
    %1614 = vector.broadcast %c1_i32_414 : i32 to vector<8x128xi32>
    %1615 = arith.cmpi eq, %1606, %1614 : vector<8x128xi32>
    %cst_415 = arith.constant 0.000000e+00 : f32
    %1616 = vector.shape_cast %1602 : vector<1x1xf32> to vector<1x1xf32>
    %1617 = vector.broadcast %1616 : vector<1x1xf32> to vector<8x128xf32>
    %1618 = vector.broadcast %cst_415 : f32 to vector<8x128xf32>
    %1619 = arith.select %1615, %1617, %1618 : vector<8x128xi1>, vector<8x128xf32>
    %1620 = arith.addf %1613, %1619 : vector<8x128xf32>
    %1621 = arith.addf %1607, %1620 : vector<8x128xf32>
    %c0_416 = arith.constant 0 : index
    %c0_417 = arith.constant 0 : index
    %1622 = vector.load %arg5[%c0_416, %c0_417] : memref<8x128xf32, #tpu.memory_space<vmem>>, vector<8x128xf32>
    tpu.vector_store %arg5[%c0_416, %c0_417], %1621 {strides = array<i32>} : memref<8x128xf32, #tpu.memory_space<vmem>>, vector<8x128xf32>,
    return
  }
  func.func @transform_0(%arg0: i32) -> (i32, i32, i32, i32) {
    %c0_i32 = arith.constant 0 : i32
    %c0_i32_0 = arith.constant 0 : i32
    %c0_i32_1 = arith.constant 0 : i32
    %c0_i32_2 = arith.constant 0 : i32
    return %arg0, %c0_i32, %c0_i32_0, %c0_i32_1 : i32, i32, i32, i32
  }
  func.func @transform_1(%arg0: i32) -> (i32, i32, i32, i32) {
    %c0_i32 = arith.constant 0 : i32
    %c0_i32_0 = arith.constant 0 : i32
    %c0_i32_1 = arith.constant 0 : i32
    %c0_i32_2 = arith.constant 0 : i32
    return %arg0, %c0_i32, %c0_i32_0, %c0_i32_1 : i32, i32, i32, i32
  }
  func.func @transform_2(%arg0: i32) -> (i32, i32, i32) {
    %c0_i32 = arith.constant 0 : i32
    %c0_i32_0 = arith.constant 0 : i32
    %c0_i32_1 = arith.constant 0 : i32
    %c0_i32_2 = arith.constant 0 : i32
    return %c0_i32, %c0_i32_0, %c0_i32_1 : i32, i32, i32
  }
  func.func @transform_3(%arg0: i32) -> (i32, i32) {
    %c0_i32 = arith.constant 0 : i32
    %c0_i32_0 = arith.constant 0 : i32
    %c0_i32_1 = arith.constant 0 : i32
    return %c0_i32, %c0_i32_0 : i32, i32
  }
  func.func @transform_4(%arg0: i32) -> (i32, i32) {
    %c0_i32 = arith.constant 0 : i32
    %c0_i32_0 = arith.constant 0 : i32
    %c0_i32_1 = arith.constant 0 : i32
    return %c0_i32, %c0_i32_0 : i32, i32
  }
}

</mosaic_0001>

<llo_original>
// kernel: multibox_loss.1
$region0: #{multibox_loss.1}
  #allocation0 [shape = 'u32[]', space=smem, size = 0x4, offset = 0x4, fixed_abs, tag = 'smem constant byte address 0x4 - core index']
  #allocation1 [shape = 'u32[144,128]{1,0:T(1,128)}', space=vmem, size = 0x12000, scoped, tag = 'internal scratch']
  %s0 = inlined_call_operand.vmem [shape: f32[2,4,2,128], index: 0, kind: input, shape index: {}]
  %s1 = inlined_call_operand.vmem [shape: f32[2,4,2,128], index: 1, kind: input, shape index: {}]
  %s2 = inlined_call_operand.vmem [shape: f32[9,2,128], index: 2, kind: input, shape index: {}]
  %s3 = inlined_call_operand.vmem [shape: f32[2,40], index: 3, kind: input, shape index: {}]
  %s4 = inlined_call_operand.vmem [shape: f32[8,128], index: 4, kind: output, shape index: {}]
  %s5 = sld [smem:[#allocation0]]
  $region57: #{multibox_loss.1} parent=0
    _
  %s7 = ssub.s32 1, %s5
  %s8 = scalar_select 0, %s7, %s5
  $region1: #{multibox_loss.1} parent=0
    #allocation2 [shape = 'u8[1024]{0}', space=smem, size = 0x400, scoped, tag = 'input window, operand 3, single buffered']
    #allocation3 [shape = 's32[2]{0}', space=sflag, size = 0x8, scoped, tag = 'scoped memory for multibox_loss.1']
    %9 = vsyncpa [#allocation3], 0
    loop: start=0, step=1, limit=4
    $region2: #{multibox_loss.1} parent=1 // loop_pre_header
      _
    $region3: #{multibox_loss.1} parent=1 // loop_header
      %s11 = sphi 0, %s15
      %p12 = scmp.ge.s32.totalorder %s11, 4
      %s21 = sphi 0, %s23
      %s24 = sphi 0, %s21
      %s25 = sphi 0, %s24
      %s41 = sphi 0, %s25
      %s47 = sphi 0, %s49
      %s50 = sphi 0, %s47
      %s51 = sphi 0, %s50
      %s67 = sphi 0, %s51
      %s71 = sphi 0, %s71
      %s73 = sphi 0, %s71
      %s74 = sphi 0, %s73
      %s88 = sphi 0, %s74
      %s92 = sphi 0, %s92
      %s94 = sphi 0, %s92
      %s95 = sphi 0, %s94
      %s109 = sphi 0, %s95
      %s113 = sphi 0, %s113
      %s115 = sphi 0, %s113
      %s116 = sphi 0, %s115
      %s130 = sphi 0, %s116
    $region4: #{multibox_loss.1} parent=1 // loop_header_branch
      %14 = sbr.rel (%p12) target = $region8
    $region5: #{multibox_loss.1} parent=1 // loop_body
      %s16 = ssub.s32 %s11, 1
      %s17 = ssub.s32 %s11, 2
      %s18 = sadd.s32 %s11, 1
      %s19 = ssub.s32 %s11, %s18
      %p20 = scmp.eq.s32.totalorder %s19, 0
      %s22 = sadd.s32 %s21, 1
      %s23 = scalar_select %p20, %s21, %s22
      %p26 = pneg %p20
      %p27 = scmp.eq.s32.totalorder %s11, 1
      %p28 = por %p26, %p27
      %p29 = scmp.ne.s32.totalorder %s21, %s24
      %p30 = scmp.eq.s32.totalorder %s11, 0
      %p31 = por %p29, %p30
      %p32 = scmp.ne.s32.totalorder %s21, %s24
      %p33 = scmp.eq.s32.totalorder %s16, 1
      %p34 = por %p32, %p33
      %p35 = scmp.ne.s32.totalorder %s24, %s25
      %p36 = scmp.eq.s32.totalorder %s16, 0
      %p37 = por %p35, %p36
      %p38 = scmp.ne.s32.totalorder %s24, %s25
      %p39 = scmp.eq.s32.totalorder %s17, 1
      %p40 = por %p38, %p39
      %p42 = scmp.ne.s32.totalorder %s25, %s41
      %p43 = scmp.eq.s32.totalorder %s17, 0
      %p44 = por %p42, %p43
      %s45 = ssub.s32 %s11, %s18
      %p46 = scmp.eq.s32.totalorder %s45, 0
      %s48 = sadd.s32 %s47, 1
      %s49 = scalar_select %p46, %s47, %s48
      %p52 = pneg %p46
      %p53 = scmp.eq.s32.totalorder %s11, 1
      %p54 = por %p52, %p53
      %p55 = scmp.ne.s32.totalorder %s47, %s50
      %p56 = scmp.eq.s32.totalorder %s11, 0
      %p57 = por %p55, %p56
      %p58 = scmp.ne.s32.totalorder %s47, %s50
      %p59 = scmp.eq.s32.totalorder %s16, 1
      %p60 = por %p58, %p59
      %p61 = scmp.ne.s32.totalorder %s50, %s51
      %p62 = scmp.eq.s32.totalorder %s16, 0
      %p63 = por %p61, %p62
      %p64 = scmp.ne.s32.totalorder %s50, %s51
      %p65 = scmp.eq.s32.totalorder %s17, 1
      %p66 = por %p64, %p65
      %p68 = scmp.ne.s32.totalorder %s51, %s67
      %p69 = scmp.eq.s32.totalorder %s17, 0
      %p70 = por %p68, %p69
      %s72 = sadd.s32 %s71, 1
      %p75 = scmp.eq.s32.totalorder %s11, 1
      %p76 = scmp.ne.s32.totalorder %s71, %s73
      %p77 = scmp.eq.s32.totalorder %s11, 0
      %p78 = por %p76, %p77
      %p79 = scmp.ne.s32.totalorder %s71, %s73
      %p80 = scmp.eq.s32.totalorder %s16, 1
      %p81 = por %p79, %p80
      %p82 = scmp.ne.s32.totalorder %s73, %s74
      %p83 = scmp.eq.s32.totalorder %s16, 0
      %p84 = por %p82, %p83
      %p85 = scmp.ne.s32.totalorder %s73, %s74
      %p86 = scmp.eq.s32.totalorder %s17, 1
      %p87 = por %p85, %p86
      %p89 = scmp.ne.s32.totalorder %s74, %s88
      %p90 = scmp.eq.s32.totalorder %s17, 0
      %p91 = por %p89, %p90
      %s93 = sadd.s32 %s92, 1
      %p96 = scmp.eq.s32.totalorder %s11, 1
      %p97 = scmp.ne.s32.totalorder %s92, %s94
      %p98 = scmp.eq.s32.totalorder %s11, 0
      %p99 = por %p97, %p98
      %p100 = scmp.ne.s32.totalorder %s92, %s94
      %p101 = scmp.eq.s32.totalorder %s16, 1
      %p102 = por %p100, %p101
      %p103 = scmp.ne.s32.totalorder %s94, %s95
      %p104 = scmp.eq.s32.totalorder %s16, 0
      %p105 = por %p103, %p104
      %p106 = scmp.ne.s32.totalorder %s94, %s95
      %p107 = scmp.eq.s32.totalorder %s17, 1
      %p108 = por %p106, %p107
      %p110 = scmp.ne.s32.totalorder %s95, %s109
      %p111 = scmp.eq.s32.totalorder %s17, 0
      %p112 = por %p110, %p111
      %s114 = sadd.s32 %s113, 1
      %p117 = scmp.eq.s32.totalorder %s11, 1
      %p118 = scmp.ne.s32.totalorder %s113, %s115
      %p119 = scmp.eq.s32.totalorder %s11, 0
      %p120 = por %p118, %p119
      %p121 = scmp.ne.s32.totalorder %s113, %s115
      %p122 = scmp.eq.s32.totalorder %s16, 1
      %p123 = por %p121, %p122
      %p124 = scmp.ne.s32.totalorder %s115, %s116
      %p125 = scmp.eq.s32.totalorder %s16, 0
      %p126 = por %p124, %p125
      %p127 = scmp.ne.s32.totalorder %s115, %s116
      %p128 = scmp.eq.s32.totalorder %s17, 1
      %p129 = por %p127, %p128
      %p131 = scmp.ne.s32.totalorder %s116, %s130
      %p132 = scmp.eq.s32.totalorder %s17, 0
      %p133 = por %p131, %p132
      %p134 = scmp.le.s32.totalorder 1, %s11
      %p135 = scmp.lt.s32.totalorder %s11, 3
      %p136 = pnand %p134, %p135
      %p137 = pneg %p136
      // Predicated region
      $region9: #{multibox_loss.1} parent=5 // pred_check
        _
      $region10: #{multibox_loss.1} parent=5 // pred_check_branch
        %139 = sbr.rel (%p136) target = $region12
      $region11: #{multibox_loss.1} parent=5 // pred_region
        %s140 = ssub.s32 %s11, 1
        // Predicated region
        $region13: #{multibox_loss.1} parent=11 // pred_check
          %p141 = pneg %p84
        $region14: #{multibox_loss.1} parent=11 // pred_check_branch
          %143 = sbr.rel (%p141) target = $region16
        $region15: #{multibox_loss.1} parent=11 // pred_region
          _
        $region16: #{multibox_loss.1} parent=11 // pred_fallthru
          _
        // Predicated region
        $region17: #{multibox_loss.1} parent=11 // pred_check
          %p144 = pneg %p105
        $region18: #{multibox_loss.1} parent=11 // pred_check_branch
          %146 = sbr.rel (%p144) target = $region20
        $region19: #{multibox_loss.1} parent=11 // pred_region
          %s148 = ssub.s32 32, 32
          %149 = vsyncadd [#allocation3], %s148
          %s151 = sshll.u32 %s3, 4
          %s152 = int_to_ptr.vmem [resolvable:$true] %s151
          %154 = dma.vmem_to_smem %s152, 32, [#allocation2], [#allocation3]
        $region20: #{multibox_loss.1} parent=11 // pred_fallthru
          _
      $region12: #{multibox_loss.1} parent=5 // pred_fallthru
        _
      %p155 = scmp.lt.s32.totalorder %s11, 2
      // Predicated region
      $region21: #{multibox_loss.1} parent=5 // pred_check
        %p156 = pneg %p155
      $region22: #{multibox_loss.1} parent=5 // pred_check_branch
        %158 = sbr.rel (%p156) target = $region24
      $region23: #{multibox_loss.1} parent=5 // pred_region
        // Predicated region
        $region25: #{multibox_loss.1} parent=23 // pred_check
          %p159 = pneg %p31
        $region26: #{multibox_loss.1} parent=23 // pred_check_branch
          %161 = sbr.rel (%p159) target = $region28
        $region27: #{multibox_loss.1} parent=23 // pred_region
          %p162 = scmp.lt.s32.totalorder %s11, 1
          %s163 = scalar_select %p162, %s11, 1
          %s164 = smul.addr %s163, 4
          %s165 = smul.addr %s164, 2
          %s166 = scalar_lea.vmem %s0, %s165
        $region28: #{multibox_loss.1} parent=23 // pred_fallthru
          _
        // Predicated region
        $region29: #{multibox_loss.1} parent=23 // pred_check
          %p167 = pneg %p57
        $region30: #{multibox_loss.1} parent=23 // pred_check_branch
          %169 = sbr.rel (%p167) target = $region32
        $region31: #{multibox_loss.1} parent=23 // pred_region
          %p170 = scmp.lt.s32.totalorder %s11, 1
          %s171 = scalar_select %p170, %s11, 1
          %s172 = smul.addr %s171, 4
          %s173 = smul.addr %s172, 2
          %s174 = scalar_lea.vmem %s1, %s173
        $region32: #{multibox_loss.1} parent=23 // pred_fallthru
          _
      $region24: #{multibox_loss.1} parent=5 // pred_fallthru
        _
      %p175 = scmp.le.s32.totalorder 1, %s11
      %p176 = scmp.lt.s32.totalorder %s11, 3
      %p177 = pnand %p175, %p176
      %p178 = pneg %p177
      // Predicated region
      $region33: #{multibox_loss.1} parent=5 // pred_check
        _
      $region34: #{multibox_loss.1} parent=5 // pred_check_branch
        %180 = sbr.rel (%p177) target = $region36
      $region35: #{multibox_loss.1} parent=5 // pred_region
        %s181 = ssub.s32 %s11, 1
        // Predicated region
        $region37: #{multibox_loss.1} parent=35 // pred_check
          %p182 = pneg %p105
        $region38: #{multibox_loss.1} parent=35 // pred_check_branch
          %184 = sbr.rel (%p182) target = $region40
        $region39: #{multibox_loss.1} parent=35 // pred_region
          %185 = dma.done [#allocation3], 32
        $region40: #{multibox_loss.1} parent=35 // pred_fallthru
          _
        %186 = sfence
        %p187 = scmp.lt.s32.totalorder %s16, 1
        %s188 = scalar_select %p187, %s16, 1
        %s189 = smul.addr %s188, 4
        %s190 = smul.addr %s189, 2
        %s191 = scalar_lea.vmem %s0, %s190
        %p192 = pneg %p37
        %p193 = pneg %p34
        %p194 = scmp.lt.s32.totalorder %s16, 1
        %s195 = scalar_select %p194, %s16, 1
        %s196 = smul.addr %s195, 4
        %s197 = smul.addr %s196, 2
        %s198 = scalar_lea.vmem %s1, %s197
        %p199 = pneg %p63
        %p200 = pneg %p60
        %p201 = pneg %p84
        %p202 = pneg %p81
        %p203 = pneg %p105
        %p204 = pneg %p102
        %p205 = pneg %p126
        %p206 = pneg %p123
        %p207 = scmp.lt.s32.totalorder %s16, 1
        %s208 = scalar_select %p207, %s16, 1
        %s209 = smul.addr %s208, 4
        %s210 = smul.addr %s209, 2
        %s211 = scalar_lea.vmem %s0, %s210
        %p212 = scmp.lt.s32.totalorder %s16, 1
        %s213 = scalar_select %p212, %s16, 1
        %s214 = smul.addr %s213, 4
        %s215 = smul.addr %s214, 2
        %s216 = scalar_lea.vmem %s1, %s215
        %v217 = vld [vmem:[%s2] sm:$0x3]
        %s218 = scalar_lea.vmem %s2, 2
        %v219 = vld [vmem:[%s218] sm:$0x3]
        %s220 = scalar_lea.vmem %s2, 4
        %v221 = vld [vmem:[%s220] sm:$0x3]
        %s222 = scalar_lea.vmem %s2, 6
        %v223 = vld [vmem:[%s222] sm:$0x3]
        %s224 = scalar_lea.vmem %s2, 8
        %v225 = vld [vmem:[%s224] sm:$0x3]
        %s226 = scalar_lea.vmem %s2, 10
        %v227 = vld [vmem:[%s226] sm:$0x3]
        %s228 = scalar_lea.vmem %s2, 12
        %v229 = vld [vmem:[%s228] sm:$0x3]
        %s230 = scalar_lea.vmem %s2, 14
        %v231 = vld [vmem:[%s230] sm:$0x3]
        %s232 = scalar_lea.vmem %s2, 16
        %v233 = vld [vmem:[%s232] sm:$0x3]
        %v234 = vlaneseq
        %v235 = vshrl.u32 %v234, 7
        %v236 = vlaneseq
        %v237 = vand.u32 %v236, 127
        %v238 = vmul.u32 %v235, 128
        %v239 = vadd.s32 %v238, %v237
        %s240 = smul.u32 %s16, 128
        %s241 = sld [smem:[#allocation2 + %s240]]
        %s242 = sadd.s32 %s240, 1
        %s243 = sld [smem:[#allocation2 + %s242]]
        %s244 = sadd.s32 %s240, 2
        %s245 = sld [smem:[#allocation2 + %s244]]
        %s246 = sadd.s32 %s240, 3
        %s247 = sld [smem:[#allocation2 + %s246]]
        %s248 = sadd.s32 %s240, 4
        %s249 = sld [smem:[#allocation2 + %s248]]
        %v250 = vstv %s241
        %v251 = vmax.f32 %v221, %v250
        %v252 = vstv %s243
        %v253 = vmax.f32 %v223, %v252
        %v254 = vstv %s245
        %v255 = vmin.f32 %v225, %v254
        %v256 = vstv %s247
        %v257 = vmin.f32 %v227, %v256
        %v258 = vsub.f32 %v255, %v251
        %v259 = vmax.f32 %v258, 0.0
        %v260 = vsub.f32 %v257, %v253
        %v261 = vmax.f32 %v260, 0.0
        %v262 = vmul.f32 %v259, %v261
        %s263 = ssub.f32 %s245, %s241
        %s264 = ssub.f32 %s247, %s243
        %s265 = smul.f32 %s263, %s264
        %v266 = vstv %s265
        %v267 = vadd.f32 %v229, %v266
        %v268 = vsub.f32 %v267, %v262
        %v269 = vmax.f32 %v268, 1e-08
        %v270 = vrcp.pop %v269
        %v271 = vmul.f32 %v262, %v270
        %vm272 = vcmask 1041408
        %v273 = vsel %vm272, %v271, -inf
        %v274 = vrot.slane %v273, 4
        %v275 = vmax.f32 %v273, %v274
        %v276 = vrot.slane %v275, 2
        %v277 = vmax.f32 %v275, %v276
        %v278 = vrot.slane %v277, 1
        %v279 = vmax.f32 %v277, %v278
        %280 = vmax.xlane.f32.xlu0 %v279
        %v281 = vpop.xlane.xlu0 %280
        %vm282 = vcmp.eq.f32.partialorder %v271, %v281
        %v283 = vsel %vm282, %v239, 256
        %v284 = vsel %vm272, %v283, 2147483647
        %v285 = vrot.slane %v284, 4
        %vm286 = vcmp.lt.s32.totalorder %v284, %v285
        %v287 = vsel %vm286, %v284, %v285
        %v288 = vrot.slane %v287, 2
        %vm289 = vcmp.lt.s32.totalorder %v287, %v288
        %v290 = vsel %vm289, %v287, %v288
        %v291 = vrot.slane %v290, 1
        %vm292 = vcmp.lt.s32.totalorder %v290, %v291
        %v293 = vsel %vm292, %v290, %v291
        %v294 = vand.u32 %v293, 65535
        %v295 = vshra.s32 %v293, 16
        %v296 = vcvt.s32.f32 %v294
        %v297 = vcvt.s32.f32 %v295
        %298 = vmin.xlane.f32.xlu0 %v297
        %v299 = vpop.xlane.xlu0 %298
        %vm300 = vcmp.eq.f32.partialorder %v297, %v299
        %v301 = vsel %vm300, %v296, inf
        %302 = vmin.xlane.f32.xlu0 %v301
        %v303 = vpop.xlane.xlu0 %302
        %v304 = vcvt.f32.s32 %v303
        %v305 = vcvt.f32.s32 %v299
        %v306 = vshll.u32 %v305, 16
        %v307 = vadd.s32 %v306, %v304
        %vm308 = vcmp.eq.s32.totalorder %v239, %v307
        %v309 = vsel %vm308, 2.0, %v271
        %vm310 = vcmp.gt.f32.partialorder %v309, -1.0
        %v311 = vsel %vm310, %v309, -1.0
        %s312 = sadd.f32 %s241, %s245
        %s313 = smul.f32 %s312, 0.5
        %v314 = vstv %s313
        %v315 = vsel %vm310, %v314, 0.0
        %s316 = sadd.f32 %s243, %s247
        %s317 = smul.f32 %s316, 0.5
        %v318 = vstv %s317
        %v319 = vsel %vm310, %v318, 0.0
        %v320 = vstv %s263
        %v321 = vsel %vm310, %v320, 1.0
        %v322 = vstv %s264
        %v323 = vsel %vm310, %v322, 1.0
        %v324 = vstv %s249
        %v325 = vsel %vm310, %v324, 0.0
        %s326 = sadd.s32 %s240, 5
        %s327 = sld [smem:[#allocation2 + %s326]]
        %s328 = sadd.s32 %s240, 6
        %s329 = sld [smem:[#allocation2 + %s328]]
        %s330 = sadd.s32 %s240, 7
        %s331 = sld [smem:[#allocation2 + %s330]]
        %s332 = sadd.s32 %s240, 8
        %s333 = sld [smem:[#allocation2 + %s332]]
        %s334 = sadd.s32 %s240, 9
        %s335 = sld [smem:[#allocation2 + %s334]]
        %v336 = vstv %s327
        %v337 = vmax.f32 %v221, %v336
        %v338 = vstv %s329
        %v339 = vmax.f32 %v223, %v338
        %v340 = vstv %s331
        %v341 = vmin.f32 %v225, %v340
        %v342 = vstv %s333
        %v343 = vmin.f32 %v227, %v342
        %v344 = vsub.f32 %v341, %v337
        %v345 = vmax.f32 %v344, 0.0
        %v346 = vsub.f32 %v343, %v339
        %v347 = vmax.f32 %v346, 0.0
        %v348 = vmul.f32 %v345, %v347
        %s349 = ssub.f32 %s331, %s327
        %s350 = ssub.f32 %s333, %s329
        %s351 = smul.f32 %s349, %s350
        %v352 = vstv %s351
        %v353 = vadd.f32 %v229, %v352
        %v354 = vsub.f32 %v353, %v348
        %v355 = vmax.f32 %v354, 1e-08
        %v356 = vrcp.pop %v355
        %v357 = vmul.f32 %v348, %v356
        %v358 = vsel %vm272, %v357, -inf
        %v359 = vrot.slane %v358, 4
        %v360 = vmax.f32 %v358, %v359
        %v361 = vrot.slane %v360, 2
        %v362 = vmax.f32 %v360, %v361
        %v363 = vrot.slane %v362, 1
        %v364 = vmax.f32 %v362, %v363
        %365 = vmax.xlane.f32.xlu0 %v364
        %v366 = vpop.xlane.xlu0 %365
        %vm367 = vcmp.eq.f32.partialorder %v357, %v366
        %v368 = vsel %vm367, %v239, 256
        %v369 = vsel %vm272, %v368, 2147483647
        %v370 = vrot.slane %v369, 4
        %vm371 = vcmp.lt.s32.totalorder %v369, %v370
        %v372 = vsel %vm371, %v369, %v370
        %v373 = vrot.slane %v372, 2
        %vm374 = vcmp.lt.s32.totalorder %v372, %v373
        %v375 = vsel %vm374, %v372, %v373
        %v376 = vrot.slane %v375, 1
        %vm377 = vcmp.lt.s32.totalorder %v375, %v376
        %v378 = vsel %vm377, %v375, %v376
        %v379 = vand.u32 %v378, 65535
        %v380 = vshra.s32 %v378, 16
        %v381 = vcvt.s32.f32 %v379
        %v382 = vcvt.s32.f32 %v380
        %383 = vmin.xlane.f32.xlu0 %v382
        %v384 = vpop.xlane.xlu0 %383
        %vm385 = vcmp.eq.f32.partialorder %v382, %v384
        %v386 = vsel %vm385, %v381, inf
        %387 = vmin.xlane.f32.xlu0 %v386
        %v388 = vpop.xlane.xlu0 %387
        %v389 = vcvt.f32.s32 %v388
        %v390 = vcvt.f32.s32 %v384
        %v391 = vshll.u32 %v390, 16
        %v392 = vadd.s32 %v391, %v389
        %vm393 = vcmp.eq.s32.totalorder %v239, %v392
        %v394 = vsel %vm393, 2.0, %v357
        %vm395 = vcmp.gt.f32.partialorder %v394, %v311
        %v396 = vsel %vm395, %v394, %v311
        %s397 = sadd.f32 %s327, %s331
        %s398 = smul.f32 %s397, 0.5
        %v399 = vstv %s398
        %v400 = vsel %vm395, %v399, %v315
        %s401 = sadd.f32 %s329, %s333
        %s402 = smul.f32 %s401, 0.5
        %v403 = vstv %s402
        %v404 = vsel %vm395, %v403, %v319
        %v405 = vstv %s349
        %v406 = vsel %vm395, %v405, %v321
        %v407 = vstv %s350
        %v408 = vsel %vm395, %v407, %v323
        %v409 = vstv %s335
        %v410 = vsel %vm395, %v409, %v325
        %s411 = sadd.s32 %s240, 10
        %s412 = sld [smem:[#allocation2 + %s411]]
        %s413 = sadd.s32 %s240, 11
        %s414 = sld [smem:[#allocation2 + %s413]]
        %s415 = sadd.s32 %s240, 12
        %s416 = sld [smem:[#allocation2 + %s415]]
        %s417 = sadd.s32 %s240, 13
        %s418 = sld [smem:[#allocation2 + %s417]]
        %s419 = sadd.s32 %s240, 14
        %s420 = sld [smem:[#allocation2 + %s419]]
        %v421 = vstv %s412
        %v422 = vmax.f32 %v221, %v421
        %v423 = vstv %s414
        %v424 = vmax.f32 %v223, %v423
        %v425 = vstv %s416
        %v426 = vmin.f32 %v225, %v425
        %v427 = vstv %s418
        %v428 = vmin.f32 %v227, %v427
        %v429 = vsub.f32 %v426, %v422
        %v430 = vmax.f32 %v429, 0.0
        %v431 = vsub.f32 %v428, %v424
        %v432 = vmax.f32 %v431, 0.0
        %v433 = vmul.f32 %v430, %v432
        %s434 = ssub.f32 %s416, %s412
        %s435 = ssub.f32 %s418, %s414
        %s436 = smul.f32 %s434, %s435
        %v437 = vstv %s436
        %v438 = vadd.f32 %v229, %v437
        %v439 = vsub.f32 %v438, %v433
        %v440 = vmax.f32 %v439, 1e-08
        %v441 = vrcp.pop %v440
        %v442 = vmul.f32 %v433, %v441
        %v443 = vsel %vm272, %v442, -inf
        %v444 = vrot.slane %v443, 4
        %v445 = vmax.f32 %v443, %v444
        %v446 = vrot.slane %v445, 2
        %v447 = vmax.f32 %v445, %v446
        %v448 = vrot.slane %v447, 1
        %v449 = vmax.f32 %v447, %v448
        %450 = vmax.xlane.f32.xlu0 %v449
        %v451 = vpop.xlane.xlu0 %450
        %vm452 = vcmp.eq.f32.partialorder %v442, %v451
        %v453 = vsel %vm452, %v239, 256
        %v454 = vsel %vm272, %v453, 2147483647
        %v455 = vrot.slane %v454, 4
        %vm456 = vcmp.lt.s32.totalorder %v454, %v455
        %v457 = vsel %vm456, %v454, %v455
        %v458 = vrot.slane %v457, 2
        %vm459 = vcmp.lt.s32.totalorder %v457, %v458
        %v460 = vsel %vm459, %v457, %v458
        %v461 = vrot.slane %v460, 1
        %vm462 = vcmp.lt.s32.totalorder %v460, %v461
        %v463 = vsel %vm462, %v460, %v461
        %v464 = vand.u32 %v463, 65535
        %v465 = vshra.s32 %v463, 16
        %v466 = vcvt.s32.f32 %v464
        %v467 = vcvt.s32.f32 %v465
        %468 = vmin.xlane.f32.xlu0 %v467
        %v469 = vpop.xlane.xlu0 %468
        %vm470 = vcmp.eq.f32.partialorder %v467, %v469
        %v471 = vsel %vm470, %v466, inf
        %472 = vmin.xlane.f32.xlu0 %v471
        %v473 = vpop.xlane.xlu0 %472
        %v474 = vcvt.f32.s32 %v473
        %v475 = vcvt.f32.s32 %v469
        %v476 = vshll.u32 %v475, 16
        %v477 = vadd.s32 %v476, %v474
        %vm478 = vcmp.eq.s32.totalorder %v239, %v477
        %v479 = vsel %vm478, 2.0, %v442
        %vm480 = vcmp.gt.f32.partialorder %v479, %v396
        %v481 = vsel %vm480, %v479, %v396
        %s482 = sadd.f32 %s412, %s416
        %s483 = smul.f32 %s482, 0.5
        %v484 = vstv %s483
        %v485 = vsel %vm480, %v484, %v400
        %s486 = sadd.f32 %s414, %s418
        %s487 = smul.f32 %s486, 0.5
        %v488 = vstv %s487
        %v489 = vsel %vm480, %v488, %v404
        %v490 = vstv %s434
        %v491 = vsel %vm480, %v490, %v406
        %v492 = vstv %s435
        %v493 = vsel %vm480, %v492, %v408
        %v494 = vstv %s420
        %v495 = vsel %vm480, %v494, %v410
        %s496 = sadd.s32 %s240, 15
        %s497 = sld [smem:[#allocation2 + %s496]]
        %s498 = sadd.s32 %s240, 16
        %s499 = sld [smem:[#allocation2 + %s498]]
        %s500 = sadd.s32 %s240, 17
        %s501 = sld [smem:[#allocation2 + %s500]]
        %s502 = sadd.s32 %s240, 18
        %s503 = sld [smem:[#allocation2 + %s502]]
        %s504 = sadd.s32 %s240, 19
        %s505 = sld [smem:[#allocation2 + %s504]]
        %v506 = vstv %s497
        %v507 = vmax.f32 %v221, %v506
        %v508 = vstv %s499
        %v509 = vmax.f32 %v223, %v508
        %v510 = vstv %s501
        %v511 = vmin.f32 %v225, %v510
        %v512 = vstv %s503
        %v513 = vmin.f32 %v227, %v512
        %v514 = vsub.f32 %v511, %v507
        %v515 = vmax.f32 %v514, 0.0
        %v516 = vsub.f32 %v513, %v509
        %v517 = vmax.f32 %v516, 0.0
        %v518 = vmul.f32 %v515, %v517
        %s519 = ssub.f32 %s501, %s497
        %s520 = ssub.f32 %s503, %s499
        %s521 = smul.f32 %s519, %s520
        %v522 = vstv %s521
        %v523 = vadd.f32 %v229, %v522
        %v524 = vsub.f32 %v523, %v518
        %v525 = vmax.f32 %v524, 1e-08
        %v526 = vrcp.pop %v525
        %v527 = vmul.f32 %v518, %v526
        %v528 = vsel %vm272, %v527, -inf
        %v529 = vrot.slane %v528, 4
        %v530 = vmax.f32 %v528, %v529
        %v531 = vrot.slane %v530, 2
        %v532 = vmax.f32 %v530, %v531
        %v533 = vrot.slane %v532, 1
        %v534 = vmax.f32 %v532, %v533
        %535 = vmax.xlane.f32.xlu0 %v534
        %v536 = vpop.xlane.xlu0 %535
        %vm537 = vcmp.eq.f32.partialorder %v527, %v536
        %v538 = vsel %vm537, %v239, 256
        %v539 = vsel %vm272, %v538, 2147483647
        %v540 = vrot.slane %v539, 4
        %vm541 = vcmp.lt.s32.totalorder %v539, %v540
        %v542 = vsel %vm541, %v539, %v540
        %v543 = vrot.slane %v542, 2
        %vm544 = vcmp.lt.s32.totalorder %v542, %v543
        %v545 = vsel %vm544, %v542, %v543
        %v546 = vrot.slane %v545, 1
        %vm547 = vcmp.lt.s32.totalorder %v545, %v546
        %v548 = vsel %vm547, %v545, %v546
        %v549 = vand.u32 %v548, 65535
        %v550 = vshra.s32 %v548, 16
        %v551 = vcvt.s32.f32 %v549
        %v552 = vcvt.s32.f32 %v550
        %553 = vmin.xlane.f32.xlu0 %v552
        %v554 = vpop.xlane.xlu0 %553
        %vm555 = vcmp.eq.f32.partialorder %v552, %v554
        %v556 = vsel %vm555, %v551, inf
        %557 = vmin.xlane.f32.xlu0 %v556
        %v558 = vpop.xlane.xlu0 %557
        %v559 = vcvt.f32.s32 %v558
        %v560 = vcvt.f32.s32 %v554
        %v561 = vshll.u32 %v560, 16
        %v562 = vadd.s32 %v561, %v559
        %vm563 = vcmp.eq.s32.totalorder %v239, %v562
        %v564 = vsel %vm563, 2.0, %v527
        %vm565 = vcmp.gt.f32.partialorder %v564, %v481
        %v566 = vsel %vm565, %v564, %v481
        %s567 = sadd.f32 %s497, %s501
        %s568 = smul.f32 %s567, 0.5
        %v569 = vstv %s568
        %v570 = vsel %vm565, %v569, %v485
        %s571 = sadd.f32 %s499, %s503
        %s572 = smul.f32 %s571, 0.5
        %v573 = vstv %s572
        %v574 = vsel %vm565, %v573, %v489
        %v575 = vstv %s519
        %v576 = vsel %vm565, %v575, %v491
        %v577 = vstv %s520
        %v578 = vsel %vm565, %v577, %v493
        %v579 = vstv %s505
        %v580 = vsel %vm565, %v579, %v495
        %s581 = sadd.s32 %s240, 20
        %s582 = sld [smem:[#allocation2 + %s581]]
        %s583 = sadd.s32 %s240, 21
        %s584 = sld [smem:[#allocation2 + %s583]]
        %s585 = sadd.s32 %s240, 22
        %s586 = sld [smem:[#allocation2 + %s585]]
        %s587 = sadd.s32 %s240, 23
        %s588 = sld [smem:[#allocation2 + %s587]]
        %s589 = sadd.s32 %s240, 24
        %s590 = sld [smem:[#allocation2 + %s589]]
        %v591 = vstv %s582
        %v592 = vmax.f32 %v221, %v591
        %v593 = vstv %s584
        %v594 = vmax.f32 %v223, %v593
        %v595 = vstv %s586
        %v596 = vmin.f32 %v225, %v595
        %v597 = vstv %s588
        %v598 = vmin.f32 %v227, %v597
        %v599 = vsub.f32 %v596, %v592
        %v600 = vmax.f32 %v599, 0.0
        %v601 = vsub.f32 %v598, %v594
        %v602 = vmax.f32 %v601, 0.0
        %v603 = vmul.f32 %v600, %v602
        %s604 = ssub.f32 %s586, %s582
        %s605 = ssub.f32 %s588, %s584
        %s606 = smul.f32 %s604, %s605
        %v607 = vstv %s606
        %v608 = vadd.f32 %v229, %v607
        %v609 = vsub.f32 %v608, %v603
        %v610 = vmax.f32 %v609, 1e-08
        %v611 = vrcp.pop %v610
        %v612 = vmul.f32 %v603, %v611
        %v613 = vsel %vm272, %v612, -inf
        %v614 = vrot.slane %v613, 4
        %v615 = vmax.f32 %v613, %v614
        %v616 = vrot.slane %v615, 2
        %v617 = vmax.f32 %v615, %v616
        %v618 = vrot.slane %v617, 1
        %v619 = vmax.f32 %v617, %v618
        %620 = vmax.xlane.f32.xlu0 %v619
        %v621 = vpop.xlane.xlu0 %620
        %vm622 = vcmp.eq.f32.partialorder %v612, %v621
        %v623 = vsel %vm622, %v239, 256
        %v624 = vsel %vm272, %v623, 2147483647
        %v625 = vrot.slane %v624, 4
        %vm626 = vcmp.lt.s32.totalorder %v624, %v625
        %v627 = vsel %vm626, %v624, %v625
        %v628 = vrot.slane %v627, 2
        %vm629 = vcmp.lt.s32.totalorder %v627, %v628
        %v630 = vsel %vm629, %v627, %v628
        %v631 = vrot.slane %v630, 1
        %vm632 = vcmp.lt.s32.totalorder %v630, %v631
        %v633 = vsel %vm632, %v630, %v631
        %v634 = vand.u32 %v633, 65535
        %v635 = vshra.s32 %v633, 16
        %v636 = vcvt.s32.f32 %v634
        %v637 = vcvt.s32.f32 %v635
        %638 = vmin.xlane.f32.xlu0 %v637
        %v639 = vpop.xlane.xlu0 %638
        %vm640 = vcmp.eq.f32.partialorder %v637, %v639
        %v641 = vsel %vm640, %v636, inf
        %642 = vmin.xlane.f32.xlu0 %v641
        %v643 = vpop.xlane.xlu0 %642
        %v644 = vcvt.f32.s32 %v643
        %v645 = vcvt.f32.s32 %v639
        %v646 = vshll.u32 %v645, 16
        %v647 = vadd.s32 %v646, %v644
        %vm648 = vcmp.eq.s32.totalorder %v239, %v647
        %v649 = vsel %vm648, 2.0, %v612
        %vm650 = vcmp.gt.f32.partialorder %v649, %v566
        %v651 = vsel %vm650, %v649, %v566
        %s652 = sadd.f32 %s582, %s586
        %s653 = smul.f32 %s652, 0.5
        %v654 = vstv %s653
        %v655 = vsel %vm650, %v654, %v570
        %s656 = sadd.f32 %s584, %s588
        %s657 = smul.f32 %s656, 0.5
        %v658 = vstv %s657
        %v659 = vsel %vm650, %v658, %v574
        %v660 = vstv %s604
        %v661 = vsel %vm650, %v660, %v576
        %v662 = vstv %s605
        %v663 = vsel %vm650, %v662, %v578
        %v664 = vstv %s590
        %v665 = vsel %vm650, %v664, %v580
        %s666 = sadd.s32 %s240, 25
        %s667 = sld [smem:[#allocation2 + %s666]]
        %s668 = sadd.s32 %s240, 26
        %s669 = sld [smem:[#allocation2 + %s668]]
        %s670 = sadd.s32 %s240, 27
        %s671 = sld [smem:[#allocation2 + %s670]]
        %s672 = sadd.s32 %s240, 28
        %s673 = sld [smem:[#allocation2 + %s672]]
        %s674 = sadd.s32 %s240, 29
        %s675 = sld [smem:[#allocation2 + %s674]]
        %v676 = vstv %s667
        %v677 = vmax.f32 %v221, %v676
        %v678 = vstv %s669
        %v679 = vmax.f32 %v223, %v678
        %v680 = vstv %s671
        %v681 = vmin.f32 %v225, %v680
        %v682 = vstv %s673
        %v683 = vmin.f32 %v227, %v682
        %v684 = vsub.f32 %v681, %v677
        %v685 = vmax.f32 %v684, 0.0
        %v686 = vsub.f32 %v683, %v679
        %v687 = vmax.f32 %v686, 0.0
        %v688 = vmul.f32 %v685, %v687
        %s689 = ssub.f32 %s671, %s667
        %s690 = ssub.f32 %s673, %s669
        %s691 = smul.f32 %s689, %s690
        %v692 = vstv %s691
        %v693 = vadd.f32 %v229, %v692
        %v694 = vsub.f32 %v693, %v688
        %v695 = vmax.f32 %v694, 1e-08
        %v696 = vrcp.pop %v695
        %v697 = vmul.f32 %v688, %v696
        %v698 = vsel %vm272, %v697, -inf
        %v699 = vrot.slane %v698, 4
        %v700 = vmax.f32 %v698, %v699
        %v701 = vrot.slane %v700, 2
        %v702 = vmax.f32 %v700, %v701
        %v703 = vrot.slane %v702, 1
        %v704 = vmax.f32 %v702, %v703
        %705 = vmax.xlane.f32.xlu0 %v704
        %v706 = vpop.xlane.xlu0 %705
        %vm707 = vcmp.eq.f32.partialorder %v697, %v706
        %v708 = vsel %vm707, %v239, 256
        %v709 = vsel %vm272, %v708, 2147483647
        %v710 = vrot.slane %v709, 4
        %vm711 = vcmp.lt.s32.totalorder %v709, %v710
        %v712 = vsel %vm711, %v709, %v710
        %v713 = vrot.slane %v712, 2
        %vm714 = vcmp.lt.s32.totalorder %v712, %v713
        %v715 = vsel %vm714, %v712, %v713
        %v716 = vrot.slane %v715, 1
        %vm717 = vcmp.lt.s32.totalorder %v715, %v716
        %v718 = vsel %vm717, %v715, %v716
        %v719 = vand.u32 %v718, 65535
        %v720 = vshra.s32 %v718, 16
        %v721 = vcvt.s32.f32 %v719
        %v722 = vcvt.s32.f32 %v720
        %723 = vmin.xlane.f32.xlu0 %v722
        %v724 = vpop.xlane.xlu0 %723
        %vm725 = vcmp.eq.f32.partialorder %v722, %v724
        %v726 = vsel %vm725, %v721, inf
        %727 = vmin.xlane.f32.xlu0 %v726
        %v728 = vpop.xlane.xlu0 %727
        %v729 = vcvt.f32.s32 %v728
        %v730 = vcvt.f32.s32 %v724
        %v731 = vshll.u32 %v730, 16
        %v732 = vadd.s32 %v731, %v729
        %vm733 = vcmp.eq.s32.totalorder %v239, %v732
        %v734 = vsel %vm733, 2.0, %v697
        %vm735 = vcmp.gt.f32.partialorder %v734, %v651
        %v736 = vsel %vm735, %v734, %v651
        %s737 = sadd.f32 %s667, %s671
        %s738 = smul.f32 %s737, 0.5
        %v739 = vstv %s738
        %v740 = vsel %vm735, %v739, %v655
        %s741 = sadd.f32 %s669, %s673
        %s742 = smul.f32 %s741, 0.5
        %v743 = vstv %s742
        %v744 = vsel %vm735, %v743, %v659
        %v745 = vstv %s689
        %v746 = vsel %vm735, %v745, %v661
        %v747 = vstv %s690
        %v748 = vsel %vm735, %v747, %v663
        %v749 = vstv %s675
        %v750 = vsel %vm735, %v749, %v665
        %s751 = sadd.s32 %s240, 30
        %s752 = sld [smem:[#allocation2 + %s751]]
        %s753 = sadd.s32 %s240, 31
        %s754 = sld [smem:[#allocation2 + %s753]]
        %s755 = sadd.s32 %s240, 32
        %s756 = sld [smem:[#allocation2 + %s755]]
        %s757 = sadd.s32 %s240, 33
        %s758 = sld [smem:[#allocation2 + %s757]]
        %s759 = sadd.s32 %s240, 34
        %s760 = sld [smem:[#allocation2 + %s759]]
        %v761 = vstv %s752
        %v762 = vmax.f32 %v221, %v761
        %v763 = vstv %s754
        %v764 = vmax.f32 %v223, %v763
        %v765 = vstv %s756
        %v766 = vmin.f32 %v225, %v765
        %v767 = vstv %s758
        %v768 = vmin.f32 %v227, %v767
        %v769 = vsub.f32 %v766, %v762
        %v770 = vmax.f32 %v769, 0.0
        %v771 = vsub.f32 %v768, %v764
        %v772 = vmax.f32 %v771, 0.0
        %v773 = vmul.f32 %v770, %v772
        %s774 = ssub.f32 %s756, %s752
        %s775 = ssub.f32 %s758, %s754
        %s776 = smul.f32 %s774, %s775
        %v777 = vstv %s776
        %v778 = vadd.f32 %v229, %v777
        %v779 = vsub.f32 %v778, %v773
        %v780 = vmax.f32 %v779, 1e-08
        %v781 = vrcp.pop %v780
        %v782 = vmul.f32 %v773, %v781
        %v783 = vsel %vm272, %v782, -inf
        %v784 = vrot.slane %v783, 4
        %v785 = vmax.f32 %v783, %v784
        %v786 = vrot.slane %v785, 2
        %v787 = vmax.f32 %v785, %v786
        %v788 = vrot.slane %v787, 1
        %v789 = vmax.f32 %v787, %v788
        %790 = vmax.xlane.f32.xlu0 %v789
        %v791 = vpop.xlane.xlu0 %790
        %vm792 = vcmp.eq.f32.partialorder %v782, %v791
        %v793 = vsel %vm792, %v239, 256
        %v794 = vsel %vm272, %v793, 2147483647
        %v795 = vrot.slane %v794, 4
        %vm796 = vcmp.lt.s32.totalorder %v794, %v795
        %v797 = vsel %vm796, %v794, %v795
        %v798 = vrot.slane %v797, 2
        %vm799 = vcmp.lt.s32.totalorder %v797, %v798
        %v800 = vsel %vm799, %v797, %v798
        %v801 = vrot.slane %v800, 1
        %vm802 = vcmp.lt.s32.totalorder %v800, %v801
        %v803 = vsel %vm802, %v800, %v801
        %v804 = vand.u32 %v803, 65535
        %v805 = vshra.s32 %v803, 16
        %v806 = vcvt.s32.f32 %v804
        %v807 = vcvt.s32.f32 %v805
        %808 = vmin.xlane.f32.xlu0 %v807
        %v809 = vpop.xlane.xlu0 %808
        %vm810 = vcmp.eq.f32.partialorder %v807, %v809
        %v811 = vsel %vm810, %v806, inf
        %812 = vmin.xlane.f32.xlu0 %v811
        %v813 = vpop.xlane.xlu0 %812
        %v814 = vcvt.f32.s32 %v813
        %v815 = vcvt.f32.s32 %v809
        %v816 = vshll.u32 %v815, 16
        %v817 = vadd.s32 %v816, %v814
        %vm818 = vcmp.eq.s32.totalorder %v239, %v817
        %v819 = vsel %vm818, 2.0, %v782
        %vm820 = vcmp.gt.f32.partialorder %v819, %v736
        %v821 = vsel %vm820, %v819, %v736
        %s822 = sadd.f32 %s752, %s756
        %s823 = smul.f32 %s822, 0.5
        %v824 = vstv %s823
        %v825 = vsel %vm820, %v824, %v740
        %s826 = sadd.f32 %s754, %s758
        %s827 = smul.f32 %s826, 0.5
        %v828 = vstv %s827
        %v829 = vsel %vm820, %v828, %v744
        %v830 = vstv %s774
        %v831 = vsel %vm820, %v830, %v746
        %v832 = vstv %s775
        %v833 = vsel %vm820, %v832, %v748
        %v834 = vstv %s760
        %v835 = vsel %vm820, %v834, %v750
        %s836 = sadd.s32 %s240, 35
        %s837 = sld [smem:[#allocation2 + %s836]]
        %s838 = sadd.s32 %s240, 36
        %s839 = sld [smem:[#allocation2 + %s838]]
        %s840 = sadd.s32 %s240, 37
        %s841 = sld [smem:[#allocation2 + %s840]]
        %s842 = sadd.s32 %s240, 38
        %s843 = sld [smem:[#allocation2 + %s842]]
        %s844 = sadd.s32 %s240, 39
        %s845 = sld [smem:[#allocation2 + %s844]]
        %v846 = vstv %s837
        %v847 = vmax.f32 %v221, %v846
        %v848 = vstv %s839
        %v849 = vmax.f32 %v223, %v848
        %v850 = vstv %s841
        %v851 = vmin.f32 %v225, %v850
        %v852 = vstv %s843
        %v853 = vmin.f32 %v227, %v852
        %v854 = vsub.f32 %v851, %v847
        %v855 = vmax.f32 %v854, 0.0
        %v856 = vsub.f32 %v853, %v849
        %v857 = vmax.f32 %v856, 0.0
        %v858 = vmul.f32 %v855, %v857
        %s859 = ssub.f32 %s841, %s837
        %s860 = ssub.f32 %s843, %s839
        %s861 = smul.f32 %s859, %s860
        %v862 = vstv %s861
        %v863 = vadd.f32 %v229, %v862
        %v864 = vsub.f32 %v863, %v858
        %v865 = vmax.f32 %v864, 1e-08
        %v866 = vrcp.pop %v865
        %v867 = vmul.f32 %v858, %v866
        %v868 = vsel %vm272, %v867, -inf
        %v869 = vrot.slane %v868, 4
        %v870 = vmax.f32 %v868, %v869
        %v871 = vrot.slane %v870, 2
        %v872 = vmax.f32 %v870, %v871
        %v873 = vrot.slane %v872, 1
        %v874 = vmax.f32 %v872, %v873
        %875 = vmax.xlane.f32.xlu0 %v874
        %v876 = vpop.xlane.xlu0 %875
        %vm877 = vcmp.eq.f32.partialorder %v867, %v876
        %v878 = vsel %vm877, %v239, 256
        %v879 = vsel %vm272, %v878, 2147483647
        %v880 = vrot.slane %v879, 4
        %vm881 = vcmp.lt.s32.totalorder %v879, %v880
        %v882 = vsel %vm881, %v879, %v880
        %v883 = vrot.slane %v882, 2
        %vm884 = vcmp.lt.s32.totalorder %v882, %v883
        %v885 = vsel %vm884, %v882, %v883
        %v886 = vrot.slane %v885, 1
        %vm887 = vcmp.lt.s32.totalorder %v885, %v886
        %v888 = vsel %vm887, %v885, %v886
        %v889 = vand.u32 %v888, 65535
        %v890 = vshra.s32 %v888, 16
        %v891 = vcvt.s32.f32 %v889
        %v892 = vcvt.s32.f32 %v890
        %893 = vmin.xlane.f32.xlu0 %v892
        %v894 = vpop.xlane.xlu0 %893
        %vm895 = vcmp.eq.f32.partialorder %v892, %v894
        %v896 = vsel %vm895, %v891, inf
        %897 = vmin.xlane.f32.xlu0 %v896
        %v898 = vpop.xlane.xlu0 %897
        %v899 = vcvt.f32.s32 %v898
        %v900 = vcvt.f32.s32 %v894
        %v901 = vshll.u32 %v900, 16
        %v902 = vadd.s32 %v901, %v899
        %vm903 = vcmp.eq.s32.totalorder %v239, %v902
        %v904 = vsel %vm903, 2.0, %v867
        %vm905 = vcmp.gt.f32.partialorder %v904, %v821
        %v906 = vsel %vm905, %v904, %v821
        %s907 = sadd.f32 %s837, %s841
        %s908 = smul.f32 %s907, 0.5
        %v909 = vstv %s908
        %v910 = vsel %vm905, %v909, %v825
        %s911 = sadd.f32 %s839, %s843
        %s912 = smul.f32 %s911, 0.5
        %v913 = vstv %s912
        %v914 = vsel %vm905, %v913, %v829
        %v915 = vstv %s859
        %v916 = vsel %vm905, %v915, %v831
        %v917 = vstv %s860
        %v918 = vsel %vm905, %v917, %v833
        %v919 = vstv %s845
        %v920 = vsel %vm905, %v919, %v835
        %vm921 = vcmp.ge.f32.partialorder %v906, 0.5
        %v922 = vsel %vm921, 1, 0
        %v923 = vcvt.s32.f32 %v922
        %v924 = vsel %vm272, %v923, 0.0
        %v925 = vrot.slane %v924, 4
        %v926 = vadd.f32 %v924, %v925
        %v927 = vrot.slane %v926, 2
        %v928 = vadd.f32 %v926, %v927
        %v929 = vrot.slane %v928, 1
        %v930 = vadd.f32 %v928, %v929
        %931 = vadd.xlane.f32.xlu0 %v930
        %v932 = vpop.xlane.xlu0 %931
        %v933 = vmax.f32 %v932, 1.0
        %v934 = vsel %vm921, %v920, 0.0
        %v935 = vld [vmem:[%s211] sm:$0x3]
        %s936 = scalar_lea.vmem %s211, 2
        %v937 = vld [vmem:[%s936] sm:$0x3]
        %s938 = scalar_lea.vmem %s211, 4
        %v939 = vld [vmem:[%s938] sm:$0x3]
        %s940 = scalar_lea.vmem %s211, 6
        %v941 = vld [vmem:[%s940] sm:$0x3]
        %v942 = vmax.f32 %v935, %v937
        %v943 = vmax.f32 %v942, %v939
        %v944 = vmax.f32 %v943, %v941
        %v945 = vsub.f32 %v935, %v944
        %v946 = vmul.f32 %v945, 1.442695
        %v947 = vpow.pop %v946
        %v948 = vsub.f32 %v937, %v944
        %v949 = vmul.f32 %v948, 1.442695
        %v950 = vpow.pop %v949
        %v951 = vadd.f32 %v947, %v950
        %v952 = vsub.f32 %v939, %v944
        %v953 = vmul.f32 %v952, 1.442695
        %v954 = vpow.pop %v953
        %v955 = vadd.f32 %v951, %v954
        %v956 = vsub.f32 %v941, %v944
        %v957 = vmul.f32 %v956, 1.442695
        %v958 = vpow.pop %v957
        %v959 = vadd.f32 %v955, %v958
        %v960 = vlog2.pop %v959
        %v961 = vmul.f32 %v960, 0.6931472
        %v962 = vadd.f32 %v944, %v961
        %v963 = vsub.f32 %v962, %v935
        %v964 = vmax.f32 %v963, 0.0
        %v965 = vcvt.f32.s32.to.zero.pseudo %v934
        %vm966 = vcmp.eq.s32.totalorder %v965, 0
        %v967 = vsel %vm966, %v935, 0.0
        %vm968 = vcmp.eq.s32.totalorder %v965, 1
        %v969 = vsel %vm968, %v937, 0.0
        %v970 = vadd.f32 %v967, %v969
        %vm971 = vcmp.eq.s32.totalorder %v965, 2
        %v972 = vsel %vm971, %v939, 0.0
        %v973 = vadd.f32 %v970, %v972
        %vm974 = vcmp.eq.s32.totalorder %v965, 3
        %v975 = vsel %vm974, %v941, 0.0
        %v976 = vadd.f32 %v973, %v975
        %v977 = vsub.f32 %v962, %v976
        %vm978 = vcmp.gt.f32.partialorder %v934, 0.0
        %v979 = vsel %vm978, 1, 0
        %v980 = vcvt.s32.f32 %v979
        %v981 = vsel %vm272, %v980, 0.0
        %v982 = vrot.slane %v981, 4
        %v983 = vadd.f32 %v981, %v982
        %v984 = vrot.slane %v983, 2
        %v985 = vadd.f32 %v983, %v984
        %v986 = vrot.slane %v985, 1
        %v987 = vadd.f32 %v985, %v986
        %988 = vadd.xlane.f32.xlu0 %v987
        %v989 = vpop.xlane.xlu0 %988
        %v990 = vmul.f32 %v989, 3.0
        %v992 = vsel %vm978, 4294967295, %v964
        %vm993 = vcmp.gt.s32.totalorder %v992, 1069547519
        %v994 = vsel %vm993, 1, 0
        %v995 = vcvt.s32.f32 %v994
        %v996 = vsel %vm272, %v995, 0.0
        %v997 = vrot.slane %v996, 4
        %v998 = vadd.f32 %v996, %v997
        %v999 = vrot.slane %v998, 2
        %v1000 = vadd.f32 %v998, %v999
        %v1001 = vrot.slane %v1000, 1
        %v1002 = vadd.f32 %v1000, %v1001
        %1003 = vadd.xlane.f32.xlu0 %v1002
        %v1004 = vpop.xlane.xlu0 %1003
        %vm1005 = vcmp.ge.f32.partialorder %v1004, %v990
        %vm1006 = vcmp.gt.s32.totalorder %v992, 534773758
        %v1007 = vsel %vm1006, 1, 0
        %v1008 = vcvt.s32.f32 %v1007
        %v1009 = vsel %vm272, %v1008, 0.0
        %v1010 = vrot.slane %v1009, 4
        %v1011 = vadd.f32 %v1009, %v1010
        %v1012 = vrot.slane %v1011, 2
        %v1013 = vadd.f32 %v1011, %v1012
        %v1014 = vrot.slane %v1013, 1
        %v1015 = vadd.f32 %v1013, %v1014
        %1016 = vadd.xlane.f32.xlu0 %v1015
        %v1017 = vpop.xlane.xlu0 %1016
        %vm1018 = vcmp.ge.f32.partialorder %v1017, %v990
        %vm1019 = vcmp.gt.s32.totalorder %v992, 1604321280
        %v1020 = vsel %vm1019, 1, 0
        %v1021 = vcvt.s32.f32 %v1020
        %v1022 = vsel %vm272, %v1021, 0.0
        %v1023 = vrot.slane %v1022, 4
        %v1024 = vadd.f32 %v1022, %v1023
        %v1025 = vrot.slane %v1024, 2
        %v1026 = vadd.f32 %v1024, %v1025
        %v1027 = vrot.slane %v1026, 1
        %v1028 = vadd.f32 %v1026, %v1027
        %1029 = vadd.xlane.f32.xlu0 %v1028
        %v1030 = vpop.xlane.xlu0 %1029
        %vm1031 = vcmp.ge.f32.partialorder %v1030, %v990
        %v1032 = vsel %vm1031, 1604321280, 1069547519
        %v1033 = vsel %vm1018, 534773758, 4294967294
        %v1034 = vsel %vm1005, %v1032, %v1033
        %v1035 = vsel %vm1031, 2139095040, 1604321279
        %v1036 = vsel %vm1018, 1069547518, 534773757
        %v1037 = vsel %vm1005, %v1035, %v1036
        %v1038 = vsub.s32 %v1037, %v1034
        %v1039 = vadd.s32 %v1038, 1
        %v1040 = vshra.s32 %v1039, 1
        %v1041 = vadd.s32 %v1034, %v1040
        %v1042 = vshra.s32 %v1040, 1
        %v1043 = vadd.s32 %v1034, %v1042
        %v1044 = vsub.s32 %v1037, %v1041
        %v1045 = vadd.s32 %v1044, 1
        %v1046 = vshra.s32 %v1045, 1
        %v1047 = vadd.s32 %v1041, %v1046
        %vm1048 = vcmp.gt.s32.totalorder %v992, %v1041
        %v1049 = vsel %vm1048, 1, 0
        %v1050 = vcvt.s32.f32 %v1049
        %v1051 = vsel %vm272, %v1050, 0.0
        %v1052 = vrot.slane %v1051, 4
        %v1053 = vadd.f32 %v1051, %v1052
        %v1054 = vrot.slane %v1053, 2
        %v1055 = vadd.f32 %v1053, %v1054
        %v1056 = vrot.slane %v1055, 1
        %v1057 = vadd.f32 %v1055, %v1056
        %1058 = vadd.xlane.f32.xlu0 %v1057
        %v1059 = vpop.xlane.xlu0 %1058
        %vm1060 = vcmp.ge.f32.partialorder %v1059, %v990
        %vm1061 = vcmp.gt.s32.totalorder %v992, %v1043
        %v1062 = vsel %vm1061, 1, 0
        %v1063 = vcvt.s32.f32 %v1062
        %v1064 = vsel %vm272, %v1063, 0.0
        %v1065 = vrot.slane %v1064, 4
        %v1066 = vadd.f32 %v1064, %v1065
        %v1067 = vrot.slane %v1066, 2
        %v1068 = vadd.f32 %v1066, %v1067
        %v1069 = vrot.slane %v1068, 1
        %v1070 = vadd.f32 %v1068, %v1069
        %1071 = vadd.xlane.f32.xlu0 %v1070
        %v1072 = vpop.xlane.xlu0 %1071
        %vm1073 = vcmp.ge.f32.partialorder %v1072, %v990
        %vm1074 = vcmp.gt.s32.totalorder %v992, %v1047
        %v1075 = vsel %vm1074, 1, 0
        %v1076 = vcvt.s32.f32 %v1075
        %v1077 = vsel %vm272, %v1076, 0.0
        %v1078 = vrot.slane %v1077, 4
        %v1079 = vadd.f32 %v1077, %v1078
        %v1080 = vrot.slane %v1079, 2
        %v1081 = vadd.f32 %v1079, %v1080
        %v1082 = vrot.slane %v1081, 1
        %v1083 = vadd.f32 %v1081, %v1082
        %1084 = vadd.xlane.f32.xlu0 %v1083
        %v1085 = vpop.xlane.xlu0 %1084
        %vm1086 = vcmp.ge.f32.partialorder %v1085, %v990
        %v1087 = vsel %vm1086, %v1047, %v1041
        %v1088 = vsel %vm1073, %v1043, %v1034
        %v1089 = vsel %vm1060, %v1087, %v1088
        %v1090 = vsub.s32 %v1047, 1
        %v1091 = vsel %vm1086, %v1037, %v1090
        %v1092 = vsub.s32 %v1041, 1
        %v1093 = vsub.s32 %v1043, 1
        %v1094 = vsel %vm1073, %v1092, %v1093
        %v1095 = vsel %vm1060, %v1091, %v1094
        %v1096 = vsub.s32 %v1095, %v1089
        %v1097 = vadd.s32 %v1096, 1
        %v1098 = vshra.s32 %v1097, 1
        %v1099 = vadd.s32 %v1089, %v1098
        %v1100 = vshra.s32 %v1098, 1
        %v1101 = vadd.s32 %v1089, %v1100
        %v1102 = vsub.s32 %v1095, %v1099
        %v1103 = vadd.s32 %v1102, 1
        %v1104 = vshra.s32 %v1103, 1
        %v1105 = vadd.s32 %v1099, %v1104
        %vm1106 = vcmp.gt.s32.totalorder %v992, %v1099
        %v1107 = vsel %vm1106, 1, 0
        %v1108 = vcvt.s32.f32 %v1107
        %v1109 = vsel %vm272, %v1108, 0.0
        %v1110 = vrot.slane %v1109, 4
        %v1111 = vadd.f32 %v1109, %v1110
        %v1112 = vrot.slane %v1111, 2
        %v1113 = vadd.f32 %v1111, %v1112
        %v1114 = vrot.slane %v1113, 1
        %v1115 = vadd.f32 %v1113, %v1114
        %1116 = vadd.xlane.f32.xlu0 %v1115
        %v1117 = vpop.xlane.xlu0 %1116
        %vm1118 = vcmp.ge.f32.partialorder %v1117, %v990
        %vm1119 = vcmp.gt.s32.totalorder %v992, %v1101
        %v1120 = vsel %vm1119, 1, 0
        %v1121 = vcvt.s32.f32 %v1120
        %v1122 = vsel %vm272, %v1121, 0.0
        %v1123 = vrot.slane %v1122, 4
        %v1124 = vadd.f32 %v1122, %v1123
        %v1125 = vrot.slane %v1124, 2
        %v1126 = vadd.f32 %v1124, %v1125
        %v1127 = vrot.slane %v1126, 1
        %v1128 = vadd.f32 %v1126, %v1127
        %1129 = vadd.xlane.f32.xlu0 %v1128
        %v1130 = vpop.xlane.xlu0 %1129
        %vm1131 = vcmp.ge.f32.partialorder %v1130, %v990
        %vm1132 = vcmp.gt.s32.totalorder %v992, %v1105
        %v1133 = vsel %vm1132, 1, 0
        %v1134 = vcvt.s32.f32 %v1133
        %v1135 = vsel %vm272, %v1134, 0.0
        %v1136 = vrot.slane %v1135, 4
        %v1137 = vadd.f32 %v1135, %v1136
        %v1138 = vrot.slane %v1137, 2
        %v1139 = vadd.f32 %v1137, %v1138
        %v1140 = vrot.slane %v1139, 1
        %v1141 = vadd.f32 %v1139, %v1140
        %1142 = vadd.xlane.f32.xlu0 %v1141
        %v1143 = vpop.xlane.xlu0 %1142
        %vm1144 = vcmp.ge.f32.partialorder %v1143, %v990
        %v1145 = vsel %vm1144, %v1105, %v1099
        %v1146 = vsel %vm1131, %v1101, %v1089
        %v1147 = vsel %vm1118, %v1145, %v1146
        %v1148 = vsub.s32 %v1105, 1
        %v1149 = vsel %vm1144, %v1095, %v1148
        %v1150 = vsub.s32 %v1099, 1
        %v1151 = vsub.s32 %v1101, 1
        %v1152 = vsel %vm1131, %v1150, %v1151
        %v1153 = vsel %vm1118, %v1149, %v1152
        %v1154 = vsub.s32 %v1153, %v1147
        %v1155 = vadd.s32 %v1154, 1
        %v1156 = vshra.s32 %v1155, 1
        %v1157 = vadd.s32 %v1147, %v1156
        %v1158 = vshra.s32 %v1156, 1
        %v1159 = vadd.s32 %v1147, %v1158
        %v1160 = vsub.s32 %v1153, %v1157
        %v1161 = vadd.s32 %v1160, 1
        %v1162 = vshra.s32 %v1161, 1
        %v1163 = vadd.s32 %v1157, %v1162
        %vm1164 = vcmp.gt.s32.totalorder %v992, %v1157
        %v1165 = vsel %vm1164, 1, 0
        %v1166 = vcvt.s32.f32 %v1165
        %v1167 = vsel %vm272, %v1166, 0.0
        %v1168 = vrot.slane %v1167, 4
        %v1169 = vadd.f32 %v1167, %v1168
        %v1170 = vrot.slane %v1169, 2
        %v1171 = vadd.f32 %v1169, %v1170
        %v1172 = vrot.slane %v1171, 1
        %v1173 = vadd.f32 %v1171, %v1172
        %1174 = vadd.xlane.f32.xlu0 %v1173
        %v1175 = vpop.xlane.xlu0 %1174
        %vm1176 = vcmp.ge.f32.partialorder %v1175, %v990
        %vm1177 = vcmp.gt.s32.totalorder %v992, %v1159
        %v1178 = vsel %vm1177, 1, 0
        %v1179 = vcvt.s32.f32 %v1178
        %v1180 = vsel %vm272, %v1179, 0.0
        %v1181 = vrot.slane %v1180, 4
        %v1182 = vadd.f32 %v1180, %v1181
        %v1183 = vrot.slane %v1182, 2
        %v1184 = vadd.f32 %v1182, %v1183
        %v1185 = vrot.slane %v1184, 1
        %v1186 = vadd.f32 %v1184, %v1185
        %1187 = vadd.xlane.f32.xlu0 %v1186
        %v1188 = vpop.xlane.xlu0 %1187
        %vm1189 = vcmp.ge.f32.partialorder %v1188, %v990
        %vm1190 = vcmp.gt.s32.totalorder %v992, %v1163
        %v1191 = vsel %vm1190, 1, 0
        %v1192 = vcvt.s32.f32 %v1191
        %v1193 = vsel %vm272, %v1192, 0.0
        %v1194 = vrot.slane %v1193, 4
        %v1195 = vadd.f32 %v1193, %v1194
        %v1196 = vrot.slane %v1195, 2
        %v1197 = vadd.f32 %v1195, %v1196
        %v1198 = vrot.slane %v1197, 1
        %v1199 = vadd.f32 %v1197, %v1198
        %1200 = vadd.xlane.f32.xlu0 %v1199
        %v1201 = vpop.xlane.xlu0 %1200
        %vm1202 = vcmp.ge.f32.partialorder %v1201, %v990
        %v1203 = vsel %vm1202, %v1163, %v1157
        %v1204 = vsel %vm1189, %v1159, %v1147
        %v1205 = vsel %vm1176, %v1203, %v1204
        %v1206 = vsub.s32 %v1163, 1
        %v1207 = vsel %vm1202, %v1153, %v1206
        %v1208 = vsub.s32 %v1157, 1
        %v1209 = vsub.s32 %v1159, 1
        %v1210 = vsel %vm1189, %v1208, %v1209
        %v1211 = vsel %vm1176, %v1207, %v1210
        %v1212 = vsub.s32 %v1211, %v1205
        %v1213 = vadd.s32 %v1212, 1
        %v1214 = vshra.s32 %v1213, 1
        %v1215 = vadd.s32 %v1205, %v1214
        %v1216 = vshra.s32 %v1214, 1
        %v1217 = vadd.s32 %v1205, %v1216
        %v1218 = vsub.s32 %v1211, %v1215
        %v1219 = vadd.s32 %v1218, 1
        %v1220 = vshra.s32 %v1219, 1
        %v1221 = vadd.s32 %v1215, %v1220
        %vm1222 = vcmp.gt.s32.totalorder %v992, %v1215
        %v1223 = vsel %vm1222, 1, 0
        %v1224 = vcvt.s32.f32 %v1223
        %v1225 = vsel %vm272, %v1224, 0.0
        %v1226 = vrot.slane %v1225, 4
        %v1227 = vadd.f32 %v1225, %v1226
        %v1228 = vrot.slane %v1227, 2
        %v1229 = vadd.f32 %v1227, %v1228
        %v1230 = vrot.slane %v1229, 1
        %v1231 = vadd.f32 %v1229, %v1230
        %1232 = vadd.xlane.f32.xlu0 %v1231
        %v1233 = vpop.xlane.xlu0 %1232
        %vm1234 = vcmp.ge.f32.partialorder %v1233, %v990
        %vm1235 = vcmp.gt.s32.totalorder %v992, %v1217
        %v1236 = vsel %vm1235, 1, 0
        %v1237 = vcvt.s32.f32 %v1236
        %v1238 = vsel %vm272, %v1237, 0.0
        %v1239 = vrot.slane %v1238, 4
        %v1240 = vadd.f32 %v1238, %v1239
        %v1241 = vrot.slane %v1240, 2
        %v1242 = vadd.f32 %v1240, %v1241
        %v1243 = vrot.slane %v1242, 1
        %v1244 = vadd.f32 %v1242, %v1243
        %1245 = vadd.xlane.f32.xlu0 %v1244
        %v1246 = vpop.xlane.xlu0 %1245
        %vm1247 = vcmp.ge.f32.partialorder %v1246, %v990
        %vm1248 = vcmp.gt.s32.totalorder %v992, %v1221
        %v1249 = vsel %vm1248, 1, 0
        %v1250 = vcvt.s32.f32 %v1249
        %v1251 = vsel %vm272, %v1250, 0.0
        %v1252 = vrot.slane %v1251, 4
        %v1253 = vadd.f32 %v1251, %v1252
        %v1254 = vrot.slane %v1253, 2
        %v1255 = vadd.f32 %v1253, %v1254
        %v1256 = vrot.slane %v1255, 1
        %v1257 = vadd.f32 %v1255, %v1256
        %1258 = vadd.xlane.f32.xlu0 %v1257
        %v1259 = vpop.xlane.xlu0 %1258
        %vm1260 = vcmp.ge.f32.partialorder %v1259, %v990
        %v1261 = vsel %vm1260, %v1221, %v1215
        %v1262 = vsel %vm1247, %v1217, %v1205
        %v1263 = vsel %vm1234, %v1261, %v1262
        %v1264 = vsub.s32 %v1221, 1
        %v1265 = vsel %vm1260, %v1211, %v1264
        %v1266 = vsub.s32 %v1215, 1
        %v1267 = vsub.s32 %v1217, 1
        %v1268 = vsel %vm1247, %v1266, %v1267
        %v1269 = vsel %vm1234, %v1265, %v1268
        %v1270 = vsub.s32 %v1269, %v1263
        %v1271 = vadd.s32 %v1270, 1
        %v1272 = vshra.s32 %v1271, 1
        %v1273 = vadd.s32 %v1263, %v1272
        %v1274 = vshra.s32 %v1272, 1
        %v1275 = vadd.s32 %v1263, %v1274
        %v1276 = vsub.s32 %v1269, %v1273
        %v1277 = vadd.s32 %v1276, 1
        %v1278 = vshra.s32 %v1277, 1
        %v1279 = vadd.s32 %v1273, %v1278
        %vm1280 = vcmp.gt.s32.totalorder %v992, %v1273
        %v1281 = vsel %vm1280, 1, 0
        %v1282 = vcvt.s32.f32 %v1281
        %v1283 = vsel %vm272, %v1282, 0.0
        %v1284 = vrot.slane %v1283, 4
        %v1285 = vadd.f32 %v1283, %v1284
        %v1286 = vrot.slane %v1285, 2
        %v1287 = vadd.f32 %v1285, %v1286
        %v1288 = vrot.slane %v1287, 1
        %v1289 = vadd.f32 %v1287, %v1288
        %1290 = vadd.xlane.f32.xlu0 %v1289
        %v1291 = vpop.xlane.xlu0 %1290
        %vm1292 = vcmp.ge.f32.partialorder %v1291, %v990
        %vm1293 = vcmp.gt.s32.totalorder %v992, %v1275
        %v1294 = vsel %vm1293, 1, 0
        %v1295 = vcvt.s32.f32 %v1294
        %v1296 = vsel %vm272, %v1295, 0.0
        %v1297 = vrot.slane %v1296, 4
        %v1298 = vadd.f32 %v1296, %v1297
        %v1299 = vrot.slane %v1298, 2
        %v1300 = vadd.f32 %v1298, %v1299
        %v1301 = vrot.slane %v1300, 1
        %v1302 = vadd.f32 %v1300, %v1301
        %1303 = vadd.xlane.f32.xlu0 %v1302
        %v1304 = vpop.xlane.xlu0 %1303
        %vm1305 = vcmp.ge.f32.partialorder %v1304, %v990
        %vm1306 = vcmp.gt.s32.totalorder %v992, %v1279
        %v1307 = vsel %vm1306, 1, 0
        %v1308 = vcvt.s32.f32 %v1307
        %v1309 = vsel %vm272, %v1308, 0.0
        %v1310 = vrot.slane %v1309, 4
        %v1311 = vadd.f32 %v1309, %v1310
        %v1312 = vrot.slane %v1311, 2
        %v1313 = vadd.f32 %v1311, %v1312
        %v1314 = vrot.slane %v1313, 1
        %v1315 = vadd.f32 %v1313, %v1314
        %1316 = vadd.xlane.f32.xlu0 %v1315
        %v1317 = vpop.xlane.xlu0 %1316
        %vm1318 = vcmp.ge.f32.partialorder %v1317, %v990
        %v1319 = vsel %vm1318, %v1279, %v1273
        %v1320 = vsel %vm1305, %v1275, %v1263
        %v1321 = vsel %vm1292, %v1319, %v1320
        %v1322 = vsub.s32 %v1279, 1
        %v1323 = vsel %vm1318, %v1269, %v1322
        %v1324 = vsub.s32 %v1273, 1
        %v1325 = vsub.s32 %v1275, 1
        %v1326 = vsel %vm1305, %v1324, %v1325
        %v1327 = vsel %vm1292, %v1323, %v1326
        %v1328 = vsub.s32 %v1327, %v1321
        %v1329 = vadd.s32 %v1328, 1
        %v1330 = vshra.s32 %v1329, 1
        %v1331 = vadd.s32 %v1321, %v1330
        %v1332 = vshra.s32 %v1330, 1
        %v1333 = vadd.s32 %v1321, %v1332
        %v1334 = vsub.s32 %v1327, %v1331
        %v1335 = vadd.s32 %v1334, 1
        %v1336 = vshra.s32 %v1335, 1
        %v1337 = vadd.s32 %v1331, %v1336
        %vm1338 = vcmp.gt.s32.totalorder %v992, %v1331
        %v1339 = vsel %vm1338, 1, 0
        %v1340 = vcvt.s32.f32 %v1339
        %v1341 = vsel %vm272, %v1340, 0.0
        %v1342 = vrot.slane %v1341, 4
        %v1343 = vadd.f32 %v1341, %v1342
        %v1344 = vrot.slane %v1343, 2
        %v1345 = vadd.f32 %v1343, %v1344
        %v1346 = vrot.slane %v1345, 1
        %v1347 = vadd.f32 %v1345, %v1346
        %1348 = vadd.xlane.f32.xlu0 %v1347
        %v1349 = vpop.xlane.xlu0 %1348
        %vm1350 = vcmp.ge.f32.partialorder %v1349, %v990
        %vm1351 = vcmp.gt.s32.totalorder %v992, %v1333
        %v1352 = vsel %vm1351, 1, 0
        %v1353 = vcvt.s32.f32 %v1352
        %v1354 = vsel %vm272, %v1353, 0.0
        %v1355 = vrot.slane %v1354, 4
        %v1356 = vadd.f32 %v1354, %v1355
        %v1357 = vrot.slane %v1356, 2
        %v1358 = vadd.f32 %v1356, %v1357
        %v1359 = vrot.slane %v1358, 1
        %v1360 = vadd.f32 %v1358, %v1359
        %1361 = vadd.xlane.f32.xlu0 %v1360
        %v1362 = vpop.xlane.xlu0 %1361
        %vm1363 = vcmp.ge.f32.partialorder %v1362, %v990
        %vm1364 = vcmp.gt.s32.totalorder %v992, %v1337
        %v1365 = vsel %vm1364, 1, 0
        %v1366 = vcvt.s32.f32 %v1365
        %v1367 = vsel %vm272, %v1366, 0.0
        %v1368 = vrot.slane %v1367, 4
        %v1369 = vadd.f32 %v1367, %v1368
        %v1370 = vrot.slane %v1369, 2
        %v1371 = vadd.f32 %v1369, %v1370
        %v1372 = vrot.slane %v1371, 1
        %v1373 = vadd.f32 %v1371, %v1372
        %1374 = vadd.xlane.f32.xlu0 %v1373
        %v1375 = vpop.xlane.xlu0 %1374
        %vm1376 = vcmp.ge.f32.partialorder %v1375, %v990
        %v1377 = vsel %vm1376, %v1337, %v1331
        %v1378 = vsel %vm1363, %v1333, %v1321
        %v1379 = vsel %vm1350, %v1377, %v1378
        %v1380 = vsub.s32 %v1337, 1
        %v1381 = vsel %vm1376, %v1327, %v1380
        %v1382 = vsub.s32 %v1331, 1
        %v1383 = vsub.s32 %v1333, 1
        %v1384 = vsel %vm1363, %v1382, %v1383
        %v1385 = vsel %vm1350, %v1381, %v1384
        %v1386 = vsub.s32 %v1385, %v1379
        %v1387 = vadd.s32 %v1386, 1
        %v1388 = vshra.s32 %v1387, 1
        %v1389 = vadd.s32 %v1379, %v1388
        %v1390 = vshra.s32 %v1388, 1
        %v1391 = vadd.s32 %v1379, %v1390
        %v1392 = vsub.s32 %v1385, %v1389
        %v1393 = vadd.s32 %v1392, 1
        %v1394 = vshra.s32 %v1393, 1
        %v1395 = vadd.s32 %v1389, %v1394
        %vm1396 = vcmp.gt.s32.totalorder %v992, %v1389
        %v1397 = vsel %vm1396, 1, 0
        %v1398 = vcvt.s32.f32 %v1397
        %v1399 = vsel %vm272, %v1398, 0.0
        %v1400 = vrot.slane %v1399, 4
        %v1401 = vadd.f32 %v1399, %v1400
        %v1402 = vrot.slane %v1401, 2
        %v1403 = vadd.f32 %v1401, %v1402
        %v1404 = vrot.slane %v1403, 1
        %v1405 = vadd.f32 %v1403, %v1404
        %1406 = vadd.xlane.f32.xlu0 %v1405
        %v1407 = vpop.xlane.xlu0 %1406
        %vm1408 = vcmp.ge.f32.partialorder %v1407, %v990
        %vm1409 = vcmp.gt.s32.totalorder %v992, %v1391
        %v1410 = vsel %vm1409, 1, 0
        %v1411 = vcvt.s32.f32 %v1410
        %v1412 = vsel %vm272, %v1411, 0.0
        %v1413 = vrot.slane %v1412, 4
        %v1414 = vadd.f32 %v1412, %v1413
        %v1415 = vrot.slane %v1414, 2
        %v1416 = vadd.f32 %v1414, %v1415
        %v1417 = vrot.slane %v1416, 1
        %v1418 = vadd.f32 %v1416, %v1417
        %1419 = vadd.xlane.f32.xlu0 %v1418
        %v1420 = vpop.xlane.xlu0 %1419
        %vm1421 = vcmp.ge.f32.partialorder %v1420, %v990
        %vm1422 = vcmp.gt.s32.totalorder %v992, %v1395
        %v1423 = vsel %vm1422, 1, 0
        %v1424 = vcvt.s32.f32 %v1423
        %v1425 = vsel %vm272, %v1424, 0.0
        %v1426 = vrot.slane %v1425, 4
        %v1427 = vadd.f32 %v1425, %v1426
        %v1428 = vrot.slane %v1427, 2
        %v1429 = vadd.f32 %v1427, %v1428
        %v1430 = vrot.slane %v1429, 1
        %v1431 = vadd.f32 %v1429, %v1430
        %1432 = vadd.xlane.f32.xlu0 %v1431
        %v1433 = vpop.xlane.xlu0 %1432
        %vm1434 = vcmp.ge.f32.partialorder %v1433, %v990
        %v1435 = vsel %vm1434, %v1395, %v1389
        %v1436 = vsel %vm1421, %v1391, %v1379
        %v1437 = vsel %vm1408, %v1435, %v1436
        %v1438 = vsub.s32 %v1395, 1
        %v1439 = vsel %vm1434, %v1385, %v1438
        %v1440 = vsub.s32 %v1389, 1
        %v1441 = vsub.s32 %v1391, 1
        %v1442 = vsel %vm1421, %v1440, %v1441
        %v1443 = vsel %vm1408, %v1439, %v1442
        %v1444 = vsub.s32 %v1443, %v1437
        %v1445 = vadd.s32 %v1444, 1
        %v1446 = vshra.s32 %v1445, 1
        %v1447 = vadd.s32 %v1437, %v1446
        %v1448 = vshra.s32 %v1446, 1
        %v1449 = vadd.s32 %v1437, %v1448
        %v1450 = vsub.s32 %v1443, %v1447
        %v1451 = vadd.s32 %v1450, 1
        %v1452 = vshra.s32 %v1451, 1
        %v1453 = vadd.s32 %v1447, %v1452
        %vm1454 = vcmp.gt.s32.totalorder %v992, %v1447
        %v1455 = vsel %vm1454, 1, 0
        %v1456 = vcvt.s32.f32 %v1455
        %v1457 = vsel %vm272, %v1456, 0.0
        %v1458 = vrot.slane %v1457, 4
        %v1459 = vadd.f32 %v1457, %v1458
        %v1460 = vrot.slane %v1459, 2
        %v1461 = vadd.f32 %v1459, %v1460
        %v1462 = vrot.slane %v1461, 1
        %v1463 = vadd.f32 %v1461, %v1462
        %1464 = vadd.xlane.f32.xlu0 %v1463
        %v1465 = vpop.xlane.xlu0 %1464
        %vm1466 = vcmp.ge.f32.partialorder %v1465, %v990
        %vm1467 = vcmp.gt.s32.totalorder %v992, %v1449
        %v1468 = vsel %vm1467, 1, 0
        %v1469 = vcvt.s32.f32 %v1468
        %v1470 = vsel %vm272, %v1469, 0.0
        %v1471 = vrot.slane %v1470, 4
        %v1472 = vadd.f32 %v1470, %v1471
        %v1473 = vrot.slane %v1472, 2
        %v1474 = vadd.f32 %v1472, %v1473
        %v1475 = vrot.slane %v1474, 1
        %v1476 = vadd.f32 %v1474, %v1475
        %1477 = vadd.xlane.f32.xlu0 %v1476
        %v1478 = vpop.xlane.xlu0 %1477
        %vm1479 = vcmp.ge.f32.partialorder %v1478, %v990
        %vm1480 = vcmp.gt.s32.totalorder %v992, %v1453
        %v1481 = vsel %vm1480, 1, 0
        %v1482 = vcvt.s32.f32 %v1481
        %v1483 = vsel %vm272, %v1482, 0.0
        %v1484 = vrot.slane %v1483, 4
        %v1485 = vadd.f32 %v1483, %v1484
        %v1486 = vrot.slane %v1485, 2
        %v1487 = vadd.f32 %v1485, %v1486
        %v1488 = vrot.slane %v1487, 1
        %v1489 = vadd.f32 %v1487, %v1488
        %1490 = vadd.xlane.f32.xlu0 %v1489
        %v1491 = vpop.xlane.xlu0 %1490
        %vm1492 = vcmp.ge.f32.partialorder %v1491, %v990
        %v1493 = vsel %vm1492, %v1453, %v1447
        %v1494 = vsel %vm1479, %v1449, %v1437
        %v1495 = vsel %vm1466, %v1493, %v1494
        %v1496 = vsub.s32 %v1453, 1
        %v1497 = vsel %vm1492, %v1443, %v1496
        %v1498 = vsub.s32 %v1447, 1
        %v1499 = vsub.s32 %v1449, 1
        %v1500 = vsel %vm1479, %v1498, %v1499
        %v1501 = vsel %vm1466, %v1497, %v1500
        %v1502 = vsub.s32 %v1501, %v1495
        %v1503 = vadd.s32 %v1502, 1
        %v1504 = vshra.s32 %v1503, 1
        %v1505 = vadd.s32 %v1495, %v1504
        %v1506 = vshra.s32 %v1504, 1
        %v1507 = vadd.s32 %v1495, %v1506
        %v1508 = vsub.s32 %v1501, %v1505
        %v1509 = vadd.s32 %v1508, 1
        %v1510 = vshra.s32 %v1509, 1
        %v1511 = vadd.s32 %v1505, %v1510
        %vm1512 = vcmp.gt.s32.totalorder %v992, %v1505
        %v1513 = vsel %vm1512, 1, 0
        %v1514 = vcvt.s32.f32 %v1513
        %v1515 = vsel %vm272, %v1514, 0.0
        %v1516 = vrot.slane %v1515, 4
        %v1517 = vadd.f32 %v1515, %v1516
        %v1518 = vrot.slane %v1517, 2
        %v1519 = vadd.f32 %v1517, %v1518
        %v1520 = vrot.slane %v1519, 1
        %v1521 = vadd.f32 %v1519, %v1520
        %1522 = vadd.xlane.f32.xlu0 %v1521
        %v1523 = vpop.xlane.xlu0 %1522
        %vm1524 = vcmp.ge.f32.partialorder %v1523, %v990
        %vm1525 = vcmp.gt.s32.totalorder %v992, %v1507
        %v1526 = vsel %vm1525, 1, 0
        %v1527 = vcvt.s32.f32 %v1526
        %v1528 = vsel %vm272, %v1527, 0.0
        %v1529 = vrot.slane %v1528, 4
        %v1530 = vadd.f32 %v1528, %v1529
        %v1531 = vrot.slane %v1530, 2
        %v1532 = vadd.f32 %v1530, %v1531
        %v1533 = vrot.slane %v1532, 1
        %v1534 = vadd.f32 %v1532, %v1533
        %1535 = vadd.xlane.f32.xlu0 %v1534
        %v1536 = vpop.xlane.xlu0 %1535
        %vm1537 = vcmp.ge.f32.partialorder %v1536, %v990
        %vm1538 = vcmp.gt.s32.totalorder %v992, %v1511
        %v1539 = vsel %vm1538, 1, 0
        %v1540 = vcvt.s32.f32 %v1539
        %v1541 = vsel %vm272, %v1540, 0.0
        %v1542 = vrot.slane %v1541, 4
        %v1543 = vadd.f32 %v1541, %v1542
        %v1544 = vrot.slane %v1543, 2
        %v1545 = vadd.f32 %v1543, %v1544
        %v1546 = vrot.slane %v1545, 1
        %v1547 = vadd.f32 %v1545, %v1546
        %1548 = vadd.xlane.f32.xlu0 %v1547
        %v1549 = vpop.xlane.xlu0 %1548
        %vm1550 = vcmp.ge.f32.partialorder %v1549, %v990
        %v1551 = vsel %vm1550, %v1511, %v1505
        %v1552 = vsel %vm1537, %v1507, %v1495
        %v1553 = vsel %vm1524, %v1551, %v1552
        %v1554 = vsub.s32 %v1511, 1
        %v1555 = vsel %vm1550, %v1501, %v1554
        %v1556 = vsub.s32 %v1505, 1
        %v1557 = vsub.s32 %v1507, 1
        %v1558 = vsel %vm1537, %v1556, %v1557
        %v1559 = vsel %vm1524, %v1555, %v1558
        %v1560 = vsub.s32 %v1559, %v1553
        %v1561 = vadd.s32 %v1560, 1
        %v1562 = vshra.s32 %v1561, 1
        %v1563 = vadd.s32 %v1553, %v1562
        %v1564 = vshra.s32 %v1562, 1
        %v1565 = vadd.s32 %v1553, %v1564
        %v1566 = vsub.s32 %v1559, %v1563
        %v1567 = vadd.s32 %v1566, 1
        %v1568 = vshra.s32 %v1567, 1
        %v1569 = vadd.s32 %v1563, %v1568
        %vm1570 = vcmp.gt.s32.totalorder %v992, %v1563
        %v1571 = vsel %vm1570, 1, 0
        %v1572 = vcvt.s32.f32 %v1571
        %v1573 = vsel %vm272, %v1572, 0.0
        %v1574 = vrot.slane %v1573, 4
        %v1575 = vadd.f32 %v1573, %v1574
        %v1576 = vrot.slane %v1575, 2
        %v1577 = vadd.f32 %v1575, %v1576
        %v1578 = vrot.slane %v1577, 1
        %v1579 = vadd.f32 %v1577, %v1578
        %1580 = vadd.xlane.f32.xlu0 %v1579
        %v1581 = vpop.xlane.xlu0 %1580
        %vm1582 = vcmp.ge.f32.partialorder %v1581, %v990
        %vm1583 = vcmp.gt.s32.totalorder %v992, %v1565
        %v1584 = vsel %vm1583, 1, 0
        %v1585 = vcvt.s32.f32 %v1584
        %v1586 = vsel %vm272, %v1585, 0.0
        %v1587 = vrot.slane %v1586, 4
        %v1588 = vadd.f32 %v1586, %v1587
        %v1589 = vrot.slane %v1588, 2
        %v1590 = vadd.f32 %v1588, %v1589
        %v1591 = vrot.slane %v1590, 1
        %v1592 = vadd.f32 %v1590, %v1591
        %1593 = vadd.xlane.f32.xlu0 %v1592
        %v1594 = vpop.xlane.xlu0 %1593
        %vm1595 = vcmp.ge.f32.partialorder %v1594, %v990
        %vm1596 = vcmp.gt.s32.totalorder %v992, %v1569
        %v1597 = vsel %vm1596, 1, 0
        %v1598 = vcvt.s32.f32 %v1597
        %v1599 = vsel %vm272, %v1598, 0.0
        %v1600 = vrot.slane %v1599, 4
        %v1601 = vadd.f32 %v1599, %v1600
        %v1602 = vrot.slane %v1601, 2
        %v1603 = vadd.f32 %v1601, %v1602
        %v1604 = vrot.slane %v1603, 1
        %v1605 = vadd.f32 %v1603, %v1604
        %1606 = vadd.xlane.f32.xlu0 %v1605
        %v1607 = vpop.xlane.xlu0 %1606
        %vm1608 = vcmp.ge.f32.partialorder %v1607, %v990
        %v1609 = vsel %vm1608, %v1569, %v1563
        %v1610 = vsel %vm1595, %v1565, %v1553
        %v1611 = vsel %vm1582, %v1609, %v1610
        %v1612 = vsub.s32 %v1569, 1
        %v1613 = vsel %vm1608, %v1559, %v1612
        %v1614 = vsub.s32 %v1563, 1
        %v1615 = vsub.s32 %v1565, 1
        %v1616 = vsel %vm1595, %v1614, %v1615
        %v1617 = vsel %vm1582, %v1613, %v1616
        %v1618 = vsub.s32 %v1617, %v1611
        %v1619 = vadd.s32 %v1618, 1
        %v1620 = vshra.s32 %v1619, 1
        %v1621 = vadd.s32 %v1611, %v1620
        %v1622 = vshra.s32 %v1620, 1
        %v1623 = vadd.s32 %v1611, %v1622
        %v1624 = vsub.s32 %v1617, %v1621
        %v1625 = vadd.s32 %v1624, 1
        %v1626 = vshra.s32 %v1625, 1
        %v1627 = vadd.s32 %v1621, %v1626
        %vm1628 = vcmp.gt.s32.totalorder %v992, %v1621
        %v1629 = vsel %vm1628, 1, 0
        %v1630 = vcvt.s32.f32 %v1629
        %v1631 = vsel %vm272, %v1630, 0.0
        %v1632 = vrot.slane %v1631, 4
        %v1633 = vadd.f32 %v1631, %v1632
        %v1634 = vrot.slane %v1633, 2
        %v1635 = vadd.f32 %v1633, %v1634
        %v1636 = vrot.slane %v1635, 1
        %v1637 = vadd.f32 %v1635, %v1636
        %1638 = vadd.xlane.f32.xlu0 %v1637
        %v1639 = vpop.xlane.xlu0 %1638
        %vm1640 = vcmp.ge.f32.partialorder %v1639, %v990
        %vm1641 = vcmp.gt.s32.totalorder %v992, %v1623
        %v1642 = vsel %vm1641, 1, 0
        %v1643 = vcvt.s32.f32 %v1642
        %v1644 = vsel %vm272, %v1643, 0.0
        %v1645 = vrot.slane %v1644, 4
        %v1646 = vadd.f32 %v1644, %v1645
        %v1647 = vrot.slane %v1646, 2
        %v1648 = vadd.f32 %v1646, %v1647
        %v1649 = vrot.slane %v1648, 1
        %v1650 = vadd.f32 %v1648, %v1649
        %1651 = vadd.xlane.f32.xlu0 %v1650
        %v1652 = vpop.xlane.xlu0 %1651
        %vm1653 = vcmp.ge.f32.partialorder %v1652, %v990
        %vm1654 = vcmp.gt.s32.totalorder %v992, %v1627
        %v1655 = vsel %vm1654, 1, 0
        %v1656 = vcvt.s32.f32 %v1655
        %v1657 = vsel %vm272, %v1656, 0.0
        %v1658 = vrot.slane %v1657, 4
        %v1659 = vadd.f32 %v1657, %v1658
        %v1660 = vrot.slane %v1659, 2
        %v1661 = vadd.f32 %v1659, %v1660
        %v1662 = vrot.slane %v1661, 1
        %v1663 = vadd.f32 %v1661, %v1662
        %1664 = vadd.xlane.f32.xlu0 %v1663
        %v1665 = vpop.xlane.xlu0 %1664
        %vm1666 = vcmp.ge.f32.partialorder %v1665, %v990
        %v1667 = vsel %vm1666, %v1627, %v1621
        %v1668 = vsel %vm1653, %v1623, %v1611
        %v1669 = vsel %vm1640, %v1667, %v1668
        %v1670 = vsub.s32 %v1627, 1
        %v1671 = vsel %vm1666, %v1617, %v1670
        %v1672 = vsub.s32 %v1621, 1
        %v1673 = vsub.s32 %v1623, 1
        %v1674 = vsel %vm1653, %v1672, %v1673
        %v1675 = vsel %vm1640, %v1671, %v1674
        %v1676 = vsub.s32 %v1675, %v1669
        %v1677 = vadd.s32 %v1676, 1
        %v1678 = vshra.s32 %v1677, 1
        %v1679 = vadd.s32 %v1669, %v1678
        %v1680 = vshra.s32 %v1678, 1
        %v1681 = vadd.s32 %v1669, %v1680
        %v1682 = vsub.s32 %v1675, %v1679
        %v1683 = vadd.s32 %v1682, 1
        %v1684 = vshra.s32 %v1683, 1
        %v1685 = vadd.s32 %v1679, %v1684
        %vm1686 = vcmp.gt.s32.totalorder %v992, %v1679
        %v1687 = vsel %vm1686, 1, 0
        %v1688 = vcvt.s32.f32 %v1687
        %v1689 = vsel %vm272, %v1688, 0.0
        %v1690 = vrot.slane %v1689, 4
        %v1691 = vadd.f32 %v1689, %v1690
        %v1692 = vrot.slane %v1691, 2
        %v1693 = vadd.f32 %v1691, %v1692
        %v1694 = vrot.slane %v1693, 1
        %v1695 = vadd.f32 %v1693, %v1694
        %1696 = vadd.xlane.f32.xlu0 %v1695
        %v1697 = vpop.xlane.xlu0 %1696
        %vm1698 = vcmp.ge.f32.partialorder %v1697, %v990
        %vm1699 = vcmp.gt.s32.totalorder %v992, %v1681
        %v1700 = vsel %vm1699, 1, 0
        %v1701 = vcvt.s32.f32 %v1700
        %v1702 = vsel %vm272, %v1701, 0.0
        %v1703 = vrot.slane %v1702, 4
        %v1704 = vadd.f32 %v1702, %v1703
        %v1705 = vrot.slane %v1704, 2
        %v1706 = vadd.f32 %v1704, %v1705
        %v1707 = vrot.slane %v1706, 1
        %v1708 = vadd.f32 %v1706, %v1707
        %1709 = vadd.xlane.f32.xlu0 %v1708
        %v1710 = vpop.xlane.xlu0 %1709
        %vm1711 = vcmp.ge.f32.partialorder %v1710, %v990
        %vm1712 = vcmp.gt.s32.totalorder %v992, %v1685
        %v1713 = vsel %vm1712, 1, 0
        %v1714 = vcvt.s32.f32 %v1713
        %v1715 = vsel %vm272, %v1714, 0.0
        %v1716 = vrot.slane %v1715, 4
        %v1717 = vadd.f32 %v1715, %v1716
        %v1718 = vrot.slane %v1717, 2
        %v1719 = vadd.f32 %v1717, %v1718
        %v1720 = vrot.slane %v1719, 1
        %v1721 = vadd.f32 %v1719, %v1720
        %1722 = vadd.xlane.f32.xlu0 %v1721
        %v1723 = vpop.xlane.xlu0 %1722
        %vm1724 = vcmp.ge.f32.partialorder %v1723, %v990
        %v1725 = vsel %vm1724, %v1685, %v1679
        %v1726 = vsel %vm1711, %v1681, %v1669
        %v1727 = vsel %vm1698, %v1725, %v1726
        %v1728 = vsub.s32 %v1685, 1
        %v1729 = vsel %vm1724, %v1675, %v1728
        %v1730 = vsub.s32 %v1679, 1
        %v1731 = vsub.s32 %v1681, 1
        %v1732 = vsel %vm1711, %v1730, %v1731
        %v1733 = vsel %vm1698, %v1729, %v1732
        %v1734 = vsub.s32 %v1733, %v1727
        %v1735 = vadd.s32 %v1734, 1
        %v1736 = vshra.s32 %v1735, 1
        %v1737 = vadd.s32 %v1727, %v1736
        %v1738 = vshra.s32 %v1736, 1
        %v1739 = vadd.s32 %v1727, %v1738
        %v1740 = vsub.s32 %v1733, %v1737
        %v1741 = vadd.s32 %v1740, 1
        %v1742 = vshra.s32 %v1741, 1
        %v1743 = vadd.s32 %v1737, %v1742
        %vm1744 = vcmp.gt.s32.totalorder %v992, %v1737
        %v1745 = vsel %vm1744, 1, 0
        %v1746 = vcvt.s32.f32 %v1745
        %v1747 = vsel %vm272, %v1746, 0.0
        %v1748 = vrot.slane %v1747, 4
        %v1749 = vadd.f32 %v1747, %v1748
        %v1750 = vrot.slane %v1749, 2
        %v1751 = vadd.f32 %v1749, %v1750
        %v1752 = vrot.slane %v1751, 1
        %v1753 = vadd.f32 %v1751, %v1752
        %1754 = vadd.xlane.f32.xlu0 %v1753
        %v1755 = vpop.xlane.xlu0 %1754
        %vm1756 = vcmp.ge.f32.partialorder %v1755, %v990
        %vm1757 = vcmp.gt.s32.totalorder %v992, %v1739
        %v1758 = vsel %vm1757, 1, 0
        %v1759 = vcvt.s32.f32 %v1758
        %v1760 = vsel %vm272, %v1759, 0.0
        %v1761 = vrot.slane %v1760, 4
        %v1762 = vadd.f32 %v1760, %v1761
        %v1763 = vrot.slane %v1762, 2
        %v1764 = vadd.f32 %v1762, %v1763
        %v1765 = vrot.slane %v1764, 1
        %v1766 = vadd.f32 %v1764, %v1765
        %1767 = vadd.xlane.f32.xlu0 %v1766
        %v1768 = vpop.xlane.xlu0 %1767
        %vm1769 = vcmp.ge.f32.partialorder %v1768, %v990
        %vm1770 = vcmp.gt.s32.totalorder %v992, %v1743
        %v1771 = vsel %vm1770, 1, 0
        %v1772 = vcvt.s32.f32 %v1771
        %v1773 = vsel %vm272, %v1772, 0.0
        %v1774 = vrot.slane %v1773, 4
        %v1775 = vadd.f32 %v1773, %v1774
        %v1776 = vrot.slane %v1775, 2
        %v1777 = vadd.f32 %v1775, %v1776
        %v1778 = vrot.slane %v1777, 1
        %v1779 = vadd.f32 %v1777, %v1778
        %1780 = vadd.xlane.f32.xlu0 %v1779
        %v1781 = vpop.xlane.xlu0 %1780
        %vm1782 = vcmp.ge.f32.partialorder %v1781, %v990
        %v1783 = vsel %vm1782, %v1743, %v1737
        %v1784 = vsel %vm1769, %v1739, %v1727
        %v1785 = vsel %vm1756, %v1783, %v1784
        %v1786 = vsub.s32 %v1743, 1
        %v1787 = vsel %vm1782, %v1733, %v1786
        %v1788 = vsub.s32 %v1737, 1
        %v1789 = vsub.s32 %v1739, 1
        %v1790 = vsel %vm1769, %v1788, %v1789
        %v1791 = vsel %vm1756, %v1787, %v1790
        %v1792 = vsub.s32 %v1791, %v1785
        %v1793 = vadd.s32 %v1792, 1
        %v1794 = vshra.s32 %v1793, 1
        %v1795 = vadd.s32 %v1785, %v1794
        %v1796 = vshra.s32 %v1794, 1
        %v1797 = vadd.s32 %v1785, %v1796
        %v1798 = vsub.s32 %v1791, %v1795
        %v1799 = vadd.s32 %v1798, 1
        %v1800 = vshra.s32 %v1799, 1
        %v1801 = vadd.s32 %v1795, %v1800
        %vm1802 = vcmp.gt.s32.totalorder %v992, %v1795
        %v1803 = vsel %vm1802, 1, 0
        %v1804 = vcvt.s32.f32 %v1803
        %v1805 = vsel %vm272, %v1804, 0.0
        %v1806 = vrot.slane %v1805, 4
        %v1807 = vadd.f32 %v1805, %v1806
        %v1808 = vrot.slane %v1807, 2
        %v1809 = vadd.f32 %v1807, %v1808
        %v1810 = vrot.slane %v1809, 1
        %v1811 = vadd.f32 %v1809, %v1810
        %1812 = vadd.xlane.f32.xlu0 %v1811
        %v1813 = vpop.xlane.xlu0 %1812
        %vm1814 = vcmp.ge.f32.partialorder %v1813, %v990
        %vm1815 = vcmp.gt.s32.totalorder %v992, %v1797
        %v1816 = vsel %vm1815, 1, 0
        %v1817 = vcvt.s32.f32 %v1816
        %v1818 = vsel %vm272, %v1817, 0.0
        %v1819 = vrot.slane %v1818, 4
        %v1820 = vadd.f32 %v1818, %v1819
        %v1821 = vrot.slane %v1820, 2
        %v1822 = vadd.f32 %v1820, %v1821
        %v1823 = vrot.slane %v1822, 1
        %v1824 = vadd.f32 %v1822, %v1823
        %1825 = vadd.xlane.f32.xlu0 %v1824
        %v1826 = vpop.xlane.xlu0 %1825
        %vm1827 = vcmp.ge.f32.partialorder %v1826, %v990
        %vm1828 = vcmp.gt.s32.totalorder %v992, %v1801
        %v1829 = vsel %vm1828, 1, 0
        %v1830 = vcvt.s32.f32 %v1829
        %v1831 = vsel %vm272, %v1830, 0.0
        %v1832 = vrot.slane %v1831, 4
        %v1833 = vadd.f32 %v1831, %v1832
        %v1834 = vrot.slane %v1833, 2
        %v1835 = vadd.f32 %v1833, %v1834
        %v1836 = vrot.slane %v1835, 1
        %v1837 = vadd.f32 %v1835, %v1836
        %1838 = vadd.xlane.f32.xlu0 %v1837
        %v1839 = vpop.xlane.xlu0 %1838
        %vm1840 = vcmp.ge.f32.partialorder %v1839, %v990
        %v1841 = vsel %vm1840, %v1801, %v1795
        %v1842 = vsel %vm1827, %v1797, %v1785
        %v1843 = vsel %vm1814, %v1841, %v1842
        %v1844 = vsub.s32 %v1801, 1
        %v1845 = vsel %vm1840, %v1791, %v1844
        %v1846 = vsub.s32 %v1795, 1
        %v1847 = vsub.s32 %v1797, 1
        %v1848 = vsel %vm1827, %v1846, %v1847
        %v1849 = vsel %vm1814, %v1845, %v1848
        %v1850 = vsub.s32 %v1849, %v1843
        %v1851 = vadd.s32 %v1850, 1
        %v1852 = vshra.s32 %v1851, 1
        %v1853 = vadd.s32 %v1843, %v1852
        %v1854 = vshra.s32 %v1852, 1
        %v1855 = vadd.s32 %v1843, %v1854
        %v1856 = vsub.s32 %v1849, %v1853
        %v1857 = vadd.s32 %v1856, 1
        %v1858 = vshra.s32 %v1857, 1
        %v1859 = vadd.s32 %v1853, %v1858
        %vm1860 = vcmp.gt.s32.totalorder %v992, %v1853
        %v1861 = vsel %vm1860, 1, 0
        %v1862 = vcvt.s32.f32 %v1861
        %v1863 = vsel %vm272, %v1862, 0.0
        %v1864 = vrot.slane %v1863, 4
        %v1865 = vadd.f32 %v1863, %v1864
        %v1866 = vrot.slane %v1865, 2
        %v1867 = vadd.f32 %v1865, %v1866
        %v1868 = vrot.slane %v1867, 1
        %v1869 = vadd.f32 %v1867, %v1868
        %1870 = vadd.xlane.f32.xlu0 %v1869
        %v1871 = vpop.xlane.xlu0 %1870
        %vm1872 = vcmp.ge.f32.partialorder %v1871, %v990
        %vm1873 = vcmp.gt.s32.totalorder %v992, %v1855
        %v1874 = vsel %vm1873, 1, 0
        %v1875 = vcvt.s32.f32 %v1874
        %v1876 = vsel %vm272, %v1875, 0.0
        %v1877 = vrot.slane %v1876, 4
        %v1878 = vadd.f32 %v1876, %v1877
        %v1879 = vrot.slane %v1878, 2
        %v1880 = vadd.f32 %v1878, %v1879
        %v1881 = vrot.slane %v1880, 1
        %v1882 = vadd.f32 %v1880, %v1881
        %1883 = vadd.xlane.f32.xlu0 %v1882
        %v1884 = vpop.xlane.xlu0 %1883
        %vm1885 = vcmp.ge.f32.partialorder %v1884, %v990
        %vm1886 = vcmp.gt.s32.totalorder %v992, %v1859
        %v1887 = vsel %vm1886, 1, 0
        %v1888 = vcvt.s32.f32 %v1887
        %v1889 = vsel %vm272, %v1888, 0.0
        %v1890 = vrot.slane %v1889, 4
        %v1891 = vadd.f32 %v1889, %v1890
        %v1892 = vrot.slane %v1891, 2
        %v1893 = vadd.f32 %v1891, %v1892
        %v1894 = vrot.slane %v1893, 1
        %v1895 = vadd.f32 %v1893, %v1894
        %1896 = vadd.xlane.f32.xlu0 %v1895
        %v1897 = vpop.xlane.xlu0 %1896
        %vm1898 = vcmp.ge.f32.partialorder %v1897, %v990
        %v1899 = vsel %vm1898, %v1859, %v1853
        %v1900 = vsel %vm1885, %v1855, %v1843
        %v1901 = vsel %vm1872, %v1899, %v1900
        %vm1902 = vcmp.gt.s32.totalorder %v992, %v1901
        %vm1903 = vmor %vm978, %vm1902
        %v1904 = vsel %vm1903, %v977, 0.0
        %v1905 = vsel %vm272, %v1904, 0.0
        %v1906 = vrot.slane %v1905, 4
        %v1907 = vadd.f32 %v1905, %v1906
        %v1908 = vrot.slane %v1907, 2
        %v1909 = vadd.f32 %v1907, %v1908
        %v1910 = vrot.slane %v1909, 1
        %v1911 = vadd.f32 %v1909, %v1910
        %1912 = vadd.xlane.f32.xlu0 %v1911
        %v1913 = vpop.xlane.xlu0 %1912
        %v1914 = vrcp.pop %v933
        %v1915 = vmul.f32 %v1913, %v1914
        %v1916 = vsub.f32 %v910, %v217
        %v1917 = vmul.f32 %v1916, %v231
        %v1918 = vmul.f32 %v1917, 10.0
        %v1919 = vsub.f32 %v914, %v219
        %v1920 = vmul.f32 %v1919, %v233
        %v1921 = vmul.f32 %v1920, 10.0
        %v1922 = vmul.f32 %v916, %v231
        %v1923 = vlog2.pop %v1922
        %v1924 = vmul.f32 %v1923, 0.6931472
        %v1925 = vmul.f32 %v1924, 5.0
        %v1926 = vmul.f32 %v918, %v233
        %v1927 = vlog2.pop %v1926
        %v1928 = vmul.f32 %v1927, 0.6931472
        %v1929 = vmul.f32 %v1928, 5.0
        %v1930 = vld [vmem:[%s216] sm:$0x3]
        %v1931 = vsub.f32 %v1930, %v1918
        %v1932 = vand.u32 2147483647, %v1931
        %vm1933 = vcmp.lt.f32.partialorder %v1932, 1.0
        %v1934 = vmul.f32 %v1931, 0.5
        %v1935 = vmul.f32 %v1934, %v1931
        %v1936 = vsub.f32 %v1932, 0.5
        %v1937 = vsel %vm1933, %v1935, %v1936
        %s1938 = scalar_lea.vmem %s216, 2
        %v1939 = vld [vmem:[%s1938] sm:$0x3]
        %v1940 = vsub.f32 %v1939, %v1921
        %v1941 = vand.u32 2147483647, %v1940
        %vm1942 = vcmp.lt.f32.partialorder %v1941, 1.0
        %v1943 = vmul.f32 %v1940, 0.5
        %v1944 = vmul.f32 %v1943, %v1940
        %v1945 = vsub.f32 %v1941, 0.5
        %v1946 = vsel %vm1942, %v1944, %v1945
        %v1947 = vadd.f32 %v1937, %v1946
        %s1948 = scalar_lea.vmem %s216, 4
        %v1949 = vld [vmem:[%s1948] sm:$0x3]
        %v1950 = vsub.f32 %v1949, %v1925
        %v1951 = vand.u32 2147483647, %v1950
        %vm1952 = vcmp.lt.f32.partialorder %v1951, 1.0
        %v1953 = vmul.f32 %v1950, 0.5
        %v1954 = vmul.f32 %v1953, %v1950
        %v1955 = vsub.f32 %v1951, 0.5
        %v1956 = vsel %vm1952, %v1954, %v1955
        %v1957 = vadd.f32 %v1947, %v1956
        %s1958 = scalar_lea.vmem %s216, 6
        %v1959 = vld [vmem:[%s1958] sm:$0x3]
        %v1960 = vsub.f32 %v1959, %v1929
        %v1961 = vand.u32 2147483647, %v1960
        %vm1962 = vcmp.lt.f32.partialorder %v1961, 1.0
        %v1963 = vmul.f32 %v1960, 0.5
        %v1964 = vmul.f32 %v1963, %v1960
        %v1965 = vsub.f32 %v1961, 0.5
        %v1966 = vsel %vm1962, %v1964, %v1965
        %v1967 = vadd.f32 %v1957, %v1966
        %v1968 = vsel %vm921, %v1967, 0.0
        %v1969 = vsel %vm272, %v1968, 0.0
        %v1970 = vrot.slane %v1969, 4
        %v1971 = vadd.f32 %v1969, %v1970
        %v1972 = vrot.slane %v1971, 2
        %v1973 = vadd.f32 %v1971, %v1972
        %v1974 = vrot.slane %v1973, 1
        %v1975 = vadd.f32 %v1973, %v1974
        %1976 = vadd.xlane.f32.xlu0 %v1975
        %v1977 = vpop.xlane.xlu0 %1976
        %v1978 = vmul.f32 %v1977, %v1914
        %p1979 = scmp.eq.s32.totalorder %s16, 0
        // Predicated region
        $region41: #{multibox_loss.1} parent=35 // pred_check
          %p1980 = pneg %p1979
        $region42: #{multibox_loss.1} parent=35 // pred_check_branch
          %1982 = sbr.rel (%p1980) target = $region44
        $region43: #{multibox_loss.1} parent=35 // pred_region
          %1983 = vst [vmem:[%s4] sm:$0xff] 0.0
        $region44: #{multibox_loss.1} parent=35 // pred_fallthru
          _
        %v1984 = vld [vmem:[%s4] sm:$0xff]
        %vm1985 = vcmp.eq.s32.totalorder %v235, 0
        %v1986 = vsel %vm1985, %v1915, 0.0
        %vm1987 = vcmp.eq.s32.totalorder %v235, 1
        %v1988 = vsel %vm1987, %v1978, 0.0
        %v1989 = vadd.f32 %v1986, %v1988
        %v1990 = vadd.f32 %v1984, %v1989
        %1991 = vst [vmem:[%s4] sm:$0xff] %v1990
        // Predicated region
        $region45: #{multibox_loss.1} parent=35 // pred_check
          %p1992 = pneg %p123
        $region46: #{multibox_loss.1} parent=35 // pred_check_branch
          %1994 = sbr.rel (%p1992) target = $region48
        $region47: #{multibox_loss.1} parent=35 // pred_region
          _
        $region48: #{multibox_loss.1} parent=35 // pred_fallthru
          _
        // Predicated region
        $region49: #{multibox_loss.1} parent=35 // pred_check
          %p1995 = pneg %p123
        $region50: #{multibox_loss.1} parent=35 // pred_check_branch
          %1997 = sbr.rel (%p1995) target = $region52
        $region51: #{multibox_loss.1} parent=35 // pred_region
          _
        $region52: #{multibox_loss.1} parent=35 // pred_fallthru
          _
      $region36: #{multibox_loss.1} parent=5 // pred_fallthru
        _
      %p1998 = scmp.le.s32.totalorder 2, %s11
      // Predicated region
      $region53: #{multibox_loss.1} parent=5 // pred_check
        %p1999 = pneg %p1998
      $region54: #{multibox_loss.1} parent=5 // pred_check_branch
        %2001 = sbr.rel (%p1999) target = $region56
      $region55: #{multibox_loss.1} parent=5 // pred_region
        %s2002 = ssub.s32 %s11, 2
      $region56: #{multibox_loss.1} parent=5 // pred_fallthru
        _
    $region6: #{multibox_loss.1} parent=1 // loop_footer
      %s15 = sadd.s32 1, %s11
    $region7: #{multibox_loss.1} parent=1 // loop_footer_branch
      %10 = sbr.rel target = $region3
    $region8: #{multibox_loss.1} parent=1 // loop_exit
      _
    %2003 = vsyncpa [#allocation3], 1
    %s2004 = scalar_lea.sflag [#allocation3], 1
    %2005 = vsyncpa %s2004, 1

</llo_original>
